<compile_context>
chip_gen: v7x
topology: tpu7x:2x2x1
jax: 0.10.0
libtpu: 0.0.40
codegen_flags: <defaults>
</compile_context>

<pallas_src>
import functools

import jax
import jax.numpy as jnp
from jax.experimental import pallas as pl
from jax.experimental.pallas import tpu as pltpu

NEG = -1.0e30     # log(0) stand-in for padded states
TINY = 1.0e-30    # floor before log() so log-0 transitions never produce NaN/-inf


def chain_fused_kernel(max_len_ref,          # SMEM (1,) i32   scalar prefetch: max(len)
                       x_ref,                # VMEM (B,Tt,S) bf16  pdf log-probs block
                       lens_ref,             # VMEM (B,1) i32
                       num_trans_ref,        # VMEM (B,S,S) f32  exp-domain transitions
                       num_init_ref,         # VMEM (B,S) f32    log-domain
                       num_final_ref,        # VMEM (B,S) f32
                       den_trans_ref,        # VMEM (S,S) f32    exp-domain (shared)
                       den_init_ref,         # VMEM (1,S) f32
                       den_final_ref,        # VMEM (1,S) f32
                       objf_ref,             # VMEM (B,2) f32    out: [:,0]=num, [:,1]=den
                       alpha_num_ref,        # VMEM (B,S) f32 scratch (carried over grid)
                       alpha_den_ref):       # VMEM (B,S) f32 scratch
    t_blk = pl.program_id(0)
    n_blk = pl.num_programs(0)
    Tt = x_ref.shape[1]
    t0 = t_blk * Tt
    max_len = max_len_ref[0]

    @pl.when(t_blk == 0)
    def _init():
        alpha_num_ref[...] = num_init_ref[...]
        alpha_den_ref[...] = jnp.broadcast_to(den_init_ref[...], alpha_den_ref.shape)

    @pl.when(t0 < max_len)
    def _compute():
        lens = lens_ref[...]                       # [B,1] i32
        num_trans = num_trans_ref[...]             # [B,S,S] f32 (exp domain)
        den_trans = den_trans_ref[...]             # [S,S]   f32 (exp domain)

        def lse_step(alpha, dot_fn, x_t, mask):
            # rescaled exp-domain log-matmul: MXU does the S^2 work
            m = jnp.maximum(jnp.max(alpha, axis=-1, keepdims=True), NEG)   # [B,1]
            p = jnp.exp(alpha - m)                                         # [B,S]
            s = dot_fn(p)                                                  # [B,S]
            new = m + jnp.log(jnp.maximum(s, TINY)) + x_t
            return jnp.where(mask, new, alpha)

        def num_dot(p):
            # batched [B,1,S] @ [B,S,S] -> [B,1,S] on the MXU
            return jnp.einsum('bqs,bst->bqt', p[:, None, :], num_trans,
                              preferred_element_type=jnp.float32)[:, 0, :]

        def den_dot(p):
            # shared graph: plain [B,S] @ [S,S]
            return jnp.dot(p, den_trans, preferred_element_type=jnp.float32)

        def step(i, carry):
            a_num, a_den = carry
            t_abs = t0 + i
            x_t = jnp.clip(x_ref[:, i, :].astype(jnp.float32), -30.0, 30.0)  # [B,S]
            mask = t_abs < lens                                              # [B,1]
            a_num = lse_step(a_num, num_dot, x_t, mask)
            a_den = lse_step(a_den, den_dot, x_t, mask)
            return a_num, a_den

        a_num, a_den = jax.lax.fori_loop(
            0, Tt, step, (alpha_num_ref[...], alpha_den_ref[...]), unroll=True)
        alpha_num_ref[...] = a_num
        alpha_den_ref[...] = a_den

    @pl.when(t_blk == n_blk - 1)
    def _finalize():
        def lse_rows(z):                          # [B,S] -> [B,1]
            m = jnp.maximum(jnp.max(z, axis=-1, keepdims=True), NEG)
            return m + jnp.log(jnp.maximum(
                jnp.sum(jnp.exp(z - m), axis=-1, keepdims=True), TINY))

        num_objf = lse_rows(alpha_num_ref[...] + num_final_ref[...])
        den_objf = lse_rows(alpha_den_ref[...]
                            + jnp.broadcast_to(den_final_ref[...], alpha_den_ref.shape))
        objf_ref[...] = jnp.concatenate([num_objf, den_objf], axis=-1)    # [B,2]


def _round_up(n, m):
    return ((n + m - 1) // m) * m


@functools.partial(jax.jit, static_argnames=("avg", "time_block"))
def chain_loss(x, x_lengths,
               num_trans, num_init, num_final,
               den_trans, den_init, den_final,
               avg=True, time_block=8):
    """ChainLoss.forward: objf = -(num_objf - den_objf) [/ sum(lengths) if avg]."""
    B, T, P = x.shape
    assert num_trans.shape[0] == B, "input batch size does not match graph batch size"

    S = max(_round_up(P, 128), 128)          # lane-dense state/pdf dim
    Tt = time_block                          # multiple of 8 (sublane rule on x block)
    Tp = _round_up(T, Tt)
    n_blocks = Tp // Tt

    # x: native [B,T,P] -> padded [B,Tp,S], transferred as bf16 (no transpose).
    x_p = jnp.zeros((B, Tp, S), jnp.float32).at[:, :T, :P].set(x.astype(jnp.float32))
    x_p = x_p.astype(jnp.bfloat16)

    lens_v = x_lengths.astype(jnp.int32).reshape(B, 1)
    max_len = jnp.max(x_lengths.astype(jnp.int32)).reshape(1,)   # scalar prefetch

    # Graphs: exp-domain transitions padded with 0, init/final padded with log-0.
    n_te = jnp.zeros((B, S, S), jnp.float32).at[:, :P, :P].set(
        jnp.exp(num_trans.astype(jnp.float32)))
    n_i = jnp.full((B, S), NEG, jnp.float32).at[:, :P].set(num_init.astype(jnp.float32))
    n_f = jnp.full((B, S), NEG, jnp.float32).at[:, :P].set(num_final.astype(jnp.float32))
    d_te = jnp.zeros((S, S), jnp.float32).at[:P, :P].set(
        jnp.exp(den_trans.astype(jnp.float32)))
    d_i = jnp.full((1, S), NEG, jnp.float32).at[0, :P].set(den_init.astype(jnp.float32))
    d_f = jnp.full((1, S), NEG, jnp.float32).at[0, :P].set(den_final.astype(jnp.float32))

    cost = pl.CostEstimate(
        flops=4 * B * Tp * S * S,
        transcendentals=6 * B * Tp * S,
        bytes_accessed=B * Tp * S * 2 + B * S * S * 4 + S * S * 4 + 6 * B * S * 4,
    )

    grid_spec = pltpu.PrefetchScalarGridSpec(
        num_scalar_prefetch=1,
        grid=(n_blocks,),
        in_specs=[
            pl.BlockSpec((B, Tt, S), lambda t, m: (0, t, 0)),    # x: streamed over time
            pl.BlockSpec((B, 1), lambda t, m: (0, 0)),           # lens: resident
            pl.BlockSpec((B, S, S), lambda t, m: (0, 0, 0)),     # num exp(trans): resident
            pl.BlockSpec((B, S), lambda t, m: (0, 0)),           # num init
            pl.BlockSpec((B, S), lambda t, m: (0, 0)),           # num final
            pl.BlockSpec((S, S), lambda t, m: (0, 0)),           # den exp(trans): un-broadcast
            pl.BlockSpec((1, S), lambda t, m: (0, 0)),           # den init
            pl.BlockSpec((1, S), lambda t, m: (0, 0)),           # den final
        ],
        out_specs=pl.BlockSpec((B, 2), lambda t, m: (0, 0)),
        scratch_shapes=[pltpu.VMEM((B, S), jnp.float32),         # alpha (num)
                        pltpu.VMEM((B, S), jnp.float32)],        # alpha (den)
    )

    objf_bd = pl.pallas_call(
        chain_fused_kernel,
        out_shape=jax.ShapeDtypeStruct((B, 2), jnp.float32),
        grid_spec=grid_spec,
        compiler_params=pltpu.CompilerParams(
            dimension_semantics=("arbitrary",),      # time recursion is sequential
            vmem_limit_bytes=64 * 1024 * 1024,
        ),
        cost_estimate=cost,
    )(max_len, x_p, lens_v, n_te, n_i, n_f, d_te, d_i, d_f)

    num_objf = jnp.sum(objf_bd[:, 0])
    den_objf = jnp.sum(objf_bd[:, 1])
    objf = -(num_objf - den_objf)
    if avg:
        objf = objf / jnp.sum(x_lengths).astype(jnp.float32)
    return objf


def _ref_objf(x_btp, x_lengths, trans, init, final):
    """Pure-JAX log-domain forward recursion reference (batched graphs)."""
    x = jnp.clip(x_btp.astype(jnp.float32), -30.0, 30.0)
    B, T, S = x.shape
    alpha = init.astype(jnp.float32)
    for t in range(T):
        z = alpha[:, :, None] + trans                              # [B,S,S]
        lse = jax.scipy.special.logsumexp(z, axis=1)               # [B,S]
        alpha_new = lse + x[:, t, :]
        mask = (t < x_lengths)[:, None]
        alpha = jnp.where(mask, alpha_new, alpha)
    return jnp.sum(jax.scipy.special.logsumexp(alpha + final, axis=1))


if __name__ == "__main__":
    B, T, P = 2, 16, 32   # batch, seq length, num_states == num_pdfs

    key = jax.random.PRNGKey(0)
    k_x, k_dt, k_di, k_df, k_nt, k_ni, k_nf = jax.random.split(key, 7)

    # network output (pdf log-probs, unnormalized), PyTorch layout [B, T, P]
    x = 3.0 * jax.random.normal(k_x, (B, T, P), dtype=jnp.float32)
    x_lengths = jnp.array([16, 11], dtype=jnp.int32)   # descending (pack_padded convention)

    # synthetic den graph (shared across batch): dense log-domain stochastic FST
    den_trans = jax.nn.log_softmax(jax.random.normal(k_dt, (P, P)), axis=-1)
    den_init = jax.nn.log_softmax(jax.random.normal(k_di, (P,)))
    den_final = jax.nn.log_softmax(jax.random.normal(k_df, (P,)))

    # synthetic num graphs: one graph per utterance
    num_trans = jax.nn.log_softmax(jax.random.normal(k_nt, (B, P, P)), axis=-1)
    num_init = jax.nn.log_softmax(jax.random.normal(k_ni, (B, P)), axis=-1)
    num_final = jax.nn.log_softmax(jax.random.normal(k_nf, (B, P)), axis=-1)

    loss = chain_loss(x, x_lengths,
                      num_trans, num_init, num_final,
                      den_trans, den_init, den_final,
                      avg=True)
    loss = jax.block_until_ready(loss)

    # validate against a pure-JAX reference of the same math
    # (kernel streams x as bf16; quantize the reference input identically)
    x_q = x.astype(jnp.bfloat16).astype(jnp.float32)
    den_trans_b = jnp.broadcast_to(den_trans[None], (B, P, P))
    den_init_b = jnp.broadcast_to(den_init[None], (B, P))
    den_final_b = jnp.broadcast_to(den_final[None], (B, P))
    ref_num = _ref_objf(x_q, x_lengths, num_trans, num_init, num_final)
    ref_den = _ref_objf(x_q, x_lengths, den_trans_b, den_init_b, den_final_b)
    ref_loss = -(ref_num - ref_den) / jnp.sum(x_lengths).astype(jnp.float32)

    assert jnp.isfinite(loss), f"non-finite loss: {loss}"
    assert jnp.allclose(loss, ref_loss, rtol=2e-3, atol=2e-3), (loss, ref_loss)

    print("KERNEL_OK")
</pallas_src>

<mosaic_0001>
module attributes {stable_mosaic.version = 11 : i64} {
  func.func @chain_fused_kernel(%arg0: i32, %arg1: memref<1xi32, #tpu.memory_space<smem>>, %arg2: memref<2x8x128xbf16, #tpu.memory_space<vmem>>, %arg3: memref<2x1xi32, #tpu.memory_space<vmem>>, %arg4: memref<2x128x128xf32, #tpu.memory_space<vmem>>, %arg5: memref<2x128xf32, #tpu.memory_space<vmem>>, %arg6: memref<2x128xf32, #tpu.memory_space<vmem>>, %arg7: memref<128x128xf32, #tpu.memory_space<vmem>>, %arg8: memref<1x128xf32, #tpu.memory_space<vmem>>, %arg9: memref<1x128xf32, #tpu.memory_space<vmem>>, %arg10: memref<2x2xf32, #tpu.memory_space<vmem>>, %arg11: memref<2x128xf32, #tpu.memory_space<vmem>>, %arg12: memref<2x128xf32, #tpu.memory_space<vmem>>) attributes {dimension_semantics = [#tpu.dimension_semantics<arbitrary>], iteration_bounds = array<i64: 2>, scalar_prefetch = 1 : i64, scratch_operands = 2 : i64, tpu.core_type = #tpu.core_type<tc>, window_params = [{transform_indices = @transform_0, window_bounds = array<i64: 2, 8, 128>}, {pipeline_mode = #tpu.pipeline_mode<synchronous>, transform_indices = @transform_1, window_bounds = array<i64: 2, 1>}, {pipeline_mode = #tpu.pipeline_mode<synchronous>, transform_indices = @transform_2, window_bounds = array<i64: 2, 128, 128>}, {pipeline_mode = #tpu.pipeline_mode<synchronous>, transform_indices = @transform_3, window_bounds = array<i64: 2, 128>}, {pipeline_mode = #tpu.pipeline_mode<synchronous>, transform_indices = @transform_4, window_bounds = array<i64: 2, 128>}, {pipeline_mode = #tpu.pipeline_mode<synchronous>, transform_indices = @transform_5, window_bounds = array<i64: 128, 128>}, {pipeline_mode = #tpu.pipeline_mode<synchronous>, transform_indices = @transform_6, window_bounds = array<i64: 1, 128>}, {pipeline_mode = #tpu.pipeline_mode<synchronous>, transform_indices = @transform_7, window_bounds = array<i64: 1, 128>}, {pipeline_mode = #tpu.pipeline_mode<synchronous>, transform_indices = @transform_8, window_bounds = array<i64: 2, 2>}]} {
    %c8_i32 = arith.constant 8 : i32
    %0 = arith.muli %arg0, %c8_i32 : i32
    %c0 = arith.constant 0 : index
    %1 = memref.load %arg1[%c0] : memref<1xi32, #tpu.memory_space<smem>>
    %c0_i32 = arith.constant 0 : i32
    %2 = arith.cmpi eq, %arg0, %c0_i32 : i32
    %3 = arith.extui %2 : i1 to i32
    %c0_i32_0 = arith.constant 0 : i32
    %4 = arith.cmpi ne, %3, %c0_i32_0 : i32
    scf.if %4 {
      %c0_3 = arith.constant 0 : index
      %c0_4 = arith.constant 0 : index
      %11 = vector.load %arg5[%c0_3, %c0_4] : memref<2x128xf32, #tpu.memory_space<vmem>>, vector<2x128xf32>
      %c0_5 = arith.constant 0 : index
      %c0_6 = arith.constant 0 : index
      %12 = vector.load %arg11[%c0_5, %c0_6] : memref<2x128xf32, #tpu.memory_space<vmem>>, vector<2x128xf32>
      tpu.vector_store %arg11[%c0_5, %c0_6], %11 {strides = array<i32>} : memref<2x128xf32, #tpu.memory_space<vmem>>, vector<2x128xf32>,
      %c0_7 = arith.constant 0 : index
      %c0_8 = arith.constant 0 : index
      %13 = vector.load %arg8[%c0_7, %c0_8] : memref<1x128xf32, #tpu.memory_space<vmem>>, vector<1x128xf32>
      %14 = vector.shape_cast %13 : vector<1x128xf32> to vector<1x128xf32>
      %15 = vector.broadcast %14 : vector<1x128xf32> to vector<2x128xf32>
      %c0_9 = arith.constant 0 : index
      %c0_10 = arith.constant 0 : index
      %16 = vector.load %arg12[%c0_9, %c0_10] : memref<2x128xf32, #tpu.memory_space<vmem>>, vector<2x128xf32>
      tpu.vector_store %arg12[%c0_9, %c0_10], %15 {strides = array<i32>} : memref<2x128xf32, #tpu.memory_space<vmem>>, vector<2x128xf32>,
    } else {
    }
    %5 = arith.cmpi slt, %0, %1 : i32
    %6 = arith.extui %5 : i1 to i32
    %c0_i32_1 = arith.constant 0 : i32
    %7 = arith.cmpi ne, %6, %c0_i32_1 : i32
    scf.if %7 {
      %c0_3 = arith.constant 0 : index
      %c0_4 = arith.constant 0 : index
      %11 = vector.load %arg3[%c0_3, %c0_4] : memref<2x1xi32, #tpu.memory_space<vmem>>, vector<2x1xi32>
      %c0_5 = arith.constant 0 : index
      %c0_6 = arith.constant 0 : index
      %c0_7 = arith.constant 0 : index
      %12 = vector.load %arg4[%c0_5, %c0_6, %c0_7] : memref<2x128x128xf32, #tpu.memory_space<vmem>>, vector<2x128x128xf32>
      %c0_8 = arith.constant 0 : index
      %c0_9 = arith.constant 0 : index
      %13 = vector.load %arg7[%c0_8, %c0_9] : memref<128x128xf32, #tpu.memory_space<vmem>>, vector<128x128xf32>
      %c0_10 = arith.constant 0 : index
      %c0_11 = arith.constant 0 : index
      %14 = vector.load %arg11[%c0_10, %c0_11] : memref<2x128xf32, #tpu.memory_space<vmem>>, vector<2x128xf32>
      %c0_12 = arith.constant 0 : index
      %c0_13 = arith.constant 0 : index
      %15 = vector.load %arg12[%c0_12, %c0_13] : memref<2x128xf32, #tpu.memory_space<vmem>>, vector<2x128xf32>
      %c0_i32_14 = arith.constant 0 : i32
      %16 = arith.addi %0, %c0_i32_14 : i32
      %c0_15 = arith.constant 0 : index
      %17 = arith.index_cast %c0_i32_14 : i32 to index
      %c0_16 = arith.constant 0 : index
      %18 = vector.load %arg2[%c0_15, %17, %c0_16] : memref<2x8x128xbf16, #tpu.memory_space<vmem>>, vector<2x1x128xbf16>
      %19 = vector.shape_cast %18 : vector<2x1x128xbf16> to vector<2x128xbf16>
      %20 = arith.extf %19 : vector<2x128xbf16> to vector<2x128xf32>
      %cst = arith.constant -3.000000e+01 : f32
      %cst_17 = arith.constant 3.000000e+01 : f32
      %21 = vector.broadcast %cst : f32 to vector<2x128xf32>
      %22 = arith.maximumf %21, %20 : vector<2x128xf32>
      %23 = vector.broadcast %cst_17 : f32 to vector<2x128xf32>
      %24 = arith.minimumf %23, %22 : vector<2x128xf32>
      %25 = vector.broadcast %16 : i32 to vector<2x1xi32>
      %26 = arith.cmpi slt, %25, %11 : vector<2x1xi32>
      %cst_18 = arith.constant dense<0xFF800000> : vector<2xf32>
      %27 = vector.multi_reduction <maximumf>, %14, %cst_18 [1] : vector<2x128xf32> to vector<2xf32>
      %28 = vector.shape_cast %27 : vector<2xf32> to vector<2x1xf32>
      %cst_19 = arith.constant -1.000000e+30 : f32
      %29 = vector.broadcast %cst_19 : f32 to vector<2x1xf32>
      %30 = arith.maximumf %28, %29 : vector<2x1xf32>
      %31 = vector.broadcast %30 : vector<2x1xf32> to vector<2x128xf32>
      %32 = arith.subf %14, %31 : vector<2x128xf32>
      %33 = math.exp %32 : vector<2x128xf32>
      %34 = vector.shape_cast %33 : vector<2x128xf32> to vector<2x1x128xf32>
      "tpu.trace_start"() <{level = 10 : i32, message = "bqs,bst->bqt"}> : () -> ()
      %cst_20 = arith.constant dense<0.000000e+00> : vector<2x1x128xf32>
      %35 = tpu.matmul %34, %12, %cst_20 {dimension_numbers = #tpu.dot_dimension_numbers<[2], [1], [1], [2], [0, 0, 0, 1, 1, 2], [0], [0]>} : vector<2x1x128xf32>, vector<2x128x128xf32>, vector<2x1x128xf32> -> vector<2x1x128xf32>
      "tpu.trace_stop"() : () -> ()
      %36 = vector.shape_cast %35 : vector<2x1x128xf32> to vector<2x128xf32>
      %cst_21 = arith.constant 1.000000e-30 : f32
      %37 = vector.broadcast %cst_21 : f32 to vector<2x128xf32>
      %38 = arith.maximumf %36, %37 : vector<2x128xf32>
      %39 = math.log %38 : vector<2x128xf32>
      %40 = vector.broadcast %30 : vector<2x1xf32> to vector<2x128xf32>
      %41 = arith.addf %40, %39 : vector<2x128xf32>
      %42 = arith.addf %41, %24 : vector<2x128xf32>
      %43 = vector.shape_cast %26 : vector<2x1xi1> to vector<2x1xi1>
      %44 = vector.broadcast %43 : vector<2x1xi1> to vector<2x128xi1>
      %45 = arith.select %44, %42, %14 : vector<2x128xi1>, vector<2x128xf32>
      %cst_22 = arith.constant dense<0xFF800000> : vector<2xf32>
      %46 = vector.multi_reduction <maximumf>, %15, %cst_22 [1] : vector<2x128xf32> to vector<2xf32>
      %47 = vector.shape_cast %46 : vector<2xf32> to vector<2x1xf32>
      %cst_23 = arith.constant -1.000000e+30 : f32
      %48 = vector.broadcast %cst_23 : f32 to vector<2x1xf32>
      %49 = arith.maximumf %47, %48 : vector<2x1xf32>
      %50 = vector.broadcast %49 : vector<2x1xf32> to vector<2x128xf32>
      %51 = arith.subf %15, %50 : vector<2x128xf32>
      %52 = math.exp %51 : vector<2x128xf32>
      %cst_24 = arith.constant dense<0.000000e+00> : vector<2x128xf32>
      %53 = tpu.matmul %52, %13, %cst_24 {dimension_numbers = #tpu.dot_dimension_numbers<[1], [0], [0], [1], [0, 0, 1, 1], [], []>} : vector<2x128xf32>, vector<128x128xf32>, vector<2x128xf32> -> vector<2x128xf32>
      %cst_25 = arith.constant 1.000000e-30 : f32
      %54 = vector.broadcast %cst_25 : f32 to vector<2x128xf32>
      %55 = arith.maximumf %53, %54 : vector<2x128xf32>
      %56 = math.log %55 : vector<2x128xf32>
      %57 = vector.broadcast %49 : vector<2x1xf32> to vector<2x128xf32>
      %58 = arith.addf %57, %56 : vector<2x128xf32>
      %59 = arith.addf %58, %24 : vector<2x128xf32>
      %60 = vector.shape_cast %26 : vector<2x1xi1> to vector<2x1xi1>
      %61 = vector.broadcast %60 : vector<2x1xi1> to vector<2x128xi1>
      %62 = arith.select %61, %59, %15 : vector<2x128xi1>, vector<2x128xf32>
      %c1_i32_26 = arith.constant 1 : i32
      %63 = arith.addi %0, %c1_i32_26 : i32
      %c0_27 = arith.constant 0 : index
      %64 = arith.index_cast %c1_i32_26 : i32 to index
      %c0_28 = arith.constant 0 : index
      %65 = vector.load %arg2[%c0_27, %64, %c0_28] : memref<2x8x128xbf16, #tpu.memory_space<vmem>>, vector<2x1x128xbf16>
      %66 = vector.shape_cast %65 : vector<2x1x128xbf16> to vector<2x128xbf16>
      %67 = arith.extf %66 : vector<2x128xbf16> to vector<2x128xf32>
      %cst_29 = arith.constant -3.000000e+01 : f32
      %cst_30 = arith.constant 3.000000e+01 : f32
      %68 = vector.broadcast %cst_29 : f32 to vector<2x128xf32>
      %69 = arith.maximumf %68, %67 : vector<2x128xf32>
      %70 = vector.broadcast %cst_30 : f32 to vector<2x128xf32>
      %71 = arith.minimumf %70, %69 : vector<2x128xf32>
      %72 = vector.broadcast %63 : i32 to vector<2x1xi32>
      %73 = arith.cmpi slt, %72, %11 : vector<2x1xi32>
      %cst_31 = arith.constant dense<0xFF800000> : vector<2xf32>
      %74 = vector.multi_reduction <maximumf>, %45, %cst_31 [1] : vector<2x128xf32> to vector<2xf32>
      %75 = vector.shape_cast %74 : vector<2xf32> to vector<2x1xf32>
      %cst_32 = arith.constant -1.000000e+30 : f32
      %76 = vector.broadcast %cst_32 : f32 to vector<2x1xf32>
      %77 = arith.maximumf %75, %76 : vector<2x1xf32>
      %78 = vector.broadcast %77 : vector<2x1xf32> to vector<2x128xf32>
      %79 = arith.subf %45, %78 : vector<2x128xf32>
      %80 = math.exp %79 : vector<2x128xf32>
      %81 = vector.shape_cast %80 : vector<2x128xf32> to vector<2x1x128xf32>
      "tpu.trace_start"() <{level = 10 : i32, message = "bqs,bst->bqt"}> : () -> ()
      %cst_33 = arith.constant dense<0.000000e+00> : vector<2x1x128xf32>
      %82 = tpu.matmul %81, %12, %cst_33 {dimension_numbers = #tpu.dot_dimension_numbers<[2], [1], [1], [2], [0, 0, 0, 1, 1, 2], [0], [0]>} : vector<2x1x128xf32>, vector<2x128x128xf32>, vector<2x1x128xf32> -> vector<2x1x128xf32>
      "tpu.trace_stop"() : () -> ()
      %83 = vector.shape_cast %82 : vector<2x1x128xf32> to vector<2x128xf32>
      %cst_34 = arith.constant 1.000000e-30 : f32
      %84 = vector.broadcast %cst_34 : f32 to vector<2x128xf32>
      %85 = arith.maximumf %83, %84 : vector<2x128xf32>
      %86 = math.log %85 : vector<2x128xf32>
      %87 = vector.broadcast %77 : vector<2x1xf32> to vector<2x128xf32>
      %88 = arith.addf %87, %86 : vector<2x128xf32>
      %89 = arith.addf %88, %71 : vector<2x128xf32>
      %90 = vector.shape_cast %73 : vector<2x1xi1> to vector<2x1xi1>
      %91 = vector.broadcast %90 : vector<2x1xi1> to vector<2x128xi1>
      %92 = arith.select %91, %89, %45 : vector<2x128xi1>, vector<2x128xf32>
      %cst_35 = arith.constant dense<0xFF800000> : vector<2xf32>
      %93 = vector.multi_reduction <maximumf>, %62, %cst_35 [1] : vector<2x128xf32> to vector<2xf32>
      %94 = vector.shape_cast %93 : vector<2xf32> to vector<2x1xf32>
      %cst_36 = arith.constant -1.000000e+30 : f32
      %95 = vector.broadcast %cst_36 : f32 to vector<2x1xf32>
      %96 = arith.maximumf %94, %95 : vector<2x1xf32>
      %97 = vector.broadcast %96 : vector<2x1xf32> to vector<2x128xf32>
      %98 = arith.subf %62, %97 : vector<2x128xf32>
      %99 = math.exp %98 : vector<2x128xf32>
      %cst_37 = arith.constant dense<0.000000e+00> : vector<2x128xf32>
      %100 = tpu.matmul %99, %13, %cst_37 {dimension_numbers = #tpu.dot_dimension_numbers<[1], [0], [0], [1], [0, 0, 1, 1], [], []>} : vector<2x128xf32>, vector<128x128xf32>, vector<2x128xf32> -> vector<2x128xf32>
      %cst_38 = arith.constant 1.000000e-30 : f32
      %101 = vector.broadcast %cst_38 : f32 to vector<2x128xf32>
      %102 = arith.maximumf %100, %101 : vector<2x128xf32>
      %103 = math.log %102 : vector<2x128xf32>
      %104 = vector.broadcast %96 : vector<2x1xf32> to vector<2x128xf32>
      %105 = arith.addf %104, %103 : vector<2x128xf32>
      %106 = arith.addf %105, %71 : vector<2x128xf32>
      %107 = vector.shape_cast %73 : vector<2x1xi1> to vector<2x1xi1>
      %108 = vector.broadcast %107 : vector<2x1xi1> to vector<2x128xi1>
      %109 = arith.select %108, %106, %62 : vector<2x128xi1>, vector<2x128xf32>
      %c2_i32 = arith.constant 2 : i32
      %110 = arith.addi %0, %c2_i32 : i32
      %c0_39 = arith.constant 0 : index
      %111 = arith.index_cast %c2_i32 : i32 to index
      %c0_40 = arith.constant 0 : index
      %112 = vector.load %arg2[%c0_39, %111, %c0_40] : memref<2x8x128xbf16, #tpu.memory_space<vmem>>, vector<2x1x128xbf16>
      %113 = vector.shape_cast %112 : vector<2x1x128xbf16> to vector<2x128xbf16>
      %114 = arith.extf %113 : vector<2x128xbf16> to vector<2x128xf32>
      %cst_41 = arith.constant -3.000000e+01 : f32
      %cst_42 = arith.constant 3.000000e+01 : f32
      %115 = vector.broadcast %cst_41 : f32 to vector<2x128xf32>
      %116 = arith.maximumf %115, %114 : vector<2x128xf32>
      %117 = vector.broadcast %cst_42 : f32 to vector<2x128xf32>
      %118 = arith.minimumf %117, %116 : vector<2x128xf32>
      %119 = vector.broadcast %110 : i32 to vector<2x1xi32>
      %120 = arith.cmpi slt, %119, %11 : vector<2x1xi32>
      %cst_43 = arith.constant dense<0xFF800000> : vector<2xf32>
      %121 = vector.multi_reduction <maximumf>, %92, %cst_43 [1] : vector<2x128xf32> to vector<2xf32>
      %122 = vector.shape_cast %121 : vector<2xf32> to vector<2x1xf32>
      %cst_44 = arith.constant -1.000000e+30 : f32
      %123 = vector.broadcast %cst_44 : f32 to vector<2x1xf32>
      %124 = arith.maximumf %122, %123 : vector<2x1xf32>
      %125 = vector.broadcast %124 : vector<2x1xf32> to vector<2x128xf32>
      %126 = arith.subf %92, %125 : vector<2x128xf32>
      %127 = math.exp %126 : vector<2x128xf32>
      %128 = vector.shape_cast %127 : vector<2x128xf32> to vector<2x1x128xf32>
      "tpu.trace_start"() <{level = 10 : i32, message = "bqs,bst->bqt"}> : () -> ()
      %cst_45 = arith.constant dense<0.000000e+00> : vector<2x1x128xf32>
      %129 = tpu.matmul %128, %12, %cst_45 {dimension_numbers = #tpu.dot_dimension_numbers<[2], [1], [1], [2], [0, 0, 0, 1, 1, 2], [0], [0]>} : vector<2x1x128xf32>, vector<2x128x128xf32>, vector<2x1x128xf32> -> vector<2x1x128xf32>
      "tpu.trace_stop"() : () -> ()
      %130 = vector.shape_cast %129 : vector<2x1x128xf32> to vector<2x128xf32>
      %cst_46 = arith.constant 1.000000e-30 : f32
      %131 = vector.broadcast %cst_46 : f32 to vector<2x128xf32>
      %132 = arith.maximumf %130, %131 : vector<2x128xf32>
      %133 = math.log %132 : vector<2x128xf32>
      %134 = vector.broadcast %124 : vector<2x1xf32> to vector<2x128xf32>
      %135 = arith.addf %134, %133 : vector<2x128xf32>
      %136 = arith.addf %135, %118 : vector<2x128xf32>
      %137 = vector.shape_cast %120 : vector<2x1xi1> to vector<2x1xi1>
      %138 = vector.broadcast %137 : vector<2x1xi1> to vector<2x128xi1>
      %139 = arith.select %138, %136, %92 : vector<2x128xi1>, vector<2x128xf32>
      %cst_47 = arith.constant dense<0xFF800000> : vector<2xf32>
      %140 = vector.multi_reduction <maximumf>, %109, %cst_47 [1] : vector<2x128xf32> to vector<2xf32>
      %141 = vector.shape_cast %140 : vector<2xf32> to vector<2x1xf32>
      %cst_48 = arith.constant -1.000000e+30 : f32
      %142 = vector.broadcast %cst_48 : f32 to vector<2x1xf32>
      %143 = arith.maximumf %141, %142 : vector<2x1xf32>
      %144 = vector.broadcast %143 : vector<2x1xf32> to vector<2x128xf32>
      %145 = arith.subf %109, %144 : vector<2x128xf32>
      %146 = math.exp %145 : vector<2x128xf32>
      %cst_49 = arith.constant dense<0.000000e+00> : vector<2x128xf32>
      %147 = tpu.matmul %146, %13, %cst_49 {dimension_numbers = #tpu.dot_dimension_numbers<[1], [0], [0], [1], [0, 0, 1, 1], [], []>} : vector<2x128xf32>, vector<128x128xf32>, vector<2x128xf32> -> vector<2x128xf32>
      %cst_50 = arith.constant 1.000000e-30 : f32
      %148 = vector.broadcast %cst_50 : f32 to vector<2x128xf32>
      %149 = arith.maximumf %147, %148 : vector<2x128xf32>
      %150 = math.log %149 : vector<2x128xf32>
      %151 = vector.broadcast %143 : vector<2x1xf32> to vector<2x128xf32>
      %152 = arith.addf %151, %150 : vector<2x128xf32>
      %153 = arith.addf %152, %118 : vector<2x128xf32>
      %154 = vector.shape_cast %120 : vector<2x1xi1> to vector<2x1xi1>
      %155 = vector.broadcast %154 : vector<2x1xi1> to vector<2x128xi1>
      %156 = arith.select %155, %153, %109 : vector<2x128xi1>, vector<2x128xf32>
      %c3_i32 = arith.constant 3 : i32
      %157 = arith.addi %0, %c3_i32 : i32
      %c0_51 = arith.constant 0 : index
      %158 = arith.index_cast %c3_i32 : i32 to index
      %c0_52 = arith.constant 0 : index
      %159 = vector.load %arg2[%c0_51, %158, %c0_52] : memref<2x8x128xbf16, #tpu.memory_space<vmem>>, vector<2x1x128xbf16>
      %160 = vector.shape_cast %159 : vector<2x1x128xbf16> to vector<2x128xbf16>
      %161 = arith.extf %160 : vector<2x128xbf16> to vector<2x128xf32>
      %cst_53 = arith.constant -3.000000e+01 : f32
      %cst_54 = arith.constant 3.000000e+01 : f32
      %162 = vector.broadcast %cst_53 : f32 to vector<2x128xf32>
      %163 = arith.maximumf %162, %161 : vector<2x128xf32>
      %164 = vector.broadcast %cst_54 : f32 to vector<2x128xf32>
      %165 = arith.minimumf %164, %163 : vector<2x128xf32>
      %166 = vector.broadcast %157 : i32 to vector<2x1xi32>
      %167 = arith.cmpi slt, %166, %11 : vector<2x1xi32>
      %cst_55 = arith.constant dense<0xFF800000> : vector<2xf32>
      %168 = vector.multi_reduction <maximumf>, %139, %cst_55 [1] : vector<2x128xf32> to vector<2xf32>
      %169 = vector.shape_cast %168 : vector<2xf32> to vector<2x1xf32>
      %cst_56 = arith.constant -1.000000e+30 : f32
      %170 = vector.broadcast %cst_56 : f32 to vector<2x1xf32>
      %171 = arith.maximumf %169, %170 : vector<2x1xf32>
      %172 = vector.broadcast %171 : vector<2x1xf32> to vector<2x128xf32>
      %173 = arith.subf %139, %172 : vector<2x128xf32>
      %174 = math.exp %173 : vector<2x128xf32>
      %175 = vector.shape_cast %174 : vector<2x128xf32> to vector<2x1x128xf32>
      "tpu.trace_start"() <{level = 10 : i32, message = "bqs,bst->bqt"}> : () -> ()
      %cst_57 = arith.constant dense<0.000000e+00> : vector<2x1x128xf32>
      %176 = tpu.matmul %175, %12, %cst_57 {dimension_numbers = #tpu.dot_dimension_numbers<[2], [1], [1], [2], [0, 0, 0, 1, 1, 2], [0], [0]>} : vector<2x1x128xf32>, vector<2x128x128xf32>, vector<2x1x128xf32> -> vector<2x1x128xf32>
      "tpu.trace_stop"() : () -> ()
      %177 = vector.shape_cast %176 : vector<2x1x128xf32> to vector<2x128xf32>
      %cst_58 = arith.constant 1.000000e-30 : f32
      %178 = vector.broadcast %cst_58 : f32 to vector<2x128xf32>
      %179 = arith.maximumf %177, %178 : vector<2x128xf32>
      %180 = math.log %179 : vector<2x128xf32>
      %181 = vector.broadcast %171 : vector<2x1xf32> to vector<2x128xf32>
      %182 = arith.addf %181, %180 : vector<2x128xf32>
      %183 = arith.addf %182, %165 : vector<2x128xf32>
      %184 = vector.shape_cast %167 : vector<2x1xi1> to vector<2x1xi1>
      %185 = vector.broadcast %184 : vector<2x1xi1> to vector<2x128xi1>
      %186 = arith.select %185, %183, %139 : vector<2x128xi1>, vector<2x128xf32>
      %cst_59 = arith.constant dense<0xFF800000> : vector<2xf32>
      %187 = vector.multi_reduction <maximumf>, %156, %cst_59 [1] : vector<2x128xf32> to vector<2xf32>
      %188 = vector.shape_cast %187 : vector<2xf32> to vector<2x1xf32>
      %cst_60 = arith.constant -1.000000e+30 : f32
      %189 = vector.broadcast %cst_60 : f32 to vector<2x1xf32>
      %190 = arith.maximumf %188, %189 : vector<2x1xf32>
      %191 = vector.broadcast %190 : vector<2x1xf32> to vector<2x128xf32>
      %192 = arith.subf %156, %191 : vector<2x128xf32>
      %193 = math.exp %192 : vector<2x128xf32>
      %cst_61 = arith.constant dense<0.000000e+00> : vector<2x128xf32>
      %194 = tpu.matmul %193, %13, %cst_61 {dimension_numbers = #tpu.dot_dimension_numbers<[1], [0], [0], [1], [0, 0, 1, 1], [], []>} : vector<2x128xf32>, vector<128x128xf32>, vector<2x128xf32> -> vector<2x128xf32>
      %cst_62 = arith.constant 1.000000e-30 : f32
      %195 = vector.broadcast %cst_62 : f32 to vector<2x128xf32>
      %196 = arith.maximumf %194, %195 : vector<2x128xf32>
      %197 = math.log %196 : vector<2x128xf32>
      %198 = vector.broadcast %190 : vector<2x1xf32> to vector<2x128xf32>
      %199 = arith.addf %198, %197 : vector<2x128xf32>
      %200 = arith.addf %199, %165 : vector<2x128xf32>
      %201 = vector.shape_cast %167 : vector<2x1xi1> to vector<2x1xi1>
      %202 = vector.broadcast %201 : vector<2x1xi1> to vector<2x128xi1>
      %203 = arith.select %202, %200, %156 : vector<2x128xi1>, vector<2x128xf32>
      %c4_i32 = arith.constant 4 : i32
      %204 = arith.addi %0, %c4_i32 : i32
      %c0_63 = arith.constant 0 : index
      %205 = arith.index_cast %c4_i32 : i32 to index
      %c0_64 = arith.constant 0 : index
      %206 = vector.load %arg2[%c0_63, %205, %c0_64] : memref<2x8x128xbf16, #tpu.memory_space<vmem>>, vector<2x1x128xbf16>
      %207 = vector.shape_cast %206 : vector<2x1x128xbf16> to vector<2x128xbf16>
      %208 = arith.extf %207 : vector<2x128xbf16> to vector<2x128xf32>
      %cst_65 = arith.constant -3.000000e+01 : f32
      %cst_66 = arith.constant 3.000000e+01 : f32
      %209 = vector.broadcast %cst_65 : f32 to vector<2x128xf32>
      %210 = arith.maximumf %209, %208 : vector<2x128xf32>
      %211 = vector.broadcast %cst_66 : f32 to vector<2x128xf32>
      %212 = arith.minimumf %211, %210 : vector<2x128xf32>
      %213 = vector.broadcast %204 : i32 to vector<2x1xi32>
      %214 = arith.cmpi slt, %213, %11 : vector<2x1xi32>
      %cst_67 = arith.constant dense<0xFF800000> : vector<2xf32>
      %215 = vector.multi_reduction <maximumf>, %186, %cst_67 [1] : vector<2x128xf32> to vector<2xf32>
      %216 = vector.shape_cast %215 : vector<2xf32> to vector<2x1xf32>
      %cst_68 = arith.constant -1.000000e+30 : f32
      %217 = vector.broadcast %cst_68 : f32 to vector<2x1xf32>
      %218 = arith.maximumf %216, %217 : vector<2x1xf32>
      %219 = vector.broadcast %218 : vector<2x1xf32> to vector<2x128xf32>
      %220 = arith.subf %186, %219 : vector<2x128xf32>
      %221 = math.exp %220 : vector<2x128xf32>
      %222 = vector.shape_cast %221 : vector<2x128xf32> to vector<2x1x128xf32>
      "tpu.trace_start"() <{level = 10 : i32, message = "bqs,bst->bqt"}> : () -> ()
      %cst_69 = arith.constant dense<0.000000e+00> : vector<2x1x128xf32>
      %223 = tpu.matmul %222, %12, %cst_69 {dimension_numbers = #tpu.dot_dimension_numbers<[2], [1], [1], [2], [0, 0, 0, 1, 1, 2], [0], [0]>} : vector<2x1x128xf32>, vector<2x128x128xf32>, vector<2x1x128xf32> -> vector<2x1x128xf32>
      "tpu.trace_stop"() : () -> ()
      %224 = vector.shape_cast %223 : vector<2x1x128xf32> to vector<2x128xf32>
      %cst_70 = arith.constant 1.000000e-30 : f32
      %225 = vector.broadcast %cst_70 : f32 to vector<2x128xf32>
      %226 = arith.maximumf %224, %225 : vector<2x128xf32>
      %227 = math.log %226 : vector<2x128xf32>
      %228 = vector.broadcast %218 : vector<2x1xf32> to vector<2x128xf32>
      %229 = arith.addf %228, %227 : vector<2x128xf32>
      %230 = arith.addf %229, %212 : vector<2x128xf32>
      %231 = vector.shape_cast %214 : vector<2x1xi1> to vector<2x1xi1>
      %232 = vector.broadcast %231 : vector<2x1xi1> to vector<2x128xi1>
      %233 = arith.select %232, %230, %186 : vector<2x128xi1>, vector<2x128xf32>
      %cst_71 = arith.constant dense<0xFF800000> : vector<2xf32>
      %234 = vector.multi_reduction <maximumf>, %203, %cst_71 [1] : vector<2x128xf32> to vector<2xf32>
      %235 = vector.shape_cast %234 : vector<2xf32> to vector<2x1xf32>
      %cst_72 = arith.constant -1.000000e+30 : f32
      %236 = vector.broadcast %cst_72 : f32 to vector<2x1xf32>
      %237 = arith.maximumf %235, %236 : vector<2x1xf32>
      %238 = vector.broadcast %237 : vector<2x1xf32> to vector<2x128xf32>
      %239 = arith.subf %203, %238 : vector<2x128xf32>
      %240 = math.exp %239 : vector<2x128xf32>
      %cst_73 = arith.constant dense<0.000000e+00> : vector<2x128xf32>
      %241 = tpu.matmul %240, %13, %cst_73 {dimension_numbers = #tpu.dot_dimension_numbers<[1], [0], [0], [1], [0, 0, 1, 1], [], []>} : vector<2x128xf32>, vector<128x128xf32>, vector<2x128xf32> -> vector<2x128xf32>
      %cst_74 = arith.constant 1.000000e-30 : f32
      %242 = vector.broadcast %cst_74 : f32 to vector<2x128xf32>
      %243 = arith.maximumf %241, %242 : vector<2x128xf32>
      %244 = math.log %243 : vector<2x128xf32>
      %245 = vector.broadcast %237 : vector<2x1xf32> to vector<2x128xf32>
      %246 = arith.addf %245, %244 : vector<2x128xf32>
      %247 = arith.addf %246, %212 : vector<2x128xf32>
      %248 = vector.shape_cast %214 : vector<2x1xi1> to vector<2x1xi1>
      %249 = vector.broadcast %248 : vector<2x1xi1> to vector<2x128xi1>
      %250 = arith.select %249, %247, %203 : vector<2x128xi1>, vector<2x128xf32>
      %c5_i32 = arith.constant 5 : i32
      %251 = arith.addi %0, %c5_i32 : i32
      %c0_75 = arith.constant 0 : index
      %252 = arith.index_cast %c5_i32 : i32 to index
      %c0_76 = arith.constant 0 : index
      %253 = vector.load %arg2[%c0_75, %252, %c0_76] : memref<2x8x128xbf16, #tpu.memory_space<vmem>>, vector<2x1x128xbf16>
      %254 = vector.shape_cast %253 : vector<2x1x128xbf16> to vector<2x128xbf16>
      %255 = arith.extf %254 : vector<2x128xbf16> to vector<2x128xf32>
      %cst_77 = arith.constant -3.000000e+01 : f32
      %cst_78 = arith.constant 3.000000e+01 : f32
      %256 = vector.broadcast %cst_77 : f32 to vector<2x128xf32>
      %257 = arith.maximumf %256, %255 : vector<2x128xf32>
      %258 = vector.broadcast %cst_78 : f32 to vector<2x128xf32>
      %259 = arith.minimumf %258, %257 : vector<2x128xf32>
      %260 = vector.broadcast %251 : i32 to vector<2x1xi32>
      %261 = arith.cmpi slt, %260, %11 : vector<2x1xi32>
      %cst_79 = arith.constant dense<0xFF800000> : vector<2xf32>
      %262 = vector.multi_reduction <maximumf>, %233, %cst_79 [1] : vector<2x128xf32> to vector<2xf32>
      %263 = vector.shape_cast %262 : vector<2xf32> to vector<2x1xf32>
      %cst_80 = arith.constant -1.000000e+30 : f32
      %264 = vector.broadcast %cst_80 : f32 to vector<2x1xf32>
      %265 = arith.maximumf %263, %264 : vector<2x1xf32>
      %266 = vector.broadcast %265 : vector<2x1xf32> to vector<2x128xf32>
      %267 = arith.subf %233, %266 : vector<2x128xf32>
      %268 = math.exp %267 : vector<2x128xf32>
      %269 = vector.shape_cast %268 : vector<2x128xf32> to vector<2x1x128xf32>
      "tpu.trace_start"() <{level = 10 : i32, message = "bqs,bst->bqt"}> : () -> ()
      %cst_81 = arith.constant dense<0.000000e+00> : vector<2x1x128xf32>
      %270 = tpu.matmul %269, %12, %cst_81 {dimension_numbers = #tpu.dot_dimension_numbers<[2], [1], [1], [2], [0, 0, 0, 1, 1, 2], [0], [0]>} : vector<2x1x128xf32>, vector<2x128x128xf32>, vector<2x1x128xf32> -> vector<2x1x128xf32>
      "tpu.trace_stop"() : () -> ()
      %271 = vector.shape_cast %270 : vector<2x1x128xf32> to vector<2x128xf32>
      %cst_82 = arith.constant 1.000000e-30 : f32
      %272 = vector.broadcast %cst_82 : f32 to vector<2x128xf32>
      %273 = arith.maximumf %271, %272 : vector<2x128xf32>
      %274 = math.log %273 : vector<2x128xf32>
      %275 = vector.broadcast %265 : vector<2x1xf32> to vector<2x128xf32>
      %276 = arith.addf %275, %274 : vector<2x128xf32>
      %277 = arith.addf %276, %259 : vector<2x128xf32>
      %278 = vector.shape_cast %261 : vector<2x1xi1> to vector<2x1xi1>
      %279 = vector.broadcast %278 : vector<2x1xi1> to vector<2x128xi1>
      %280 = arith.select %279, %277, %233 : vector<2x128xi1>, vector<2x128xf32>
      %cst_83 = arith.constant dense<0xFF800000> : vector<2xf32>
      %281 = vector.multi_reduction <maximumf>, %250, %cst_83 [1] : vector<2x128xf32> to vector<2xf32>
      %282 = vector.shape_cast %281 : vector<2xf32> to vector<2x1xf32>
      %cst_84 = arith.constant -1.000000e+30 : f32
      %283 = vector.broadcast %cst_84 : f32 to vector<2x1xf32>
      %284 = arith.maximumf %282, %283 : vector<2x1xf32>
      %285 = vector.broadcast %284 : vector<2x1xf32> to vector<2x128xf32>
      %286 = arith.subf %250, %285 : vector<2x128xf32>
      %287 = math.exp %286 : vector<2x128xf32>
      %cst_85 = arith.constant dense<0.000000e+00> : vector<2x128xf32>
      %288 = tpu.matmul %287, %13, %cst_85 {dimension_numbers = #tpu.dot_dimension_numbers<[1], [0], [0], [1], [0, 0, 1, 1], [], []>} : vector<2x128xf32>, vector<128x128xf32>, vector<2x128xf32> -> vector<2x128xf32>
      %cst_86 = arith.constant 1.000000e-30 : f32
      %289 = vector.broadcast %cst_86 : f32 to vector<2x128xf32>
      %290 = arith.maximumf %288, %289 : vector<2x128xf32>
      %291 = math.log %290 : vector<2x128xf32>
      %292 = vector.broadcast %284 : vector<2x1xf32> to vector<2x128xf32>
      %293 = arith.addf %292, %291 : vector<2x128xf32>
      %294 = arith.addf %293, %259 : vector<2x128xf32>
      %295 = vector.shape_cast %261 : vector<2x1xi1> to vector<2x1xi1>
      %296 = vector.broadcast %295 : vector<2x1xi1> to vector<2x128xi1>
      %297 = arith.select %296, %294, %250 : vector<2x128xi1>, vector<2x128xf32>
      %c6_i32 = arith.constant 6 : i32
      %298 = arith.addi %0, %c6_i32 : i32
      %c0_87 = arith.constant 0 : index
      %299 = arith.index_cast %c6_i32 : i32 to index
      %c0_88 = arith.constant 0 : index
      %300 = vector.load %arg2[%c0_87, %299, %c0_88] : memref<2x8x128xbf16, #tpu.memory_space<vmem>>, vector<2x1x128xbf16>
      %301 = vector.shape_cast %300 : vector<2x1x128xbf16> to vector<2x128xbf16>
      %302 = arith.extf %301 : vector<2x128xbf16> to vector<2x128xf32>
      %cst_89 = arith.constant -3.000000e+01 : f32
      %cst_90 = arith.constant 3.000000e+01 : f32
      %303 = vector.broadcast %cst_89 : f32 to vector<2x128xf32>
      %304 = arith.maximumf %303, %302 : vector<2x128xf32>
      %305 = vector.broadcast %cst_90 : f32 to vector<2x128xf32>
      %306 = arith.minimumf %305, %304 : vector<2x128xf32>
      %307 = vector.broadcast %298 : i32 to vector<2x1xi32>
      %308 = arith.cmpi slt, %307, %11 : vector<2x1xi32>
      %cst_91 = arith.constant dense<0xFF800000> : vector<2xf32>
      %309 = vector.multi_reduction <maximumf>, %280, %cst_91 [1] : vector<2x128xf32> to vector<2xf32>
      %310 = vector.shape_cast %309 : vector<2xf32> to vector<2x1xf32>
      %cst_92 = arith.constant -1.000000e+30 : f32
      %311 = vector.broadcast %cst_92 : f32 to vector<2x1xf32>
      %312 = arith.maximumf %310, %311 : vector<2x1xf32>
      %313 = vector.broadcast %312 : vector<2x1xf32> to vector<2x128xf32>
      %314 = arith.subf %280, %313 : vector<2x128xf32>
      %315 = math.exp %314 : vector<2x128xf32>
      %316 = vector.shape_cast %315 : vector<2x128xf32> to vector<2x1x128xf32>
      "tpu.trace_start"() <{level = 10 : i32, message = "bqs,bst->bqt"}> : () -> ()
      %cst_93 = arith.constant dense<0.000000e+00> : vector<2x1x128xf32>
      %317 = tpu.matmul %316, %12, %cst_93 {dimension_numbers = #tpu.dot_dimension_numbers<[2], [1], [1], [2], [0, 0, 0, 1, 1, 2], [0], [0]>} : vector<2x1x128xf32>, vector<2x128x128xf32>, vector<2x1x128xf32> -> vector<2x1x128xf32>
      "tpu.trace_stop"() : () -> ()
      %318 = vector.shape_cast %317 : vector<2x1x128xf32> to vector<2x128xf32>
      %cst_94 = arith.constant 1.000000e-30 : f32
      %319 = vector.broadcast %cst_94 : f32 to vector<2x128xf32>
      %320 = arith.maximumf %318, %319 : vector<2x128xf32>
      %321 = math.log %320 : vector<2x128xf32>
      %322 = vector.broadcast %312 : vector<2x1xf32> to vector<2x128xf32>
      %323 = arith.addf %322, %321 : vector<2x128xf32>
      %324 = arith.addf %323, %306 : vector<2x128xf32>
      %325 = vector.shape_cast %308 : vector<2x1xi1> to vector<2x1xi1>
      %326 = vector.broadcast %325 : vector<2x1xi1> to vector<2x128xi1>
      %327 = arith.select %326, %324, %280 : vector<2x128xi1>, vector<2x128xf32>
      %cst_95 = arith.constant dense<0xFF800000> : vector<2xf32>
      %328 = vector.multi_reduction <maximumf>, %297, %cst_95 [1] : vector<2x128xf32> to vector<2xf32>
      %329 = vector.shape_cast %328 : vector<2xf32> to vector<2x1xf32>
      %cst_96 = arith.constant -1.000000e+30 : f32
      %330 = vector.broadcast %cst_96 : f32 to vector<2x1xf32>
      %331 = arith.maximumf %329, %330 : vector<2x1xf32>
      %332 = vector.broadcast %331 : vector<2x1xf32> to vector<2x128xf32>
      %333 = arith.subf %297, %332 : vector<2x128xf32>
      %334 = math.exp %333 : vector<2x128xf32>
      %cst_97 = arith.constant dense<0.000000e+00> : vector<2x128xf32>
      %335 = tpu.matmul %334, %13, %cst_97 {dimension_numbers = #tpu.dot_dimension_numbers<[1], [0], [0], [1], [0, 0, 1, 1], [], []>} : vector<2x128xf32>, vector<128x128xf32>, vector<2x128xf32> -> vector<2x128xf32>
      %cst_98 = arith.constant 1.000000e-30 : f32
      %336 = vector.broadcast %cst_98 : f32 to vector<2x128xf32>
      %337 = arith.maximumf %335, %336 : vector<2x128xf32>
      %338 = math.log %337 : vector<2x128xf32>
      %339 = vector.broadcast %331 : vector<2x1xf32> to vector<2x128xf32>
      %340 = arith.addf %339, %338 : vector<2x128xf32>
      %341 = arith.addf %340, %306 : vector<2x128xf32>
      %342 = vector.shape_cast %308 : vector<2x1xi1> to vector<2x1xi1>
      %343 = vector.broadcast %342 : vector<2x1xi1> to vector<2x128xi1>
      %344 = arith.select %343, %341, %297 : vector<2x128xi1>, vector<2x128xf32>
      %c7_i32 = arith.constant 7 : i32
      %345 = arith.addi %0, %c7_i32 : i32
      %c0_99 = arith.constant 0 : index
      %346 = arith.index_cast %c7_i32 : i32 to index
      %c0_100 = arith.constant 0 : index
      %347 = vector.load %arg2[%c0_99, %346, %c0_100] : memref<2x8x128xbf16, #tpu.memory_space<vmem>>, vector<2x1x128xbf16>
      %348 = vector.shape_cast %347 : vector<2x1x128xbf16> to vector<2x128xbf16>
      %349 = arith.extf %348 : vector<2x128xbf16> to vector<2x128xf32>
      %cst_101 = arith.constant -3.000000e+01 : f32
      %cst_102 = arith.constant 3.000000e+01 : f32
      %350 = vector.broadcast %cst_101 : f32 to vector<2x128xf32>
      %351 = arith.maximumf %350, %349 : vector<2x128xf32>
      %352 = vector.broadcast %cst_102 : f32 to vector<2x128xf32>
      %353 = arith.minimumf %352, %351 : vector<2x128xf32>
      %354 = vector.broadcast %345 : i32 to vector<2x1xi32>
      %355 = arith.cmpi slt, %354, %11 : vector<2x1xi32>
      %cst_103 = arith.constant dense<0xFF800000> : vector<2xf32>
      %356 = vector.multi_reduction <maximumf>, %327, %cst_103 [1] : vector<2x128xf32> to vector<2xf32>
      %357 = vector.shape_cast %356 : vector<2xf32> to vector<2x1xf32>
      %cst_104 = arith.constant -1.000000e+30 : f32
      %358 = vector.broadcast %cst_104 : f32 to vector<2x1xf32>
      %359 = arith.maximumf %357, %358 : vector<2x1xf32>
      %360 = vector.broadcast %359 : vector<2x1xf32> to vector<2x128xf32>
      %361 = arith.subf %327, %360 : vector<2x128xf32>
      %362 = math.exp %361 : vector<2x128xf32>
      %363 = vector.shape_cast %362 : vector<2x128xf32> to vector<2x1x128xf32>
      "tpu.trace_start"() <{level = 10 : i32, message = "bqs,bst->bqt"}> : () -> ()
      %cst_105 = arith.constant dense<0.000000e+00> : vector<2x1x128xf32>
      %364 = tpu.matmul %363, %12, %cst_105 {dimension_numbers = #tpu.dot_dimension_numbers<[2], [1], [1], [2], [0, 0, 0, 1, 1, 2], [0], [0]>} : vector<2x1x128xf32>, vector<2x128x128xf32>, vector<2x1x128xf32> -> vector<2x1x128xf32>
      "tpu.trace_stop"() : () -> ()
      %365 = vector.shape_cast %364 : vector<2x1x128xf32> to vector<2x128xf32>
      %cst_106 = arith.constant 1.000000e-30 : f32
      %366 = vector.broadcast %cst_106 : f32 to vector<2x128xf32>
      %367 = arith.maximumf %365, %366 : vector<2x128xf32>
      %368 = math.log %367 : vector<2x128xf32>
      %369 = vector.broadcast %359 : vector<2x1xf32> to vector<2x128xf32>
      %370 = arith.addf %369, %368 : vector<2x128xf32>
      %371 = arith.addf %370, %353 : vector<2x128xf32>
      %372 = vector.shape_cast %355 : vector<2x1xi1> to vector<2x1xi1>
      %373 = vector.broadcast %372 : vector<2x1xi1> to vector<2x128xi1>
      %374 = arith.select %373, %371, %327 : vector<2x128xi1>, vector<2x128xf32>
      %cst_107 = arith.constant dense<0xFF800000> : vector<2xf32>
      %375 = vector.multi_reduction <maximumf>, %344, %cst_107 [1] : vector<2x128xf32> to vector<2xf32>
      %376 = vector.shape_cast %375 : vector<2xf32> to vector<2x1xf32>
      %cst_108 = arith.constant -1.000000e+30 : f32
      %377 = vector.broadcast %cst_108 : f32 to vector<2x1xf32>
      %378 = arith.maximumf %376, %377 : vector<2x1xf32>
      %379 = vector.broadcast %378 : vector<2x1xf32> to vector<2x128xf32>
      %380 = arith.subf %344, %379 : vector<2x128xf32>
      %381 = math.exp %380 : vector<2x128xf32>
      %cst_109 = arith.constant dense<0.000000e+00> : vector<2x128xf32>
      %382 = tpu.matmul %381, %13, %cst_109 {dimension_numbers = #tpu.dot_dimension_numbers<[1], [0], [0], [1], [0, 0, 1, 1], [], []>} : vector<2x128xf32>, vector<128x128xf32>, vector<2x128xf32> -> vector<2x128xf32>
      %cst_110 = arith.constant 1.000000e-30 : f32
      %383 = vector.broadcast %cst_110 : f32 to vector<2x128xf32>
      %384 = arith.maximumf %382, %383 : vector<2x128xf32>
      %385 = math.log %384 : vector<2x128xf32>
      %386 = vector.broadcast %378 : vector<2x1xf32> to vector<2x128xf32>
      %387 = arith.addf %386, %385 : vector<2x128xf32>
      %388 = arith.addf %387, %353 : vector<2x128xf32>
      %389 = vector.shape_cast %355 : vector<2x1xi1> to vector<2x1xi1>
      %390 = vector.broadcast %389 : vector<2x1xi1> to vector<2x128xi1>
      %391 = arith.select %390, %388, %344 : vector<2x128xi1>, vector<2x128xf32>
      %c8_i32_111 = arith.constant 8 : i32
      %c0_112 = arith.constant 0 : index
      %c0_113 = arith.constant 0 : index
      %392 = vector.load %arg11[%c0_112, %c0_113] : memref<2x128xf32, #tpu.memory_space<vmem>>, vector<2x128xf32>
      tpu.vector_store %arg11[%c0_112, %c0_113], %374 {strides = array<i32>} : memref<2x128xf32, #tpu.memory_space<vmem>>, vector<2x128xf32>,
      %c0_114 = arith.constant 0 : index
      %c0_115 = arith.constant 0 : index
      %393 = vector.load %arg12[%c0_114, %c0_115] : memref<2x128xf32, #tpu.memory_space<vmem>>, vector<2x128xf32>
      tpu.vector_store %arg12[%c0_114, %c0_115], %391 {strides = array<i32>} : memref<2x128xf32, #tpu.memory_space<vmem>>, vector<2x128xf32>,
    } else {
    }
    %c1_i32 = arith.constant 1 : i32
    %8 = arith.cmpi eq, %arg0, %c1_i32 : i32
    %9 = arith.extui %8 : i1 to i32
    %c0_i32_2 = arith.constant 0 : i32
    %10 = arith.cmpi ne, %9, %c0_i32_2 : i32
    scf.if %10 {
      %c0_3 = arith.constant 0 : index
      %c0_4 = arith.constant 0 : index
      %11 = vector.load %arg11[%c0_3, %c0_4] : memref<2x128xf32, #tpu.memory_space<vmem>>, vector<2x128xf32>
      %c0_5 = arith.constant 0 : index
      %c0_6 = arith.constant 0 : index
      %12 = vector.load %arg6[%c0_5, %c0_6] : memref<2x128xf32, #tpu.memory_space<vmem>>, vector<2x128xf32>
      %13 = arith.addf %11, %12 : vector<2x128xf32>
      %cst = arith.constant dense<0xFF800000> : vector<2xf32>
      %14 = vector.multi_reduction <maximumf>, %13, %cst [1] : vector<2x128xf32> to vector<2xf32>
      %15 = vector.shape_cast %14 : vector<2xf32> to vector<2x1xf32>
      %cst_7 = arith.constant -1.000000e+30 : f32
      %16 = vector.broadcast %cst_7 : f32 to vector<2x1xf32>
      %17 = arith.maximumf %15, %16 : vector<2x1xf32>
      %18 = vector.broadcast %17 : vector<2x1xf32> to vector<2x128xf32>
      %19 = arith.subf %13, %18 : vector<2x128xf32>
      %20 = math.exp %19 : vector<2x128xf32>
      %cst_8 = arith.constant dense<0.000000e+00> : vector<2xf32>
      %21 = vector.multi_reduction <add>, %20, %cst_8 [1] : vector<2x128xf32> to vector<2xf32>
      %22 = vector.shape_cast %21 : vector<2xf32> to vector<2x1xf32>
      %cst_9 = arith.constant 1.000000e-30 : f32
      %23 = vector.broadcast %cst_9 : f32 to vector<2x1xf32>
      %24 = arith.maximumf %22, %23 : vector<2x1xf32>
      %25 = math.log %24 : vector<2x1xf32>
      %26 = arith.addf %17, %25 : vector<2x1xf32>
      %c0_10 = arith.constant 0 : index
      %c0_11 = arith.constant 0 : index
      %27 = vector.load %arg12[%c0_10, %c0_11] : memref<2x128xf32, #tpu.memory_space<vmem>>, vector<2x128xf32>
      %c0_12 = arith.constant 0 : index
      %c0_13 = arith.constant 0 : index
      %28 = vector.load %arg9[%c0_12, %c0_13] : memref<1x128xf32, #tpu.memory_space<vmem>>, vector<1x128xf32>
      %29 = vector.shape_cast %28 : vector<1x128xf32> to vector<1x128xf32>
      %30 = vector.broadcast %29 : vector<1x128xf32> to vector<2x128xf32>
      %31 = arith.addf %27, %30 : vector<2x128xf32>
      %cst_14 = arith.constant dense<0xFF800000> : vector<2xf32>
      %32 = vector.multi_reduction <maximumf>, %31, %cst_14 [1] : vector<2x128xf32> to vector<2xf32>
      %33 = vector.shape_cast %32 : vector<2xf32> to vector<2x1xf32>
      %cst_15 = arith.constant -1.000000e+30 : f32
      %34 = vector.broadcast %cst_15 : f32 to vector<2x1xf32>
      %35 = arith.maximumf %33, %34 : vector<2x1xf32>
      %36 = vector.broadcast %35 : vector<2x1xf32> to vector<2x128xf32>
      %37 = arith.subf %31, %36 : vector<2x128xf32>
      %38 = math.exp %37 : vector<2x128xf32>
      %cst_16 = arith.constant dense<0.000000e+00> : vector<2xf32>
      %39 = vector.multi_reduction <add>, %38, %cst_16 [1] : vector<2x128xf32> to vector<2xf32>
      %40 = vector.shape_cast %39 : vector<2xf32> to vector<2x1xf32>
      %cst_17 = arith.constant 1.000000e-30 : f32
      %41 = vector.broadcast %cst_17 : f32 to vector<2x1xf32>
      %42 = arith.maximumf %40, %41 : vector<2x1xf32>
      %43 = math.log %42 : vector<2x1xf32>
      %44 = arith.addf %35, %43 : vector<2x1xf32>
      %45 = tpu.concatenate %26, %44 in 1 : vector<2x1xf32>, vector<2x1xf32> -> vector<2x2xf32>
      %c0_18 = arith.constant 0 : index
      %c0_19 = arith.constant 0 : index
      %46 = vector.load %arg10[%c0_18, %c0_19] : memref<2x2xf32, #tpu.memory_space<vmem>>, vector<2x2xf32>
      tpu.vector_store %arg10[%c0_18, %c0_19], %45 {strides = array<i32>} : memref<2x2xf32, #tpu.memory_space<vmem>>, vector<2x2xf32>,
    } else {
    }
    return
  }
  func.func @transform_0(%arg0: i32, %arg1: memref<1xi32, #tpu.memory_space<smem>>) -> (i32, i32, i32) {
    %c0_i32 = arith.constant 0 : i32
    %c0_i32_0 = arith.constant 0 : i32
    %c0_i32_1 = arith.constant 0 : i32
    return %c0_i32, %arg0, %c0_i32_0 : i32, i32, i32
  }
  func.func @transform_1(%arg0: i32, %arg1: memref<1xi32, #tpu.memory_space<smem>>) -> (i32, i32) {
    %c0_i32 = arith.constant 0 : i32
    %c0_i32_0 = arith.constant 0 : i32
    %c0_i32_1 = arith.constant 0 : i32
    return %c0_i32, %c0_i32_0 : i32, i32
  }
  func.func @transform_2(%arg0: i32, %arg1: memref<1xi32, #tpu.memory_space<smem>>) -> (i32, i32, i32) {
    %c0_i32 = arith.constant 0 : i32
    %c0_i32_0 = arith.constant 0 : i32
    %c0_i32_1 = arith.constant 0 : i32
    %c0_i32_2 = arith.constant 0 : i32
    return %c0_i32, %c0_i32_0, %c0_i32_1 : i32, i32, i32
  }
  func.func @transform_3(%arg0: i32, %arg1: memref<1xi32, #tpu.memory_space<smem>>) -> (i32, i32) {
    %c0_i32 = arith.constant 0 : i32
    %c0_i32_0 = arith.constant 0 : i32
    %c0_i32_1 = arith.constant 0 : i32
    return %c0_i32, %c0_i32_0 : i32, i32
  }
  func.func @transform_4(%arg0: i32, %arg1: memref<1xi32, #tpu.memory_space<smem>>) -> (i32, i32) {
    %c0_i32 = arith.constant 0 : i32
    %c0_i32_0 = arith.constant 0 : i32
    %c0_i32_1 = arith.constant 0 : i32
    return %c0_i32, %c0_i32_0 : i32, i32
  }
  func.func @transform_5(%arg0: i32, %arg1: memref<1xi32, #tpu.memory_space<smem>>) -> (i32, i32) {
    %c0_i32 = arith.constant 0 : i32
    %c0_i32_0 = arith.constant 0 : i32
    %c0_i32_1 = arith.constant 0 : i32
    return %c0_i32, %c0_i32_0 : i32, i32
  }
  func.func @transform_6(%arg0: i32, %arg1: memref<1xi32, #tpu.memory_space<smem>>) -> (i32, i32) {
    %c0_i32 = arith.constant 0 : i32
    %c0_i32_0 = arith.constant 0 : i32
    %c0_i32_1 = arith.constant 0 : i32
    return %c0_i32, %c0_i32_0 : i32, i32
  }
  func.func @transform_7(%arg0: i32, %arg1: memref<1xi32, #tpu.memory_space<smem>>) -> (i32, i32) {
    %c0_i32 = arith.constant 0 : i32
    %c0_i32_0 = arith.constant 0 : i32
    %c0_i32_1 = arith.constant 0 : i32
    return %c0_i32, %c0_i32_0 : i32, i32
  }
  func.func @transform_8(%arg0: i32, %arg1: memref<1xi32, #tpu.memory_space<smem>>) -> (i32, i32) {
    %c0_i32 = arith.constant 0 : i32
    %c0_i32_0 = arith.constant 0 : i32
    %c0_i32_1 = arith.constant 0 : i32
    return %c0_i32, %c0_i32_0 : i32, i32
  }
}

</mosaic_0001>

<llo_original>
// kernel: chain_loss.1
$region0: #{chain_loss.1}
  #allocation0 [shape = 'u32[]', space=smem, size = 0x4, offset = 0x4, fixed_abs, tag = 'smem constant byte address 0x4 - core index']
  #allocation1 [shape = 'u32[144,128]{1,0:T(1,128)}', space=vmem, size = 0x12000, scoped, tag = 'internal scratch']
  #allocation2 [shape = 'f32[2,128]{1,0:T(2,128)}', space=vmem, size = 0x400, scoped, tag = 'scratch operand']
  #allocation3 [shape = 'f32[2,128]{1,0:T(2,128)}', space=vmem, size = 0x400, scoped, tag = 'scratch operand']
  #allocation4 [shape = 's32[1]{0}', space=sflag, size = 0x4, scoped, tag = 'scoped memory for chain_loss.1']
  #allocation5 [shape = 's32[1]{0:T(128)S(6)}', space=smem, size = 0x200, scoped, tag = 'prefetched SMEM operand 0']
  %s0 = inlined_call_operand.<no memory space> [shape: s32[1], index: 0, kind: input, shape index: {}]
  %s1 = inlined_call_operand.hbm [shape: bf16[2,16,128], index: 1, kind: input, shape index: {}]
  %s2 = inlined_call_operand.hbm [shape: s32[2,1], index: 2, kind: input, shape index: {}]
  %s3 = inlined_call_operand.hbm [shape: f32[2,128,128], index: 3, kind: input, shape index: {}]
  %s4 = inlined_call_operand.hbm [shape: f32[2,128], index: 4, kind: input, shape index: {}]
  %s5 = inlined_call_operand.hbm [shape: f32[2,128], index: 5, kind: input, shape index: {}]
  %s6 = inlined_call_operand.hbm [shape: f32[128,128], index: 6, kind: input, shape index: {}]
  %s7 = inlined_call_operand.hbm [shape: f32[1,128], index: 7, kind: input, shape index: {}]
  %s8 = inlined_call_operand.hbm [shape: f32[1,128], index: 8, kind: input, shape index: {}]
  %s9 = inlined_call_operand.hbm [shape: f32[2,2], index: 9, kind: output, shape index: {}]
  %s10 = sld [smem:[#allocation0]]
  $region109: #{chain_loss.1} parent=0
    _
  %s12 = ssub.s32 1, %s10
  %s13 = scalar_select 0, %s12, %s10
  %14 = sst [smem:[#allocation5]] %s0
  $region1: #{chain_loss.1} parent=0
    #allocation6 [shape = 'u8[8192]{0}', space=vmem, size = 0x2000, scoped, tag = 'input window, operand 1']
    #allocation7 [shape = 's32[2]{0}', space=sflag, size = 0x8, scoped, tag = 'scoped memory for chain_loss.1']
    #allocation8 [shape = 's32[2]{0}', space=sflag, size = 0x8, scoped, tag = 'scoped memory for chain_loss.1']
    #allocation9 [shape = 'u8[1024]{0}', space=vmem, size = 0x400, scoped, tag = 'input window, operand 2, single buffered']
    #allocation10 [shape = 's32[1]{0}', space=sflag, size = 0x4, scoped, tag = 'scoped memory for chain_loss.1']
    #allocation11 [shape = 'u8[131072]{0}', space=vmem, size = 0x20000, scoped, tag = 'input window, operand 3, single buffered']
    #allocation12 [shape = 'u8[1024]{0}', space=vmem, size = 0x400, scoped, tag = 'input window, operand 4, single buffered']
    #allocation13 [shape = 's32[1]{0}', space=sflag, size = 0x4, scoped, tag = 'scoped memory for chain_loss.1']
    #allocation14 [shape = 'u8[1024]{0}', space=vmem, size = 0x400, scoped, tag = 'input window, operand 5, single buffered']
    #allocation15 [shape = 'u8[65536]{0}', space=vmem, size = 0x10000, scoped, tag = 'input window, operand 6, single buffered']
    #allocation16 [shape = 's32[1]{0}', space=sflag, size = 0x4, scoped, tag = 'scoped memory for chain_loss.1']
    #allocation17 [shape = 'u8[512]{0}', space=vmem, size = 0x400, scoped, tag = 'input window, operand 7, single buffered']
    #allocation18 [shape = 'u8[512]{0}', space=vmem, size = 0x400, scoped, tag = 'input window, operand 8, single buffered']
    #allocation19 [shape = 's32[1]{0}', space=sflag, size = 0x4, scoped, tag = 'scoped memory for chain_loss.1']
    #allocation20 [shape = 'u8[1024]{0}', space=vmem, size = 0x400, scoped, tag = 'output window, operand 0, single buffered']
    %15 = vsyncpa [#allocation7], 0
    %s16 = scalar_lea.sflag [#allocation7], 1
    %17 = vsyncpa %s16, 0
    %18 = vsyncpa [#allocation10], 0
    %19 = vsyncpa [#allocation13], 0
    %20 = vsyncpa [#allocation16], 0
    %21 = vsyncpa [#allocation19], 0
    %22 = vsyncpa [#allocation8], 0
    loop: start=0, step=1, limit=4
    $region2: #{chain_loss.1} parent=1 // loop_pre_header
      _
    $region3: #{chain_loss.1} parent=1 // loop_header
      %s24 = sphi 0, %s28
      %p25 = scmp.ge.s32.totalorder %s24, 4
      %s34 = sphi 0, %s36
      %s37 = sphi 0, %s34
      %s38 = sphi 0, %s37
      %s54 = sphi 0, %s38
      %s58 = sphi 0, %s58
      %s60 = sphi 0, %s58
      %s61 = sphi 0, %s60
      %s75 = sphi 0, %s61
      %s79 = sphi 0, %s79
      %s81 = sphi 0, %s79
      %s82 = sphi 0, %s81
      %s96 = sphi 0, %s82
      %s100 = sphi 0, %s100
      %s102 = sphi 0, %s100
      %s103 = sphi 0, %s102
      %s117 = sphi 0, %s103
      %s121 = sphi 0, %s121
      %s123 = sphi 0, %s121
      %s124 = sphi 0, %s123
      %s138 = sphi 0, %s124
      %s142 = sphi 0, %s142
      %s144 = sphi 0, %s142
      %s145 = sphi 0, %s144
      %s159 = sphi 0, %s145
      %s163 = sphi 0, %s163
      %s165 = sphi 0, %s163
      %s166 = sphi 0, %s165
      %s180 = sphi 0, %s166
      %s184 = sphi 0, %s184
      %s186 = sphi 0, %s184
      %s187 = sphi 0, %s186
      %s201 = sphi 0, %s187
      %s205 = sphi 0, %s205
      %s207 = sphi 0, %s205
      %s208 = sphi 0, %s207
      %s222 = sphi 0, %s208
    $region4: #{chain_loss.1} parent=1 // loop_header_branch
      %27 = sbr.rel (%p25) target = $region8
    $region5: #{chain_loss.1} parent=1 // loop_body
      %s29 = ssub.s32 %s24, 1
      %s30 = ssub.s32 %s24, 2
      %s31 = sadd.s32 %s24, 1
      %s32 = ssub.s32 %s24, %s31
      %p33 = scmp.eq.s32.totalorder %s32, 0
      %s35 = sadd.s32 %s34, 1
      %s36 = scalar_select %p33, %s34, %s35
      %p39 = pneg %p33
      %p40 = scmp.eq.s32.totalorder %s24, 1
      %p41 = por %p39, %p40
      %p42 = scmp.ne.s32.totalorder %s34, %s37
      %p43 = scmp.eq.s32.totalorder %s24, 0
      %p44 = por %p42, %p43
      %p45 = scmp.ne.s32.totalorder %s34, %s37
      %p46 = scmp.eq.s32.totalorder %s29, 1
      %p47 = por %p45, %p46
      %p48 = scmp.ne.s32.totalorder %s37, %s38
      %p49 = scmp.eq.s32.totalorder %s29, 0
      %p50 = por %p48, %p49
      %p51 = scmp.ne.s32.totalorder %s37, %s38
      %p52 = scmp.eq.s32.totalorder %s30, 1
      %p53 = por %p51, %p52
      %p55 = scmp.ne.s32.totalorder %s38, %s54
      %p56 = scmp.eq.s32.totalorder %s30, 0
      %p57 = por %p55, %p56
      %s59 = sadd.s32 %s58, 1
      %p62 = scmp.eq.s32.totalorder %s24, 1
      %p63 = scmp.ne.s32.totalorder %s58, %s60
      %p64 = scmp.eq.s32.totalorder %s24, 0
      %p65 = por %p63, %p64
      %p66 = scmp.ne.s32.totalorder %s58, %s60
      %p67 = scmp.eq.s32.totalorder %s29, 1
      %p68 = por %p66, %p67
      %p69 = scmp.ne.s32.totalorder %s60, %s61
      %p70 = scmp.eq.s32.totalorder %s29, 0
      %p71 = por %p69, %p70
      %p72 = scmp.ne.s32.totalorder %s60, %s61
      %p73 = scmp.eq.s32.totalorder %s30, 1
      %p74 = por %p72, %p73
      %p76 = scmp.ne.s32.totalorder %s61, %s75
      %p77 = scmp.eq.s32.totalorder %s30, 0
      %p78 = por %p76, %p77
      %s80 = sadd.s32 %s79, 1
      %p83 = scmp.eq.s32.totalorder %s24, 1
      %p84 = scmp.ne.s32.totalorder %s79, %s81
      %p85 = scmp.eq.s32.totalorder %s24, 0
      %p86 = por %p84, %p85
      %p87 = scmp.ne.s32.totalorder %s79, %s81
      %p88 = scmp.eq.s32.totalorder %s29, 1
      %p89 = por %p87, %p88
      %p90 = scmp.ne.s32.totalorder %s81, %s82
      %p91 = scmp.eq.s32.totalorder %s29, 0
      %p92 = por %p90, %p91
      %p93 = scmp.ne.s32.totalorder %s81, %s82
      %p94 = scmp.eq.s32.totalorder %s30, 1
      %p95 = por %p93, %p94
      %p97 = scmp.ne.s32.totalorder %s82, %s96
      %p98 = scmp.eq.s32.totalorder %s30, 0
      %p99 = por %p97, %p98
      %s101 = sadd.s32 %s100, 1
      %p104 = scmp.eq.s32.totalorder %s24, 1
      %p105 = scmp.ne.s32.totalorder %s100, %s102
      %p106 = scmp.eq.s32.totalorder %s24, 0
      %p107 = por %p105, %p106
      %p108 = scmp.ne.s32.totalorder %s100, %s102
      %p109 = scmp.eq.s32.totalorder %s29, 1
      %p110 = por %p108, %p109
      %p111 = scmp.ne.s32.totalorder %s102, %s103
      %p112 = scmp.eq.s32.totalorder %s29, 0
      %p113 = por %p111, %p112
      %p114 = scmp.ne.s32.totalorder %s102, %s103
      %p115 = scmp.eq.s32.totalorder %s30, 1
      %p116 = por %p114, %p115
      %p118 = scmp.ne.s32.totalorder %s103, %s117
      %p119 = scmp.eq.s32.totalorder %s30, 0
      %p120 = por %p118, %p119
      %s122 = sadd.s32 %s121, 1
      %p125 = scmp.eq.s32.totalorder %s24, 1
      %p126 = scmp.ne.s32.totalorder %s121, %s123
      %p127 = scmp.eq.s32.totalorder %s24, 0
      %p128 = por %p126, %p127
      %p129 = scmp.ne.s32.totalorder %s121, %s123
      %p130 = scmp.eq.s32.totalorder %s29, 1
      %p131 = por %p129, %p130
      %p132 = scmp.ne.s32.totalorder %s123, %s124
      %p133 = scmp.eq.s32.totalorder %s29, 0
      %p134 = por %p132, %p133
      %p135 = scmp.ne.s32.totalorder %s123, %s124
      %p136 = scmp.eq.s32.totalorder %s30, 1
      %p137 = por %p135, %p136
      %p139 = scmp.ne.s32.totalorder %s124, %s138
      %p140 = scmp.eq.s32.totalorder %s30, 0
      %p141 = por %p139, %p140
      %s143 = sadd.s32 %s142, 1
      %p146 = scmp.eq.s32.totalorder %s24, 1
      %p147 = scmp.ne.s32.totalorder %s142, %s144
      %p148 = scmp.eq.s32.totalorder %s24, 0
      %p149 = por %p147, %p148
      %p150 = scmp.ne.s32.totalorder %s142, %s144
      %p151 = scmp.eq.s32.totalorder %s29, 1
      %p152 = por %p150, %p151
      %p153 = scmp.ne.s32.totalorder %s144, %s145
      %p154 = scmp.eq.s32.totalorder %s29, 0
      %p155 = por %p153, %p154
      %p156 = scmp.ne.s32.totalorder %s144, %s145
      %p157 = scmp.eq.s32.totalorder %s30, 1
      %p158 = por %p156, %p157
      %p160 = scmp.ne.s32.totalorder %s145, %s159
      %p161 = scmp.eq.s32.totalorder %s30, 0
      %p162 = por %p160, %p161
      %s164 = sadd.s32 %s163, 1
      %p167 = scmp.eq.s32.totalorder %s24, 1
      %p168 = scmp.ne.s32.totalorder %s163, %s165
      %p169 = scmp.eq.s32.totalorder %s24, 0
      %p170 = por %p168, %p169
      %p171 = scmp.ne.s32.totalorder %s163, %s165
      %p172 = scmp.eq.s32.totalorder %s29, 1
      %p173 = por %p171, %p172
      %p174 = scmp.ne.s32.totalorder %s165, %s166
      %p175 = scmp.eq.s32.totalorder %s29, 0
      %p176 = por %p174, %p175
      %p177 = scmp.ne.s32.totalorder %s165, %s166
      %p178 = scmp.eq.s32.totalorder %s30, 1
      %p179 = por %p177, %p178
      %p181 = scmp.ne.s32.totalorder %s166, %s180
      %p182 = scmp.eq.s32.totalorder %s30, 0
      %p183 = por %p181, %p182
      %s185 = sadd.s32 %s184, 1
      %p188 = scmp.eq.s32.totalorder %s24, 1
      %p189 = scmp.ne.s32.totalorder %s184, %s186
      %p190 = scmp.eq.s32.totalorder %s24, 0
      %p191 = por %p189, %p190
      %p192 = scmp.ne.s32.totalorder %s184, %s186
      %p193 = scmp.eq.s32.totalorder %s29, 1
      %p194 = por %p192, %p193
      %p195 = scmp.ne.s32.totalorder %s186, %s187
      %p196 = scmp.eq.s32.totalorder %s29, 0
      %p197 = por %p195, %p196
      %p198 = scmp.ne.s32.totalorder %s186, %s187
      %p199 = scmp.eq.s32.totalorder %s30, 1
      %p200 = por %p198, %p199
      %p202 = scmp.ne.s32.totalorder %s187, %s201
      %p203 = scmp.eq.s32.totalorder %s30, 0
      %p204 = por %p202, %p203
      %s206 = sadd.s32 %s205, 1
      %p209 = scmp.eq.s32.totalorder %s24, 1
      %p210 = scmp.ne.s32.totalorder %s205, %s207
      %p211 = scmp.eq.s32.totalorder %s24, 0
      %p212 = por %p210, %p211
      %p213 = scmp.ne.s32.totalorder %s205, %s207
      %p214 = scmp.eq.s32.totalorder %s29, 1
      %p215 = por %p213, %p214
      %p216 = scmp.ne.s32.totalorder %s207, %s208
      %p217 = scmp.eq.s32.totalorder %s29, 0
      %p218 = por %p216, %p217
      %p219 = scmp.ne.s32.totalorder %s207, %s208
      %p220 = scmp.eq.s32.totalorder %s30, 1
      %p221 = por %p219, %p220
      %p223 = scmp.ne.s32.totalorder %s208, %s222
      %p224 = scmp.eq.s32.totalorder %s30, 0
      %p225 = por %p223, %p224
      %p226 = scmp.le.s32.totalorder 1, %s24
      %p227 = scmp.lt.s32.totalorder %s24, 3
      %p228 = pnand %p226, %p227
      %p229 = pneg %p228
      // Predicated region
      $region9: #{chain_loss.1} parent=5 // pred_check
        _
      $region10: #{chain_loss.1} parent=5 // pred_check_branch
        %231 = sbr.rel (%p228) target = $region12
      $region11: #{chain_loss.1} parent=5 // pred_region
        %s232 = ssub.s32 %s24, 1
        // Predicated region
        $region13: #{chain_loss.1} parent=11 // pred_check
          %p233 = pneg %p71
        $region14: #{chain_loss.1} parent=11 // pred_check_branch
          %235 = sbr.rel (%p233) target = $region16
        $region15: #{chain_loss.1} parent=11 // pred_region
          %s237 = ssub.s32 32, 32
          %238 = vsyncadd [#allocation10], %s237
          %s240 = sshll.u32 [#allocation9], 4
          %s241 = int_to_ptr.vmem [resolvable:$true] %s240
          %243 = dma.hbm_to_vmem [thread:$0]  %s2, 32, %s241, [#allocation10]
        $region16: #{chain_loss.1} parent=11 // pred_fallthru
          _
        // Predicated region
        $region17: #{chain_loss.1} parent=11 // pred_check
          %p244 = pneg %p92
        $region18: #{chain_loss.1} parent=11 // pred_check_branch
          %246 = sbr.rel (%p244) target = $region20
        $region19: #{chain_loss.1} parent=11 // pred_region
          %s248 = ssub.s32 4096, 4096
          %249 = vsyncadd [#allocation10], %s248
          %s250 = sshll.u32 [#allocation11], 4
          %s251 = int_to_ptr.vmem [resolvable:$true] %s250
          %256 = dma.hbm_to_vmem [thread:$0]  %s3, 4096, %s251, [#allocation10], 128, 128, 8
        $region20: #{chain_loss.1} parent=11 // pred_fallthru
          _
        // Predicated region
        $region21: #{chain_loss.1} parent=11 // pred_check
          %p257 = pneg %p113
        $region22: #{chain_loss.1} parent=11 // pred_check_branch
          %259 = sbr.rel (%p257) target = $region24
        $region23: #{chain_loss.1} parent=11 // pred_region
          %s261 = ssub.s32 32, 32
          %262 = vsyncadd [#allocation13], %s261
          %s264 = sshll.u32 [#allocation12], 4
          %s265 = int_to_ptr.vmem [resolvable:$true] %s264
          %267 = dma.hbm_to_vmem [thread:$0]  %s4, 32, %s265, [#allocation13]
        $region24: #{chain_loss.1} parent=11 // pred_fallthru
          _
        // Predicated region
        $region25: #{chain_loss.1} parent=11 // pred_check
          %p268 = pneg %p134
        $region26: #{chain_loss.1} parent=11 // pred_check_branch
          %270 = sbr.rel (%p268) target = $region28
        $region27: #{chain_loss.1} parent=11 // pred_region
          %s272 = ssub.s32 32, 32
          %273 = vsyncadd [#allocation13], %s272
          %s275 = sshll.u32 [#allocation14], 4
          %s276 = int_to_ptr.vmem [resolvable:$true] %s275
          %278 = dma.hbm_to_vmem [thread:$0]  %s5, 32, %s276, [#allocation13]
        $region28: #{chain_loss.1} parent=11 // pred_fallthru
          _
        // Predicated region
        $region29: #{chain_loss.1} parent=11 // pred_check
          %p279 = pneg %p155
        $region30: #{chain_loss.1} parent=11 // pred_check_branch
          %281 = sbr.rel (%p279) target = $region32
        $region31: #{chain_loss.1} parent=11 // pred_region
          %s283 = ssub.s32 2048, 2048
          %284 = vsyncadd [#allocation16], %s283
          %s285 = sshll.u32 [#allocation15], 4
          %s286 = int_to_ptr.vmem [resolvable:$true] %s285
          %291 = dma.hbm_to_vmem [thread:$0]  %s6, 2048, %s286, [#allocation16], 128, 128, 8
        $region32: #{chain_loss.1} parent=11 // pred_fallthru
          _
        // Predicated region
        $region33: #{chain_loss.1} parent=11 // pred_check
          %p292 = pneg %p176
        $region34: #{chain_loss.1} parent=11 // pred_check_branch
          %294 = sbr.rel (%p292) target = $region36
        $region35: #{chain_loss.1} parent=11 // pred_region
          %s296 = ssub.s32 16, 16
          %297 = vsyncadd [#allocation16], %s296
          %s299 = sshll.u32 [#allocation17], 4
          %s300 = int_to_ptr.vmem [resolvable:$true] %s299
          %302 = dma.hbm_to_vmem [thread:$0]  %s7, 16, %s300, [#allocation16]
        $region36: #{chain_loss.1} parent=11 // pred_fallthru
          _
        // Predicated region
        $region37: #{chain_loss.1} parent=11 // pred_check
          %p303 = pneg %p197
        $region38: #{chain_loss.1} parent=11 // pred_check_branch
          %305 = sbr.rel (%p303) target = $region40
        $region39: #{chain_loss.1} parent=11 // pred_region
          %s307 = ssub.s32 16, 16
          %308 = vsyncadd [#allocation19], %s307
          %s310 = sshll.u32 [#allocation18], 4
          %s311 = int_to_ptr.vmem [resolvable:$true] %s310
          %313 = dma.hbm_to_vmem [thread:$0]  %s8, 16, %s311, [#allocation19]
        $region40: #{chain_loss.1} parent=11 // pred_fallthru
          _
      $region12: #{chain_loss.1} parent=5 // pred_fallthru
        _
      %p314 = scmp.lt.s32.totalorder %s24, 2
      // Predicated region
      $region41: #{chain_loss.1} parent=5 // pred_check
        %p315 = pneg %p314
      $region42: #{chain_loss.1} parent=5 // pred_check_branch
        %317 = sbr.rel (%p315) target = $region44
      $region43: #{chain_loss.1} parent=5 // pred_region
        // Predicated region
        $region45: #{chain_loss.1} parent=43 // pred_check
          %p318 = pneg %p44
        $region46: #{chain_loss.1} parent=43 // pred_check_branch
          %320 = sbr.rel (%p318) target = $region48
        $region47: #{chain_loss.1} parent=43 // pred_region
          %s321 = sand.u32 %s34, 1
          %s322 = scalar_lea.sflag [#allocation7], %s321
          %s323 = sand.u32 %s34, 1
          %s324 = smul.addr %s323, 8
          %s325 = scalar_lea.vmem [#allocation6], %s324
          %s327 = ssub.s32 128, 128
          %328 = vsyncadd %s322, %s327
          %s329 = smul.addr %s24, 64
          %s330 = scalar_lea.hbm %s1, %s329
          %s331 = sshll.u32 %s325, 4
          %s332 = int_to_ptr.vmem [resolvable:$true] %s331
          %337 = dma.hbm_to_vmem [thread:$0]  %s330, 128, %s332, %s322, 128, 64, 4
        $region48: #{chain_loss.1} parent=43 // pred_fallthru
          _
      $region44: #{chain_loss.1} parent=5 // pred_fallthru
        _
      %p338 = scmp.le.s32.totalorder 1, %s24
      %p339 = scmp.lt.s32.totalorder %s24, 3
      %p340 = pnand %p338, %p339
      %p341 = pneg %p340
      // Predicated region
      $region49: #{chain_loss.1} parent=5 // pred_check
        _
      $region50: #{chain_loss.1} parent=5 // pred_check_branch
        %343 = sbr.rel (%p340) target = $region52
      $region51: #{chain_loss.1} parent=5 // pred_region
        %s344 = ssub.s32 %s24, 1
        %s345 = sand.u32 %s37, 1
        %s346 = scalar_lea.sflag [#allocation7], %s345
        %s347 = sand.u32 %s37, 1
        %s348 = smul.addr %s347, 8
        %s349 = scalar_lea.vmem [#allocation6], %s348
        // Predicated region
        $region53: #{chain_loss.1} parent=51 // pred_check
          %p350 = pneg %p50
        $region54: #{chain_loss.1} parent=51 // pred_check_branch
          %352 = sbr.rel (%p350) target = $region56
        $region55: #{chain_loss.1} parent=51 // pred_region
          %353 = dma.done %s346, 128
        $region56: #{chain_loss.1} parent=51 // pred_fallthru
          _
        // Predicated region
        $region57: #{chain_loss.1} parent=51 // pred_check
          %p354 = pneg %p71
        $region58: #{chain_loss.1} parent=51 // pred_check_branch
          %356 = sbr.rel (%p354) target = $region60
        $region59: #{chain_loss.1} parent=51 // pred_region
          %357 = dma.done [#allocation10], 32
        $region60: #{chain_loss.1} parent=51 // pred_fallthru
          _
        // Predicated region
        $region61: #{chain_loss.1} parent=51 // pred_check
          %p358 = pneg %p92
        $region62: #{chain_loss.1} parent=51 // pred_check_branch
          %360 = sbr.rel (%p358) target = $region64
        $region63: #{chain_loss.1} parent=51 // pred_region
          %361 = dma.done [#allocation10], 4096
        $region64: #{chain_loss.1} parent=51 // pred_fallthru
          _
        // Predicated region
        $region65: #{chain_loss.1} parent=51 // pred_check
          %p362 = pneg %p113
        $region66: #{chain_loss.1} parent=51 // pred_check_branch
          %364 = sbr.rel (%p362) target = $region68
        $region67: #{chain_loss.1} parent=51 // pred_region
          %365 = dma.done [#allocation13], 32
        $region68: #{chain_loss.1} parent=51 // pred_fallthru
          _
        // Predicated region
        $region69: #{chain_loss.1} parent=51 // pred_check
          %p366 = pneg %p134
        $region70: #{chain_loss.1} parent=51 // pred_check_branch
          %368 = sbr.rel (%p366) target = $region72
        $region71: #{chain_loss.1} parent=51 // pred_region
          %369 = dma.done [#allocation13], 32
        $region72: #{chain_loss.1} parent=51 // pred_fallthru
          _
        // Predicated region
        $region73: #{chain_loss.1} parent=51 // pred_check
          %p370 = pneg %p155
        $region74: #{chain_loss.1} parent=51 // pred_check_branch
          %372 = sbr.rel (%p370) target = $region76
        $region75: #{chain_loss.1} parent=51 // pred_region
          %373 = dma.done [#allocation16], 2048
        $region76: #{chain_loss.1} parent=51 // pred_fallthru
          _
        // Predicated region
        $region77: #{chain_loss.1} parent=51 // pred_check
          %p374 = pneg %p176
        $region78: #{chain_loss.1} parent=51 // pred_check_branch
          %376 = sbr.rel (%p374) target = $region80
        $region79: #{chain_loss.1} parent=51 // pred_region
          %377 = dma.done [#allocation16], 16
        $region80: #{chain_loss.1} parent=51 // pred_fallthru
          _
        // Predicated region
        $region81: #{chain_loss.1} parent=51 // pred_check
          %p378 = pneg %p197
        $region82: #{chain_loss.1} parent=51 // pred_check_branch
          %380 = sbr.rel (%p378) target = $region84
        $region83: #{chain_loss.1} parent=51 // pred_region
          %381 = dma.done [#allocation19], 16
        $region84: #{chain_loss.1} parent=51 // pred_fallthru
          _
        %s382 = sand.u32 %s37, 1
        %s383 = scalar_lea.sflag [#allocation7], %s382
        %s384 = sand.u32 %s37, 1
        %s385 = smul.addr %s384, 8
        %s386 = scalar_lea.vmem [#allocation6], %s385
        %p387 = pneg %p50
        %p388 = pneg %p47
        %p389 = pneg %p71
        %p390 = pneg %p68
        %p391 = pneg %p92
        %p392 = pneg %p89
        %p393 = pneg %p113
        %p394 = pneg %p110
        %p395 = pneg %p134
        %p396 = pneg %p131
        %p397 = pneg %p155
        %p398 = pneg %p152
        %p399 = pneg %p176
        %p400 = pneg %p173
        %p401 = pneg %p197
        %p402 = pneg %p194
        %p403 = pneg %p218
        %p404 = pneg %p215
        %s405 = smul.u32 %s29, 8
        %s406 = sld [smem:[#allocation5]]
        %p407 = scmp.eq.s32.totalorder %s29, 0
        // Predicated region
        $region85: #{chain_loss.1} parent=51 // pred_check
          %p408 = pneg %p407
        $region86: #{chain_loss.1} parent=51 // pred_check_branch
          %410 = sbr.rel (%p408) target = $region88
        $region87: #{chain_loss.1} parent=51 // pred_region
          %v411 = vld [vmem:[#allocation12] sm:$0x3]
          %412 = vst [vmem:[#allocation2] sm:$0x3] %v411
          %v413 = vld [vmem:[#allocation17] sm:$0x1]
          %v415 = vlaneseq
          %v416 = vshrl.u32 %v415, 7
          %v417 = vsub.s32 0, %v416
          %v418 = vrot.slane %v413, %v417
          %420 = vst [vmem:[#allocation3] sm:$0x3] %v418
        $region88: #{chain_loss.1} parent=51 // pred_fallthru
          _
        %p421 = scmp.lt.s32.totalorder %s405, %s406
        // Predicated region
        $region89: #{chain_loss.1} parent=51 // pred_check
          %p422 = pneg %p421
        $region90: #{chain_loss.1} parent=51 // pred_check_branch
          %424 = sbr.rel (%p422) target = $region92
        $region91: #{chain_loss.1} parent=51 // pred_region
          %v425 = vld [vmem:[#allocation9] sm:$0x3]
          %v426 = vld [vmem:[#allocation11] sm:$0xff]
          %v427 = vld [vmem:[#allocation11 + $0x8] sm:$0xff]
          %v428 = vld [vmem:[#allocation11 + $0x10] sm:$0xff]
          %v429 = vld [vmem:[#allocation11 + $0x18] sm:$0xff]
          %v430 = vld [vmem:[#allocation11 + $0x20] sm:$0xff]
          %v431 = vld [vmem:[#allocation11 + $0x28] sm:$0xff]
          %v432 = vld [vmem:[#allocation11 + $0x30] sm:$0xff]
          %v433 = vld [vmem:[#allocation11 + $0x38] sm:$0xff]
          %v434 = vld [vmem:[#allocation11 + $0x40] sm:$0xff]
          %v435 = vld [vmem:[#allocation11 + $0x48] sm:$0xff]
          %v436 = vld [vmem:[#allocation11 + $0x50] sm:$0xff]
          %v437 = vld [vmem:[#allocation11 + $0x58] sm:$0xff]
          %v438 = vld [vmem:[#allocation11 + $0x60] sm:$0xff]
          %v439 = vld [vmem:[#allocation11 + $0x68] sm:$0xff]
          %v440 = vld [vmem:[#allocation11 + $0x70] sm:$0xff]
          %v441 = vld [vmem:[#allocation11 + $0x78] sm:$0xff]
          %v442 = vld [vmem:[#allocation11 + $0x80] sm:$0xff]
          %v443 = vld [vmem:[#allocation11 + $0x88] sm:$0xff]
          %v444 = vld [vmem:[#allocation11 + $0x90] sm:$0xff]
          %v445 = vld [vmem:[#allocation11 + $0x98] sm:$0xff]
          %v446 = vld [vmem:[#allocation11 + $0xa0] sm:$0xff]
          %v447 = vld [vmem:[#allocation11 + $0xa8] sm:$0xff]
          %v448 = vld [vmem:[#allocation11 + $0xb0] sm:$0xff]
          %v449 = vld [vmem:[#allocation11 + $0xb8] sm:$0xff]
          %v450 = vld [vmem:[#allocation11 + $0xc0] sm:$0xff]
          %v451 = vld [vmem:[#allocation11 + $0xc8] sm:$0xff]
          %v452 = vld [vmem:[#allocation11 + $0xd0] sm:$0xff]
          %v453 = vld [vmem:[#allocation11 + $0xd8] sm:$0xff]
          %v454 = vld [vmem:[#allocation11 + $0xe0] sm:$0xff]
          %v455 = vld [vmem:[#allocation11 + $0xe8] sm:$0xff]
          %v456 = vld [vmem:[#allocation11 + $0xf0] sm:$0xff]
          %v457 = vld [vmem:[#allocation11 + $0xf8] sm:$0xff]
          %v458 = vld [vmem:[#allocation15] sm:$0xff]
          %v459 = vld [vmem:[#allocation15 + $0x8] sm:$0xff]
          %v460 = vld [vmem:[#allocation15 + $0x10] sm:$0xff]
          %v461 = vld [vmem:[#allocation15 + $0x18] sm:$0xff]
          %v462 = vld [vmem:[#allocation15 + $0x20] sm:$0xff]
          %v463 = vld [vmem:[#allocation15 + $0x28] sm:$0xff]
          %v464 = vld [vmem:[#allocation15 + $0x30] sm:$0xff]
          %v465 = vld [vmem:[#allocation15 + $0x38] sm:$0xff]
          %v466 = vld [vmem:[#allocation15 + $0x40] sm:$0xff]
          %v467 = vld [vmem:[#allocation15 + $0x48] sm:$0xff]
          %v468 = vld [vmem:[#allocation15 + $0x50] sm:$0xff]
          %v469 = vld [vmem:[#allocation15 + $0x58] sm:$0xff]
          %v470 = vld [vmem:[#allocation15 + $0x60] sm:$0xff]
          %v471 = vld [vmem:[#allocation15 + $0x68] sm:$0xff]
          %v472 = vld [vmem:[#allocation15 + $0x70] sm:$0xff]
          %v473 = vld [vmem:[#allocation15 + $0x78] sm:$0xff]
          %v474 = vld [vmem:[#allocation2] sm:$0x3]
          %v475 = vld [vmem:[#allocation3] sm:$0x3]
          %v476 = vld [vmem:[%s349] sm:$0x1]
          %v477 = vld [vmem:[%s349 + $0x4] sm:$0x1]
          %v478 = vunpack.c.l.bf16 %v476
          %v479 = vunpack.c.l.bf16 %v477
          %v480 = vmax.f32 %v478, -30.0
          %v481 = vmax.f32 %v479, -30.0
          %v482 = vmin.f32 %v480, 30.0
          %v483 = vmin.f32 %v481, 30.0
          %v484 = vstv %s405
          %vm485 = vcmp.lt.s32.totalorder %v484, %v425
          %vm486 = vcmask 1041408
          %v487 = vsel %vm486, %v474, -inf
          %488 = vmax.xlane.f32.xlu0 %v487
          %v489 = vpop.xlane.xlu0 %488
          %v490 = vmax.f32 %v489, -1e+30
          %v491 = vsub.f32 %v474, %v490
          %v492 = vmul.f32 %v491, 1.442695
          %v493 = vpow.pop %v492
          %v496 = vunpack.c.l.s4 1966171168
          %v497 = vunpack.c.0.s8 %v496
          %v498 = vlaneseq
          %v499 = vshrl.u32 %v498, 7
          %v500 = vsub.s32 %v497, %v499
          %v501 = vrot.slane %v493, %v500
          %v502 = vcombine.high %v501, %v501
          %v504 = vunpack.c.l.s4 1966171168
          %v505 = vunpack.c.0.s8 %v504
          %v506 = vlaneseq
          %v507 = vshrl.u32 %v506, 7
          %v508 = vsub.s32 %v505, %v507
          %v509 = vrot.slane %v501, %v508
          %v511 = vunpack.c.l.s4 1966171168
          %v512 = vunpack.c.0.s8 %v511
          %v513 = vlaneseq
          %v514 = vshrl.u32 %v513, 7
          %v515 = vsub.s32 %v512, %v514
          %v516 = vrot.slane %v502, %v515
          %519 = vmatprep.subr.mxu0 0.0
          %520 = vmatpush1.msra.mxu0 %v426
          %521 = vmatprep.subr.mxu0 0.0
          %522 = vmatpush1.msra.mxu0 %v427
          %523 = vmatprep.subr.mxu0 0.0
          %524 = vmatpush1.msra.mxu0 %v428
          %525 = vmatprep.subr.mxu0 0.0
          %526 = vmatpush1.msra.mxu0 %v429
          %527 = vmatprep.subr.mxu0 0.0
          %528 = vmatpush1.msra.mxu0 %v430
          %529 = vmatprep.subr.mxu0 0.0
          %530 = vmatpush1.msra.mxu0 %v431
          %531 = vmatprep.subr.mxu0 0.0
          %532 = vmatpush1.msra.mxu0 %v432
          %533 = vmatprep.subr.mxu0 0.0
          %534 = vmatpush1.msra.mxu0 %v433
          %535 = vmatprep.subr.mxu0 0.0
          %536 = vmatpush1.msra.mxu0 %v434
          %537 = vmatprep.subr.mxu0 0.0
          %538 = vmatpush1.msra.mxu0 %v435
          %539 = vmatprep.subr.mxu0 0.0
          %540 = vmatpush1.msra.mxu0 %v436
          %541 = vmatprep.subr.mxu0 0.0
          %542 = vmatpush1.msra.mxu0 %v437
          %543 = vmatprep.subr.mxu0 0.0
          %544 = vmatpush1.msra.mxu0 %v438
          %545 = vmatprep.subr.mxu0 0.0
          %546 = vmatpush1.msra.mxu0 %v439
          %547 = vmatprep.subr.mxu0 0.0
          %548 = vmatpush1.msra.mxu0 %v440
          %549 = vmatprep.subr.mxu0 0.0
          %550 = vmatpush1.msra.mxu0 %v441
          %551 = vmatprep.subr.mxu0 0.0
          %552 = vmatpush1.msra.mxu0 0.0
          %553 = vmatprep.subr.mxu0 0.0
          %554 = vmatpush1.msra.mxu0 0.0
          %555 = vmatprep.subr.mxu0 0.0
          %556 = vmatpush1.msra.mxu0 0.0
          %557 = vmatprep.subr.mxu0 0.0
          %558 = vmatpush1.msra.mxu0 0.0
          %559 = vmatprep.subr.mxu0 0.0
          %560 = vmatpush1.msra.mxu0 0.0
          %561 = vmatprep.subr.mxu0 0.0
          %562 = vmatpush1.msra.mxu0 0.0
          %563 = vmatprep.subr.mxu0 0.0
          %564 = vmatpush1.msra.mxu0 0.0
          %565 = vmatprep.subr.mxu0 0.0
          %566 = vmatpush1.msra.mxu0 0.0
          %567 = vmatprep.subr.mxu0 0.0
          %568 = vmatpush1.msra.mxu0 0.0
          %569 = vmatprep.subr.mxu0 0.0
          %570 = vmatpush1.msra.mxu0 0.0
          %571 = vmatprep.subr.mxu0 0.0
          %572 = vmatpush1.msra.mxu0 0.0
          %573 = vmatprep.subr.mxu0 0.0
          %574 = vmatpush1.msra.mxu0 0.0
          %575 = vmatprep.subr.mxu0 0.0
          %576 = vmatpush1.msra.mxu0 0.0
          %577 = vmatprep.subr.mxu0 0.0
          %578 = vmatpush1.msra.mxu0 0.0
          %579 = vmatprep.subr.mxu0 0.0
          %580 = vmatpush1.msra.mxu0 0.0
          %581 = vmatprep.subr.mxu0 0.0
          %582 = vmatpush1.msra.mxu0 0.0
          %583 = vmatprep.mubr.f32.mxu0 0.0
          %584 = vmatmul.mubr.f32.gmra.mrb[0].mxu0 %v509
          %v585 = vpop.f32.mrb[0].mxu0
          %v586 = vadd.f32 0.0, %v585
          %v587 = vpop.f32.mrb[0].mxu0
          %588 = vdwg.mxu0
          %589 = vmatprep.subr.mxu0 0.0
          %590 = vmatpush1.msra.mxu0 %v442
          %591 = vmatprep.subr.mxu0 0.0
          %592 = vmatpush1.msra.mxu0 %v443
          %593 = vmatprep.subr.mxu0 0.0
          %594 = vmatpush1.msra.mxu0 %v444
          %595 = vmatprep.subr.mxu0 0.0
          %596 = vmatpush1.msra.mxu0 %v445
          %597 = vmatprep.subr.mxu0 0.0
          %598 = vmatpush1.msra.mxu0 %v446
          %599 = vmatprep.subr.mxu0 0.0
          %600 = vmatpush1.msra.mxu0 %v447
          %601 = vmatprep.subr.mxu0 0.0
          %602 = vmatpush1.msra.mxu0 %v448
          %603 = vmatprep.subr.mxu0 0.0
          %604 = vmatpush1.msra.mxu0 %v449
          %605 = vmatprep.subr.mxu0 0.0
          %606 = vmatpush1.msra.mxu0 %v450
          %607 = vmatprep.subr.mxu0 0.0
          %608 = vmatpush1.msra.mxu0 %v451
          %609 = vmatprep.subr.mxu0 0.0
          %610 = vmatpush1.msra.mxu0 %v452
          %611 = vmatprep.subr.mxu0 0.0
          %612 = vmatpush1.msra.mxu0 %v453
          %613 = vmatprep.subr.mxu0 0.0
          %614 = vmatpush1.msra.mxu0 %v454
          %615 = vmatprep.subr.mxu0 0.0
          %616 = vmatpush1.msra.mxu0 %v455
          %617 = vmatprep.subr.mxu0 0.0
          %618 = vmatpush1.msra.mxu0 %v456
          %619 = vmatprep.subr.mxu0 0.0
          %620 = vmatpush1.msra.mxu0 %v457
          %621 = vmatprep.subr.mxu0 0.0
          %622 = vmatpush1.msra.mxu0 0.0
          %623 = vmatprep.subr.mxu0 0.0
          %624 = vmatpush1.msra.mxu0 0.0
          %625 = vmatprep.subr.mxu0 0.0
          %626 = vmatpush1.msra.mxu0 0.0
          %627 = vmatprep.subr.mxu0 0.0
          %628 = vmatpush1.msra.mxu0 0.0
          %629 = vmatprep.subr.mxu0 0.0
          %630 = vmatpush1.msra.mxu0 0.0
          %631 = vmatprep.subr.mxu0 0.0
          %632 = vmatpush1.msra.mxu0 0.0
          %633 = vmatprep.subr.mxu0 0.0
          %634 = vmatpush1.msra.mxu0 0.0
          %635 = vmatprep.subr.mxu0 0.0
          %636 = vmatpush1.msra.mxu0 0.0
          %637 = vmatprep.subr.mxu0 0.0
          %638 = vmatpush1.msra.mxu0 0.0
          %639 = vmatprep.subr.mxu0 0.0
          %640 = vmatpush1.msra.mxu0 0.0
          %641 = vmatprep.subr.mxu0 0.0
          %642 = vmatpush1.msra.mxu0 0.0
          %643 = vmatprep.subr.mxu0 0.0
          %644 = vmatpush1.msra.mxu0 0.0
          %645 = vmatprep.subr.mxu0 0.0
          %646 = vmatpush1.msra.mxu0 0.0
          %647 = vmatprep.subr.mxu0 0.0
          %648 = vmatpush1.msra.mxu0 0.0
          %649 = vmatprep.subr.mxu0 0.0
          %650 = vmatpush1.msra.mxu0 0.0
          %651 = vmatprep.subr.mxu0 0.0
          %652 = vmatpush1.msra.mxu0 0.0
          %653 = vmatprep.mubr.f32.mxu0 0.0
          %654 = vmatmul.mubr.f32.gmra.mrb[0].mxu0 %v516
          %v655 = vpop.f32.mrb[0].mxu0
          %v656 = vadd.f32 0.0, %v655
          %v657 = vpop.f32.mrb[0].mxu0
          %658 = vdwg.mxu0
          %v659 = vmax.f32 %v586, 1e-30
          %v660 = vmax.f32 %v656, 1e-30
          %v661 = vlog2.pop %v659
          %v662 = vmul.f32 %v661, 0.6931472
          %v663 = vlog2.pop %v660
          %v664 = vmul.f32 %v663, 0.6931472
          %v667 = vrot.slane %v664, 7
          %vm668 = vcmask 1041409
          %v669 = vsel %vm668, %v667, %v662
          %v671 = vadd.f32 %v490, %v669
          %v674 = vrot.slane %v483, 7
          %v675 = vsel %vm668, %v674, %v482
          %v677 = vadd.f32 %v671, %v675
          %v678 = vsel %vm485, 1, 0
          %679 = vset.pattern.permute.xlu0 0
          %680 = vperm.xlu0 %679, %v678
          %v681 = vpop.permute.xlu0 %680
          %vm682 = vcmp.eq.s32.totalorder %v681, 1
          %v683 = vsel %vm682, %v677, %v474
          %v684 = vsel %vm486, %v475, -inf
          %685 = vmax.xlane.f32.xlu0 %v684
          %v686 = vpop.xlane.xlu0 %685
          %v687 = vmax.f32 %v686, -1e+30
          %v688 = vsub.f32 %v475, %v687
          %v689 = vmul.f32 %v688, 1.442695
          %v690 = vpow.pop %v689
          %691 = vmatprep.subr.mxu0 0.0
          %692 = vmatpush1.msra.mxu0 %v458
          %693 = vmatprep.subr.mxu0 0.0
          %694 = vmatpush1.msra.mxu0 %v459
          %695 = vmatprep.subr.mxu0 0.0
          %696 = vmatpush1.msra.mxu0 %v460
          %697 = vmatprep.subr.mxu0 0.0
          %698 = vmatpush1.msra.mxu0 %v461
          %699 = vmatprep.subr.mxu0 0.0
          %700 = vmatpush1.msra.mxu0 %v462
          %701 = vmatprep.subr.mxu0 0.0
          %702 = vmatpush1.msra.mxu0 %v463
          %703 = vmatprep.subr.mxu0 0.0
          %704 = vmatpush1.msra.mxu0 %v464
          %705 = vmatprep.subr.mxu0 0.0
          %706 = vmatpush1.msra.mxu0 %v465
          %707 = vmatprep.subr.mxu0 0.0
          %708 = vmatpush1.msra.mxu0 %v466
          %709 = vmatprep.subr.mxu0 0.0
          %710 = vmatpush1.msra.mxu0 %v467
          %711 = vmatprep.subr.mxu0 0.0
          %712 = vmatpush1.msra.mxu0 %v468
          %713 = vmatprep.subr.mxu0 0.0
          %714 = vmatpush1.msra.mxu0 %v469
          %715 = vmatprep.subr.mxu0 0.0
          %716 = vmatpush1.msra.mxu0 %v470
          %717 = vmatprep.subr.mxu0 0.0
          %718 = vmatpush1.msra.mxu0 %v471
          %719 = vmatprep.subr.mxu0 0.0
          %720 = vmatpush1.msra.mxu0 %v472
          %721 = vmatprep.subr.mxu0 0.0
          %722 = vmatpush1.msra.mxu0 %v473
          %723 = vmatprep.subr.mxu0 0.0
          %724 = vmatpush1.msra.mxu0 0.0
          %725 = vmatprep.subr.mxu0 0.0
          %726 = vmatpush1.msra.mxu0 0.0
          %727 = vmatprep.subr.mxu0 0.0
          %728 = vmatpush1.msra.mxu0 0.0
          %729 = vmatprep.subr.mxu0 0.0
          %730 = vmatpush1.msra.mxu0 0.0
          %731 = vmatprep.subr.mxu0 0.0
          %732 = vmatpush1.msra.mxu0 0.0
          %733 = vmatprep.subr.mxu0 0.0
          %734 = vmatpush1.msra.mxu0 0.0
          %735 = vmatprep.subr.mxu0 0.0
          %736 = vmatpush1.msra.mxu0 0.0
          %737 = vmatprep.subr.mxu0 0.0
          %738 = vmatpush1.msra.mxu0 0.0
          %739 = vmatprep.subr.mxu0 0.0
          %740 = vmatpush1.msra.mxu0 0.0
          %741 = vmatprep.subr.mxu0 0.0
          %742 = vmatpush1.msra.mxu0 0.0
          %743 = vmatprep.subr.mxu0 0.0
          %744 = vmatpush1.msra.mxu0 0.0
          %745 = vmatprep.subr.mxu0 0.0
          %746 = vmatpush1.msra.mxu0 0.0
          %747 = vmatprep.subr.mxu0 0.0
          %748 = vmatpush1.msra.mxu0 0.0
          %749 = vmatprep.subr.mxu0 0.0
          %750 = vmatpush1.msra.mxu0 0.0
          %751 = vmatprep.subr.mxu0 0.0
          %752 = vmatpush1.msra.mxu0 0.0
          %753 = vmatprep.subr.mxu0 0.0
          %754 = vmatpush1.msra.mxu0 0.0
          %755 = vmatprep.mubr.f32.mxu0 0.0
          %756 = vmatmul.mubr.f32.gmra.mrb[0].mxu0 %v690
          %v757 = vpop.f32.mrb[0].mxu0
          %v758 = vadd.f32 0.0, %v757
          %v759 = vpop.f32.mrb[0].mxu0
          %760 = vdwg.mxu0
          %v761 = vmax.f32 %v758, 1e-30
          %v762 = vlog2.pop %v761
          %v763 = vmul.f32 %v762, 0.6931472
          %v764 = vadd.f32 %v687, %v763
          %v765 = vadd.f32 %v764, %v675
          %v766 = vsel %vm682, %v765, %v475
          %s767 = sadd.s32 %s405, 1
          %v768 = vld [vmem:[%s349] sm:$0x1]
          %v769 = vld [vmem:[%s349 + $0x4] sm:$0x1]
          %v770 = vunpack.c.l.bf16 %v768
          %v771 = vunpack.c.l.bf16 %v769
          %v772 = vmax.f32 %v770, -30.0
          %v773 = vmax.f32 %v771, -30.0
          %v774 = vmin.f32 %v772, 30.0
          %v775 = vmin.f32 %v773, 30.0
          %v776 = vstv %s767
          %vm777 = vcmp.lt.s32.totalorder %v776, %v425
          %v778 = vsel %vm486, %v683, -inf
          %779 = vmax.xlane.f32.xlu0 %v778
          %v780 = vpop.xlane.xlu0 %779
          %v781 = vmax.f32 %v780, -1e+30
          %v782 = vsub.f32 %v683, %v781
          %v783 = vmul.f32 %v782, 1.442695
          %v784 = vpow.pop %v783
          %v787 = vunpack.c.l.s4 1966171168
          %v788 = vunpack.c.0.s8 %v787
          %v789 = vlaneseq
          %v790 = vshrl.u32 %v789, 7
          %v791 = vsub.s32 %v788, %v790
          %v792 = vrot.slane %v784, %v791
          %v793 = vcombine.high %v792, %v792
          %v795 = vunpack.c.l.s4 1966171168
          %v796 = vunpack.c.0.s8 %v795
          %v797 = vlaneseq
          %v798 = vshrl.u32 %v797, 7
          %v799 = vsub.s32 %v796, %v798
          %v800 = vrot.slane %v792, %v799
          %v802 = vunpack.c.l.s4 1966171168
          %v803 = vunpack.c.0.s8 %v802
          %v804 = vlaneseq
          %v805 = vshrl.u32 %v804, 7
          %v806 = vsub.s32 %v803, %v805
          %v807 = vrot.slane %v793, %v806
          %810 = vmatprep.subr.mxu0 0.0
          %811 = vmatpush1.msra.mxu0 %v426
          %812 = vmatprep.subr.mxu0 0.0
          %813 = vmatpush1.msra.mxu0 %v427
          %814 = vmatprep.subr.mxu0 0.0
          %815 = vmatpush1.msra.mxu0 %v428
          %816 = vmatprep.subr.mxu0 0.0
          %817 = vmatpush1.msra.mxu0 %v429
          %818 = vmatprep.subr.mxu0 0.0
          %819 = vmatpush1.msra.mxu0 %v430
          %820 = vmatprep.subr.mxu0 0.0
          %821 = vmatpush1.msra.mxu0 %v431
          %822 = vmatprep.subr.mxu0 0.0
          %823 = vmatpush1.msra.mxu0 %v432
          %824 = vmatprep.subr.mxu0 0.0
          %825 = vmatpush1.msra.mxu0 %v433
          %826 = vmatprep.subr.mxu0 0.0
          %827 = vmatpush1.msra.mxu0 %v434
          %828 = vmatprep.subr.mxu0 0.0
          %829 = vmatpush1.msra.mxu0 %v435
          %830 = vmatprep.subr.mxu0 0.0
          %831 = vmatpush1.msra.mxu0 %v436
          %832 = vmatprep.subr.mxu0 0.0
          %833 = vmatpush1.msra.mxu0 %v437
          %834 = vmatprep.subr.mxu0 0.0
          %835 = vmatpush1.msra.mxu0 %v438
          %836 = vmatprep.subr.mxu0 0.0
          %837 = vmatpush1.msra.mxu0 %v439
          %838 = vmatprep.subr.mxu0 0.0
          %839 = vmatpush1.msra.mxu0 %v440
          %840 = vmatprep.subr.mxu0 0.0
          %841 = vmatpush1.msra.mxu0 %v441
          %842 = vmatprep.subr.mxu0 0.0
          %843 = vmatpush1.msra.mxu0 0.0
          %844 = vmatprep.subr.mxu0 0.0
          %845 = vmatpush1.msra.mxu0 0.0
          %846 = vmatprep.subr.mxu0 0.0
          %847 = vmatpush1.msra.mxu0 0.0
          %848 = vmatprep.subr.mxu0 0.0
          %849 = vmatpush1.msra.mxu0 0.0
          %850 = vmatprep.subr.mxu0 0.0
          %851 = vmatpush1.msra.mxu0 0.0
          %852 = vmatprep.subr.mxu0 0.0
          %853 = vmatpush1.msra.mxu0 0.0
          %854 = vmatprep.subr.mxu0 0.0
          %855 = vmatpush1.msra.mxu0 0.0
          %856 = vmatprep.subr.mxu0 0.0
          %857 = vmatpush1.msra.mxu0 0.0
          %858 = vmatprep.subr.mxu0 0.0
          %859 = vmatpush1.msra.mxu0 0.0
          %860 = vmatprep.subr.mxu0 0.0
          %861 = vmatpush1.msra.mxu0 0.0
          %862 = vmatprep.subr.mxu0 0.0
          %863 = vmatpush1.msra.mxu0 0.0
          %864 = vmatprep.subr.mxu0 0.0
          %865 = vmatpush1.msra.mxu0 0.0
          %866 = vmatprep.subr.mxu0 0.0
          %867 = vmatpush1.msra.mxu0 0.0
          %868 = vmatprep.subr.mxu0 0.0
          %869 = vmatpush1.msra.mxu0 0.0
          %870 = vmatprep.subr.mxu0 0.0
          %871 = vmatpush1.msra.mxu0 0.0
          %872 = vmatprep.subr.mxu0 0.0
          %873 = vmatpush1.msra.mxu0 0.0
          %874 = vmatprep.mubr.f32.mxu0 0.0
          %875 = vmatmul.mubr.f32.gmra.mrb[0].mxu0 %v800
          %v876 = vpop.f32.mrb[0].mxu0
          %v877 = vadd.f32 0.0, %v876
          %v878 = vpop.f32.mrb[0].mxu0
          %879 = vdwg.mxu0
          %880 = vmatprep.subr.mxu0 0.0
          %881 = vmatpush1.msra.mxu0 %v442
          %882 = vmatprep.subr.mxu0 0.0
          %883 = vmatpush1.msra.mxu0 %v443
          %884 = vmatprep.subr.mxu0 0.0
          %885 = vmatpush1.msra.mxu0 %v444
          %886 = vmatprep.subr.mxu0 0.0
          %887 = vmatpush1.msra.mxu0 %v445
          %888 = vmatprep.subr.mxu0 0.0
          %889 = vmatpush1.msra.mxu0 %v446
          %890 = vmatprep.subr.mxu0 0.0
          %891 = vmatpush1.msra.mxu0 %v447
          %892 = vmatprep.subr.mxu0 0.0
          %893 = vmatpush1.msra.mxu0 %v448
          %894 = vmatprep.subr.mxu0 0.0
          %895 = vmatpush1.msra.mxu0 %v449
          %896 = vmatprep.subr.mxu0 0.0
          %897 = vmatpush1.msra.mxu0 %v450
          %898 = vmatprep.subr.mxu0 0.0
          %899 = vmatpush1.msra.mxu0 %v451
          %900 = vmatprep.subr.mxu0 0.0
          %901 = vmatpush1.msra.mxu0 %v452
          %902 = vmatprep.subr.mxu0 0.0
          %903 = vmatpush1.msra.mxu0 %v453
          %904 = vmatprep.subr.mxu0 0.0
          %905 = vmatpush1.msra.mxu0 %v454
          %906 = vmatprep.subr.mxu0 0.0
          %907 = vmatpush1.msra.mxu0 %v455
          %908 = vmatprep.subr.mxu0 0.0
          %909 = vmatpush1.msra.mxu0 %v456
          %910 = vmatprep.subr.mxu0 0.0
          %911 = vmatpush1.msra.mxu0 %v457
          %912 = vmatprep.subr.mxu0 0.0
          %913 = vmatpush1.msra.mxu0 0.0
          %914 = vmatprep.subr.mxu0 0.0
          %915 = vmatpush1.msra.mxu0 0.0
          %916 = vmatprep.subr.mxu0 0.0
          %917 = vmatpush1.msra.mxu0 0.0
          %918 = vmatprep.subr.mxu0 0.0
          %919 = vmatpush1.msra.mxu0 0.0
          %920 = vmatprep.subr.mxu0 0.0
          %921 = vmatpush1.msra.mxu0 0.0
          %922 = vmatprep.subr.mxu0 0.0
          %923 = vmatpush1.msra.mxu0 0.0
          %924 = vmatprep.subr.mxu0 0.0
          %925 = vmatpush1.msra.mxu0 0.0
          %926 = vmatprep.subr.mxu0 0.0
          %927 = vmatpush1.msra.mxu0 0.0
          %928 = vmatprep.subr.mxu0 0.0
          %929 = vmatpush1.msra.mxu0 0.0
          %930 = vmatprep.subr.mxu0 0.0
          %931 = vmatpush1.msra.mxu0 0.0
          %932 = vmatprep.subr.mxu0 0.0
          %933 = vmatpush1.msra.mxu0 0.0
          %934 = vmatprep.subr.mxu0 0.0
          %935 = vmatpush1.msra.mxu0 0.0
          %936 = vmatprep.subr.mxu0 0.0
          %937 = vmatpush1.msra.mxu0 0.0
          %938 = vmatprep.subr.mxu0 0.0
          %939 = vmatpush1.msra.mxu0 0.0
          %940 = vmatprep.subr.mxu0 0.0
          %941 = vmatpush1.msra.mxu0 0.0
          %942 = vmatprep.subr.mxu0 0.0
          %943 = vmatpush1.msra.mxu0 0.0
          %944 = vmatprep.mubr.f32.mxu0 0.0
          %945 = vmatmul.mubr.f32.gmra.mrb[0].mxu0 %v807
          %v946 = vpop.f32.mrb[0].mxu0
          %v947 = vadd.f32 0.0, %v946
          %v948 = vpop.f32.mrb[0].mxu0
          %949 = vdwg.mxu0
          %v950 = vmax.f32 %v877, 1e-30
          %v951 = vmax.f32 %v947, 1e-30
          %v952 = vlog2.pop %v950
          %v953 = vmul.f32 %v952, 0.6931472
          %v954 = vlog2.pop %v951
          %v955 = vmul.f32 %v954, 0.6931472
          %v958 = vrot.slane %v955, 7
          %v959 = vsel %vm668, %v958, %v953
          %v961 = vadd.f32 %v781, %v959
          %v964 = vrot.slane %v774, 1
          %v965 = vsel %vm668, %v775, %v964
          %v967 = vadd.f32 %v961, %v965
          %v968 = vsel %vm777, 1, 0
          %969 = vset.pattern.permute.xlu0 0
          %970 = vperm.xlu0 %969, %v968
          %v971 = vpop.permute.xlu0 %970
          %vm972 = vcmp.eq.s32.totalorder %v971, 1
          %v973 = vsel %vm972, %v967, %v683
          %v974 = vsel %vm486, %v766, -inf
          %975 = vmax.xlane.f32.xlu0 %v974
          %v976 = vpop.xlane.xlu0 %975
          %v977 = vmax.f32 %v976, -1e+30
          %v978 = vsub.f32 %v766, %v977
          %v979 = vmul.f32 %v978, 1.442695
          %v980 = vpow.pop %v979
          %981 = vmatprep.subr.mxu0 0.0
          %982 = vmatpush1.msra.mxu0 %v458
          %983 = vmatprep.subr.mxu0 0.0
          %984 = vmatpush1.msra.mxu0 %v459
          %985 = vmatprep.subr.mxu0 0.0
          %986 = vmatpush1.msra.mxu0 %v460
          %987 = vmatprep.subr.mxu0 0.0
          %988 = vmatpush1.msra.mxu0 %v461
          %989 = vmatprep.subr.mxu0 0.0
          %990 = vmatpush1.msra.mxu0 %v462
          %991 = vmatprep.subr.mxu0 0.0
          %992 = vmatpush1.msra.mxu0 %v463
          %993 = vmatprep.subr.mxu0 0.0
          %994 = vmatpush1.msra.mxu0 %v464
          %995 = vmatprep.subr.mxu0 0.0
          %996 = vmatpush1.msra.mxu0 %v465
          %997 = vmatprep.subr.mxu0 0.0
          %998 = vmatpush1.msra.mxu0 %v466
          %999 = vmatprep.subr.mxu0 0.0
          %1000 = vmatpush1.msra.mxu0 %v467
          %1001 = vmatprep.subr.mxu0 0.0
          %1002 = vmatpush1.msra.mxu0 %v468
          %1003 = vmatprep.subr.mxu0 0.0
          %1004 = vmatpush1.msra.mxu0 %v469
          %1005 = vmatprep.subr.mxu0 0.0
          %1006 = vmatpush1.msra.mxu0 %v470
          %1007 = vmatprep.subr.mxu0 0.0
          %1008 = vmatpush1.msra.mxu0 %v471
          %1009 = vmatprep.subr.mxu0 0.0
          %1010 = vmatpush1.msra.mxu0 %v472
          %1011 = vmatprep.subr.mxu0 0.0
          %1012 = vmatpush1.msra.mxu0 %v473
          %1013 = vmatprep.subr.mxu0 0.0
          %1014 = vmatpush1.msra.mxu0 0.0
          %1015 = vmatprep.subr.mxu0 0.0
          %1016 = vmatpush1.msra.mxu0 0.0
          %1017 = vmatprep.subr.mxu0 0.0
          %1018 = vmatpush1.msra.mxu0 0.0
          %1019 = vmatprep.subr.mxu0 0.0
          %1020 = vmatpush1.msra.mxu0 0.0
          %1021 = vmatprep.subr.mxu0 0.0
          %1022 = vmatpush1.msra.mxu0 0.0
          %1023 = vmatprep.subr.mxu0 0.0
          %1024 = vmatpush1.msra.mxu0 0.0
          %1025 = vmatprep.subr.mxu0 0.0
          %1026 = vmatpush1.msra.mxu0 0.0
          %1027 = vmatprep.subr.mxu0 0.0
          %1028 = vmatpush1.msra.mxu0 0.0
          %1029 = vmatprep.subr.mxu0 0.0
          %1030 = vmatpush1.msra.mxu0 0.0
          %1031 = vmatprep.subr.mxu0 0.0
          %1032 = vmatpush1.msra.mxu0 0.0
          %1033 = vmatprep.subr.mxu0 0.0
          %1034 = vmatpush1.msra.mxu0 0.0
          %1035 = vmatprep.subr.mxu0 0.0
          %1036 = vmatpush1.msra.mxu0 0.0
          %1037 = vmatprep.subr.mxu0 0.0
          %1038 = vmatpush1.msra.mxu0 0.0
          %1039 = vmatprep.subr.mxu0 0.0
          %1040 = vmatpush1.msra.mxu0 0.0
          %1041 = vmatprep.subr.mxu0 0.0
          %1042 = vmatpush1.msra.mxu0 0.0
          %1043 = vmatprep.subr.mxu0 0.0
          %1044 = vmatpush1.msra.mxu0 0.0
          %1045 = vmatprep.mubr.f32.mxu0 0.0
          %1046 = vmatmul.mubr.f32.gmra.mrb[0].mxu0 %v980
          %v1047 = vpop.f32.mrb[0].mxu0
          %v1048 = vadd.f32 0.0, %v1047
          %v1049 = vpop.f32.mrb[0].mxu0
          %1050 = vdwg.mxu0
          %v1051 = vmax.f32 %v1048, 1e-30
          %v1052 = vlog2.pop %v1051
          %v1053 = vmul.f32 %v1052, 0.6931472
          %v1054 = vadd.f32 %v977, %v1053
          %v1055 = vadd.f32 %v1054, %v965
          %v1056 = vsel %vm972, %v1055, %v766
          %s1057 = sadd.s32 %s405, 2
          %v1058 = vld [vmem:[%s349] sm:$0x2]
          %v1059 = vld [vmem:[%s349 + $0x4] sm:$0x2]
          %v1060 = vunpack.c.l.bf16 %v1058
          %v1061 = vunpack.c.l.bf16 %v1059
          %v1062 = vmax.f32 %v1060, -30.0
          %v1063 = vmax.f32 %v1061, -30.0
          %v1064 = vmin.f32 %v1062, 30.0
          %v1065 = vmin.f32 %v1063, 30.0
          %v1066 = vstv %s1057
          %vm1067 = vcmp.lt.s32.totalorder %v1066, %v425
          %v1068 = vsel %vm486, %v973, -inf
          %1069 = vmax.xlane.f32.xlu0 %v1068
          %v1070 = vpop.xlane.xlu0 %1069
          %v1071 = vmax.f32 %v1070, -1e+30
          %v1072 = vsub.f32 %v973, %v1071
          %v1073 = vmul.f32 %v1072, 1.442695
          %v1074 = vpow.pop %v1073
          %v1077 = vunpack.c.l.s4 1966171168
          %v1078 = vunpack.c.0.s8 %v1077
          %v1079 = vlaneseq
          %v1080 = vshrl.u32 %v1079, 7
          %v1081 = vsub.s32 %v1078, %v1080
          %v1082 = vrot.slane %v1074, %v1081
          %v1083 = vcombine.high %v1082, %v1082
          %v1085 = vunpack.c.l.s4 1966171168
          %v1086 = vunpack.c.0.s8 %v1085
          %v1087 = vlaneseq
          %v1088 = vshrl.u32 %v1087, 7
          %v1089 = vsub.s32 %v1086, %v1088
          %v1090 = vrot.slane %v1082, %v1089
          %v1092 = vunpack.c.l.s4 1966171168
          %v1093 = vunpack.c.0.s8 %v1092
          %v1094 = vlaneseq
          %v1095 = vshrl.u32 %v1094, 7
          %v1096 = vsub.s32 %v1093, %v1095
          %v1097 = vrot.slane %v1083, %v1096
          %1100 = vmatprep.subr.mxu0 0.0
          %1101 = vmatpush1.msra.mxu0 %v426
          %1102 = vmatprep.subr.mxu0 0.0
          %1103 = vmatpush1.msra.mxu0 %v427
          %1104 = vmatprep.subr.mxu0 0.0
          %1105 = vmatpush1.msra.mxu0 %v428
          %1106 = vmatprep.subr.mxu0 0.0
          %1107 = vmatpush1.msra.mxu0 %v429
          %1108 = vmatprep.subr.mxu0 0.0
          %1109 = vmatpush1.msra.mxu0 %v430
          %1110 = vmatprep.subr.mxu0 0.0
          %1111 = vmatpush1.msra.mxu0 %v431
          %1112 = vmatprep.subr.mxu0 0.0
          %1113 = vmatpush1.msra.mxu0 %v432
          %1114 = vmatprep.subr.mxu0 0.0
          %1115 = vmatpush1.msra.mxu0 %v433
          %1116 = vmatprep.subr.mxu0 0.0
          %1117 = vmatpush1.msra.mxu0 %v434
          %1118 = vmatprep.subr.mxu0 0.0
          %1119 = vmatpush1.msra.mxu0 %v435
          %1120 = vmatprep.subr.mxu0 0.0
          %1121 = vmatpush1.msra.mxu0 %v436
          %1122 = vmatprep.subr.mxu0 0.0
          %1123 = vmatpush1.msra.mxu0 %v437
          %1124 = vmatprep.subr.mxu0 0.0
          %1125 = vmatpush1.msra.mxu0 %v438
          %1126 = vmatprep.subr.mxu0 0.0
          %1127 = vmatpush1.msra.mxu0 %v439
          %1128 = vmatprep.subr.mxu0 0.0
          %1129 = vmatpush1.msra.mxu0 %v440
          %1130 = vmatprep.subr.mxu0 0.0
          %1131 = vmatpush1.msra.mxu0 %v441
          %1132 = vmatprep.subr.mxu0 0.0
          %1133 = vmatpush1.msra.mxu0 0.0
          %1134 = vmatprep.subr.mxu0 0.0
          %1135 = vmatpush1.msra.mxu0 0.0
          %1136 = vmatprep.subr.mxu0 0.0
          %1137 = vmatpush1.msra.mxu0 0.0
          %1138 = vmatprep.subr.mxu0 0.0
          %1139 = vmatpush1.msra.mxu0 0.0
          %1140 = vmatprep.subr.mxu0 0.0
          %1141 = vmatpush1.msra.mxu0 0.0
          %1142 = vmatprep.subr.mxu0 0.0
          %1143 = vmatpush1.msra.mxu0 0.0
          %1144 = vmatprep.subr.mxu0 0.0
          %1145 = vmatpush1.msra.mxu0 0.0
          %1146 = vmatprep.subr.mxu0 0.0
          %1147 = vmatpush1.msra.mxu0 0.0
          %1148 = vmatprep.subr.mxu0 0.0
          %1149 = vmatpush1.msra.mxu0 0.0
          %1150 = vmatprep.subr.mxu0 0.0
          %1151 = vmatpush1.msra.mxu0 0.0
          %1152 = vmatprep.subr.mxu0 0.0
          %1153 = vmatpush1.msra.mxu0 0.0
          %1154 = vmatprep.subr.mxu0 0.0
          %1155 = vmatpush1.msra.mxu0 0.0
          %1156 = vmatprep.subr.mxu0 0.0
          %1157 = vmatpush1.msra.mxu0 0.0
          %1158 = vmatprep.subr.mxu0 0.0
          %1159 = vmatpush1.msra.mxu0 0.0
          %1160 = vmatprep.subr.mxu0 0.0
          %1161 = vmatpush1.msra.mxu0 0.0
          %1162 = vmatprep.subr.mxu0 0.0
          %1163 = vmatpush1.msra.mxu0 0.0
          %1164 = vmatprep.mubr.f32.mxu0 0.0
          %1165 = vmatmul.mubr.f32.gmra.mrb[0].mxu0 %v1090
          %v1166 = vpop.f32.mrb[0].mxu0
          %v1167 = vadd.f32 0.0, %v1166
          %v1168 = vpop.f32.mrb[0].mxu0
          %1169 = vdwg.mxu0
          %1170 = vmatprep.subr.mxu0 0.0
          %1171 = vmatpush1.msra.mxu0 %v442
          %1172 = vmatprep.subr.mxu0 0.0
          %1173 = vmatpush1.msra.mxu0 %v443
          %1174 = vmatprep.subr.mxu0 0.0
          %1175 = vmatpush1.msra.mxu0 %v444
          %1176 = vmatprep.subr.mxu0 0.0
          %1177 = vmatpush1.msra.mxu0 %v445
          %1178 = vmatprep.subr.mxu0 0.0
          %1179 = vmatpush1.msra.mxu0 %v446
          %1180 = vmatprep.subr.mxu0 0.0
          %1181 = vmatpush1.msra.mxu0 %v447
          %1182 = vmatprep.subr.mxu0 0.0
          %1183 = vmatpush1.msra.mxu0 %v448
          %1184 = vmatprep.subr.mxu0 0.0
          %1185 = vmatpush1.msra.mxu0 %v449
          %1186 = vmatprep.subr.mxu0 0.0
          %1187 = vmatpush1.msra.mxu0 %v450
          %1188 = vmatprep.subr.mxu0 0.0
          %1189 = vmatpush1.msra.mxu0 %v451
          %1190 = vmatprep.subr.mxu0 0.0
          %1191 = vmatpush1.msra.mxu0 %v452
          %1192 = vmatprep.subr.mxu0 0.0
          %1193 = vmatpush1.msra.mxu0 %v453
          %1194 = vmatprep.subr.mxu0 0.0
          %1195 = vmatpush1.msra.mxu0 %v454
          %1196 = vmatprep.subr.mxu0 0.0
          %1197 = vmatpush1.msra.mxu0 %v455
          %1198 = vmatprep.subr.mxu0 0.0
          %1199 = vmatpush1.msra.mxu0 %v456
          %1200 = vmatprep.subr.mxu0 0.0
          %1201 = vmatpush1.msra.mxu0 %v457
          %1202 = vmatprep.subr.mxu0 0.0
          %1203 = vmatpush1.msra.mxu0 0.0
          %1204 = vmatprep.subr.mxu0 0.0
          %1205 = vmatpush1.msra.mxu0 0.0
          %1206 = vmatprep.subr.mxu0 0.0
          %1207 = vmatpush1.msra.mxu0 0.0
          %1208 = vmatprep.subr.mxu0 0.0
          %1209 = vmatpush1.msra.mxu0 0.0
          %1210 = vmatprep.subr.mxu0 0.0
          %1211 = vmatpush1.msra.mxu0 0.0
          %1212 = vmatprep.subr.mxu0 0.0
          %1213 = vmatpush1.msra.mxu0 0.0
          %1214 = vmatprep.subr.mxu0 0.0
          %1215 = vmatpush1.msra.mxu0 0.0
          %1216 = vmatprep.subr.mxu0 0.0
          %1217 = vmatpush1.msra.mxu0 0.0
          %1218 = vmatprep.subr.mxu0 0.0
          %1219 = vmatpush1.msra.mxu0 0.0
          %1220 = vmatprep.subr.mxu0 0.0
          %1221 = vmatpush1.msra.mxu0 0.0
          %1222 = vmatprep.subr.mxu0 0.0
          %1223 = vmatpush1.msra.mxu0 0.0
          %1224 = vmatprep.subr.mxu0 0.0
          %1225 = vmatpush1.msra.mxu0 0.0
          %1226 = vmatprep.subr.mxu0 0.0
          %1227 = vmatpush1.msra.mxu0 0.0
          %1228 = vmatprep.subr.mxu0 0.0
          %1229 = vmatpush1.msra.mxu0 0.0
          %1230 = vmatprep.subr.mxu0 0.0
          %1231 = vmatpush1.msra.mxu0 0.0
          %1232 = vmatprep.subr.mxu0 0.0
          %1233 = vmatpush1.msra.mxu0 0.0
          %1234 = vmatprep.mubr.f32.mxu0 0.0
          %1235 = vmatmul.mubr.f32.gmra.mrb[0].mxu0 %v1097
          %v1236 = vpop.f32.mrb[0].mxu0
          %v1237 = vadd.f32 0.0, %v1236
          %v1238 = vpop.f32.mrb[0].mxu0
          %1239 = vdwg.mxu0
          %v1240 = vmax.f32 %v1167, 1e-30
          %v1241 = vmax.f32 %v1237, 1e-30
          %v1242 = vlog2.pop %v1240
          %v1243 = vmul.f32 %v1242, 0.6931472
          %v1244 = vlog2.pop %v1241
          %v1245 = vmul.f32 %v1244, 0.6931472
          %v1248 = vrot.slane %v1245, 7
          %v1249 = vsel %vm668, %v1248, %v1243
          %v1251 = vadd.f32 %v1071, %v1249
          %v1254 = vrot.slane %v1064, 2
          %v1255 = vrot.slane %v1065, 1
          %v1256 = vsel %vm668, %v1255, %v1254
          %v1258 = vadd.f32 %v1251, %v1256
          %v1259 = vsel %vm1067, 1, 0
          %1260 = vset.pattern.permute.xlu0 0
          %1261 = vperm.xlu0 %1260, %v1259
          %v1262 = vpop.permute.xlu0 %1261
          %vm1263 = vcmp.eq.s32.totalorder %v1262, 1
          %v1264 = vsel %vm1263, %v1258, %v973
          %v1265 = vsel %vm486, %v1056, -inf
          %1266 = vmax.xlane.f32.xlu0 %v1265
          %v1267 = vpop.xlane.xlu0 %1266
          %v1268 = vmax.f32 %v1267, -1e+30
          %v1269 = vsub.f32 %v1056, %v1268
          %v1270 = vmul.f32 %v1269, 1.442695
          %v1271 = vpow.pop %v1270
          %1272 = vmatprep.subr.mxu0 0.0
          %1273 = vmatpush1.msra.mxu0 %v458
          %1274 = vmatprep.subr.mxu0 0.0
          %1275 = vmatpush1.msra.mxu0 %v459
          %1276 = vmatprep.subr.mxu0 0.0
          %1277 = vmatpush1.msra.mxu0 %v460
          %1278 = vmatprep.subr.mxu0 0.0
          %1279 = vmatpush1.msra.mxu0 %v461
          %1280 = vmatprep.subr.mxu0 0.0
          %1281 = vmatpush1.msra.mxu0 %v462
          %1282 = vmatprep.subr.mxu0 0.0
          %1283 = vmatpush1.msra.mxu0 %v463
          %1284 = vmatprep.subr.mxu0 0.0
          %1285 = vmatpush1.msra.mxu0 %v464
          %1286 = vmatprep.subr.mxu0 0.0
          %1287 = vmatpush1.msra.mxu0 %v465
          %1288 = vmatprep.subr.mxu0 0.0
          %1289 = vmatpush1.msra.mxu0 %v466
          %1290 = vmatprep.subr.mxu0 0.0
          %1291 = vmatpush1.msra.mxu0 %v467
          %1292 = vmatprep.subr.mxu0 0.0
          %1293 = vmatpush1.msra.mxu0 %v468
          %1294 = vmatprep.subr.mxu0 0.0
          %1295 = vmatpush1.msra.mxu0 %v469
          %1296 = vmatprep.subr.mxu0 0.0
          %1297 = vmatpush1.msra.mxu0 %v470
          %1298 = vmatprep.subr.mxu0 0.0
          %1299 = vmatpush1.msra.mxu0 %v471
          %1300 = vmatprep.subr.mxu0 0.0
          %1301 = vmatpush1.msra.mxu0 %v472
          %1302 = vmatprep.subr.mxu0 0.0
          %1303 = vmatpush1.msra.mxu0 %v473
          %1304 = vmatprep.subr.mxu0 0.0
          %1305 = vmatpush1.msra.mxu0 0.0
          %1306 = vmatprep.subr.mxu0 0.0
          %1307 = vmatpush1.msra.mxu0 0.0
          %1308 = vmatprep.subr.mxu0 0.0
          %1309 = vmatpush1.msra.mxu0 0.0
          %1310 = vmatprep.subr.mxu0 0.0
          %1311 = vmatpush1.msra.mxu0 0.0
          %1312 = vmatprep.subr.mxu0 0.0
          %1313 = vmatpush1.msra.mxu0 0.0
          %1314 = vmatprep.subr.mxu0 0.0
          %1315 = vmatpush1.msra.mxu0 0.0
          %1316 = vmatprep.subr.mxu0 0.0
          %1317 = vmatpush1.msra.mxu0 0.0
          %1318 = vmatprep.subr.mxu0 0.0
          %1319 = vmatpush1.msra.mxu0 0.0
          %1320 = vmatprep.subr.mxu0 0.0
          %1321 = vmatpush1.msra.mxu0 0.0
          %1322 = vmatprep.subr.mxu0 0.0
          %1323 = vmatpush1.msra.mxu0 0.0
          %1324 = vmatprep.subr.mxu0 0.0
          %1325 = vmatpush1.msra.mxu0 0.0
          %1326 = vmatprep.subr.mxu0 0.0
          %1327 = vmatpush1.msra.mxu0 0.0
          %1328 = vmatprep.subr.mxu0 0.0
          %1329 = vmatpush1.msra.mxu0 0.0
          %1330 = vmatprep.subr.mxu0 0.0
          %1331 = vmatpush1.msra.mxu0 0.0
          %1332 = vmatprep.subr.mxu0 0.0
          %1333 = vmatpush1.msra.mxu0 0.0
          %1334 = vmatprep.subr.mxu0 0.0
          %1335 = vmatpush1.msra.mxu0 0.0
          %1336 = vmatprep.mubr.f32.mxu0 0.0
          %1337 = vmatmul.mubr.f32.gmra.mrb[0].mxu0 %v1271
          %v1338 = vpop.f32.mrb[0].mxu0
          %v1339 = vadd.f32 0.0, %v1338
          %v1340 = vpop.f32.mrb[0].mxu0
          %1341 = vdwg.mxu0
          %v1342 = vmax.f32 %v1339, 1e-30
          %v1343 = vlog2.pop %v1342
          %v1344 = vmul.f32 %v1343, 0.6931472
          %v1345 = vadd.f32 %v1268, %v1344
          %v1346 = vadd.f32 %v1345, %v1256
          %v1347 = vsel %vm1263, %v1346, %v1056
          %s1348 = sadd.s32 %s405, 3
          %v1349 = vld [vmem:[%s349] sm:$0x2]
          %v1350 = vld [vmem:[%s349 + $0x4] sm:$0x2]
          %v1351 = vunpack.c.l.bf16 %v1349
          %v1352 = vunpack.c.l.bf16 %v1350
          %v1353 = vmax.f32 %v1351, -30.0
          %v1354 = vmax.f32 %v1352, -30.0
          %v1355 = vmin.f32 %v1353, 30.0
          %v1356 = vmin.f32 %v1354, 30.0
          %v1357 = vstv %s1348
          %vm1358 = vcmp.lt.s32.totalorder %v1357, %v425
          %v1359 = vsel %vm486, %v1264, -inf
          %1360 = vmax.xlane.f32.xlu0 %v1359
          %v1361 = vpop.xlane.xlu0 %1360
          %v1362 = vmax.f32 %v1361, -1e+30
          %v1363 = vsub.f32 %v1264, %v1362
          %v1364 = vmul.f32 %v1363, 1.442695
          %v1365 = vpow.pop %v1364
          %v1368 = vunpack.c.l.s4 1966171168
          %v1369 = vunpack.c.0.s8 %v1368
          %v1370 = vlaneseq
          %v1371 = vshrl.u32 %v1370, 7
          %v1372 = vsub.s32 %v1369, %v1371
          %v1373 = vrot.slane %v1365, %v1372
          %v1374 = vcombine.high %v1373, %v1373
          %v1376 = vunpack.c.l.s4 1966171168
          %v1377 = vunpack.c.0.s8 %v1376
          %v1378 = vlaneseq
          %v1379 = vshrl.u32 %v1378, 7
          %v1380 = vsub.s32 %v1377, %v1379
          %v1381 = vrot.slane %v1373, %v1380
          %v1383 = vunpack.c.l.s4 1966171168
          %v1384 = vunpack.c.0.s8 %v1383
          %v1385 = vlaneseq
          %v1386 = vshrl.u32 %v1385, 7
          %v1387 = vsub.s32 %v1384, %v1386
          %v1388 = vrot.slane %v1374, %v1387
          %1391 = vmatprep.subr.mxu0 0.0
          %1392 = vmatpush1.msra.mxu0 %v426
          %1393 = vmatprep.subr.mxu0 0.0
          %1394 = vmatpush1.msra.mxu0 %v427
          %1395 = vmatprep.subr.mxu0 0.0
          %1396 = vmatpush1.msra.mxu0 %v428
          %1397 = vmatprep.subr.mxu0 0.0
          %1398 = vmatpush1.msra.mxu0 %v429
          %1399 = vmatprep.subr.mxu0 0.0
          %1400 = vmatpush1.msra.mxu0 %v430
          %1401 = vmatprep.subr.mxu0 0.0
          %1402 = vmatpush1.msra.mxu0 %v431
          %1403 = vmatprep.subr.mxu0 0.0
          %1404 = vmatpush1.msra.mxu0 %v432
          %1405 = vmatprep.subr.mxu0 0.0
          %1406 = vmatpush1.msra.mxu0 %v433
          %1407 = vmatprep.subr.mxu0 0.0
          %1408 = vmatpush1.msra.mxu0 %v434
          %1409 = vmatprep.subr.mxu0 0.0
          %1410 = vmatpush1.msra.mxu0 %v435
          %1411 = vmatprep.subr.mxu0 0.0
          %1412 = vmatpush1.msra.mxu0 %v436
          %1413 = vmatprep.subr.mxu0 0.0
          %1414 = vmatpush1.msra.mxu0 %v437
          %1415 = vmatprep.subr.mxu0 0.0
          %1416 = vmatpush1.msra.mxu0 %v438
          %1417 = vmatprep.subr.mxu0 0.0
          %1418 = vmatpush1.msra.mxu0 %v439
          %1419 = vmatprep.subr.mxu0 0.0
          %1420 = vmatpush1.msra.mxu0 %v440
          %1421 = vmatprep.subr.mxu0 0.0
          %1422 = vmatpush1.msra.mxu0 %v441
          %1423 = vmatprep.subr.mxu0 0.0
          %1424 = vmatpush1.msra.mxu0 0.0
          %1425 = vmatprep.subr.mxu0 0.0
          %1426 = vmatpush1.msra.mxu0 0.0
          %1427 = vmatprep.subr.mxu0 0.0
          %1428 = vmatpush1.msra.mxu0 0.0
          %1429 = vmatprep.subr.mxu0 0.0
          %1430 = vmatpush1.msra.mxu0 0.0
          %1431 = vmatprep.subr.mxu0 0.0
          %1432 = vmatpush1.msra.mxu0 0.0
          %1433 = vmatprep.subr.mxu0 0.0
          %1434 = vmatpush1.msra.mxu0 0.0
          %1435 = vmatprep.subr.mxu0 0.0
          %1436 = vmatpush1.msra.mxu0 0.0
          %1437 = vmatprep.subr.mxu0 0.0
          %1438 = vmatpush1.msra.mxu0 0.0
          %1439 = vmatprep.subr.mxu0 0.0
          %1440 = vmatpush1.msra.mxu0 0.0
          %1441 = vmatprep.subr.mxu0 0.0
          %1442 = vmatpush1.msra.mxu0 0.0
          %1443 = vmatprep.subr.mxu0 0.0
          %1444 = vmatpush1.msra.mxu0 0.0
          %1445 = vmatprep.subr.mxu0 0.0
          %1446 = vmatpush1.msra.mxu0 0.0
          %1447 = vmatprep.subr.mxu0 0.0
          %1448 = vmatpush1.msra.mxu0 0.0
          %1449 = vmatprep.subr.mxu0 0.0
          %1450 = vmatpush1.msra.mxu0 0.0
          %1451 = vmatprep.subr.mxu0 0.0
          %1452 = vmatpush1.msra.mxu0 0.0
          %1453 = vmatprep.subr.mxu0 0.0
          %1454 = vmatpush1.msra.mxu0 0.0
          %1455 = vmatprep.mubr.f32.mxu0 0.0
          %1456 = vmatmul.mubr.f32.gmra.mrb[0].mxu0 %v1381
          %v1457 = vpop.f32.mrb[0].mxu0
          %v1458 = vadd.f32 0.0, %v1457
          %v1459 = vpop.f32.mrb[0].mxu0
          %1460 = vdwg.mxu0
          %1461 = vmatprep.subr.mxu0 0.0
          %1462 = vmatpush1.msra.mxu0 %v442
          %1463 = vmatprep.subr.mxu0 0.0
          %1464 = vmatpush1.msra.mxu0 %v443
          %1465 = vmatprep.subr.mxu0 0.0
          %1466 = vmatpush1.msra.mxu0 %v444
          %1467 = vmatprep.subr.mxu0 0.0
          %1468 = vmatpush1.msra.mxu0 %v445
          %1469 = vmatprep.subr.mxu0 0.0
          %1470 = vmatpush1.msra.mxu0 %v446
          %1471 = vmatprep.subr.mxu0 0.0
          %1472 = vmatpush1.msra.mxu0 %v447
          %1473 = vmatprep.subr.mxu0 0.0
          %1474 = vmatpush1.msra.mxu0 %v448
          %1475 = vmatprep.subr.mxu0 0.0
          %1476 = vmatpush1.msra.mxu0 %v449
          %1477 = vmatprep.subr.mxu0 0.0
          %1478 = vmatpush1.msra.mxu0 %v450
          %1479 = vmatprep.subr.mxu0 0.0
          %1480 = vmatpush1.msra.mxu0 %v451
          %1481 = vmatprep.subr.mxu0 0.0
          %1482 = vmatpush1.msra.mxu0 %v452
          %1483 = vmatprep.subr.mxu0 0.0
          %1484 = vmatpush1.msra.mxu0 %v453
          %1485 = vmatprep.subr.mxu0 0.0
          %1486 = vmatpush1.msra.mxu0 %v454
          %1487 = vmatprep.subr.mxu0 0.0
          %1488 = vmatpush1.msra.mxu0 %v455
          %1489 = vmatprep.subr.mxu0 0.0
          %1490 = vmatpush1.msra.mxu0 %v456
          %1491 = vmatprep.subr.mxu0 0.0
          %1492 = vmatpush1.msra.mxu0 %v457
          %1493 = vmatprep.subr.mxu0 0.0
          %1494 = vmatpush1.msra.mxu0 0.0
          %1495 = vmatprep.subr.mxu0 0.0
          %1496 = vmatpush1.msra.mxu0 0.0
          %1497 = vmatprep.subr.mxu0 0.0
          %1498 = vmatpush1.msra.mxu0 0.0
          %1499 = vmatprep.subr.mxu0 0.0
          %1500 = vmatpush1.msra.mxu0 0.0
          %1501 = vmatprep.subr.mxu0 0.0
          %1502 = vmatpush1.msra.mxu0 0.0
          %1503 = vmatprep.subr.mxu0 0.0
          %1504 = vmatpush1.msra.mxu0 0.0
          %1505 = vmatprep.subr.mxu0 0.0
          %1506 = vmatpush1.msra.mxu0 0.0
          %1507 = vmatprep.subr.mxu0 0.0
          %1508 = vmatpush1.msra.mxu0 0.0
          %1509 = vmatprep.subr.mxu0 0.0
          %1510 = vmatpush1.msra.mxu0 0.0
          %1511 = vmatprep.subr.mxu0 0.0
          %1512 = vmatpush1.msra.mxu0 0.0
          %1513 = vmatprep.subr.mxu0 0.0
          %1514 = vmatpush1.msra.mxu0 0.0
          %1515 = vmatprep.subr.mxu0 0.0
          %1516 = vmatpush1.msra.mxu0 0.0
          %1517 = vmatprep.subr.mxu0 0.0
          %1518 = vmatpush1.msra.mxu0 0.0
          %1519 = vmatprep.subr.mxu0 0.0
          %1520 = vmatpush1.msra.mxu0 0.0
          %1521 = vmatprep.subr.mxu0 0.0
          %1522 = vmatpush1.msra.mxu0 0.0
          %1523 = vmatprep.subr.mxu0 0.0
          %1524 = vmatpush1.msra.mxu0 0.0
          %1525 = vmatprep.mubr.f32.mxu0 0.0
          %1526 = vmatmul.mubr.f32.gmra.mrb[0].mxu0 %v1388
          %v1527 = vpop.f32.mrb[0].mxu0
          %v1528 = vadd.f32 0.0, %v1527
          %v1529 = vpop.f32.mrb[0].mxu0
          %1530 = vdwg.mxu0
          %v1531 = vmax.f32 %v1458, 1e-30
          %v1532 = vmax.f32 %v1528, 1e-30
          %v1533 = vlog2.pop %v1531
          %v1534 = vmul.f32 %v1533, 0.6931472
          %v1535 = vlog2.pop %v1532
          %v1536 = vmul.f32 %v1535, 0.6931472
          %v1539 = vrot.slane %v1536, 7
          %v1540 = vsel %vm668, %v1539, %v1534
          %v1542 = vadd.f32 %v1362, %v1540
          %v1545 = vrot.slane %v1355, 3
          %v1546 = vrot.slane %v1356, 2
          %v1547 = vsel %vm668, %v1546, %v1545
          %v1549 = vadd.f32 %v1542, %v1547
          %v1550 = vsel %vm1358, 1, 0
          %1551 = vset.pattern.permute.xlu0 0
          %1552 = vperm.xlu0 %1551, %v1550
          %v1553 = vpop.permute.xlu0 %1552
          %vm1554 = vcmp.eq.s32.totalorder %v1553, 1
          %v1555 = vsel %vm1554, %v1549, %v1264
          %v1556 = vsel %vm486, %v1347, -inf
          %1557 = vmax.xlane.f32.xlu0 %v1556
          %v1558 = vpop.xlane.xlu0 %1557
          %v1559 = vmax.f32 %v1558, -1e+30
          %v1560 = vsub.f32 %v1347, %v1559
          %v1561 = vmul.f32 %v1560, 1.442695
          %v1562 = vpow.pop %v1561
          %1563 = vmatprep.subr.mxu0 0.0
          %1564 = vmatpush1.msra.mxu0 %v458
          %1565 = vmatprep.subr.mxu0 0.0
          %1566 = vmatpush1.msra.mxu0 %v459
          %1567 = vmatprep.subr.mxu0 0.0
          %1568 = vmatpush1.msra.mxu0 %v460
          %1569 = vmatprep.subr.mxu0 0.0
          %1570 = vmatpush1.msra.mxu0 %v461
          %1571 = vmatprep.subr.mxu0 0.0
          %1572 = vmatpush1.msra.mxu0 %v462
          %1573 = vmatprep.subr.mxu0 0.0
          %1574 = vmatpush1.msra.mxu0 %v463
          %1575 = vmatprep.subr.mxu0 0.0
          %1576 = vmatpush1.msra.mxu0 %v464
          %1577 = vmatprep.subr.mxu0 0.0
          %1578 = vmatpush1.msra.mxu0 %v465
          %1579 = vmatprep.subr.mxu0 0.0
          %1580 = vmatpush1.msra.mxu0 %v466
          %1581 = vmatprep.subr.mxu0 0.0
          %1582 = vmatpush1.msra.mxu0 %v467
          %1583 = vmatprep.subr.mxu0 0.0
          %1584 = vmatpush1.msra.mxu0 %v468
          %1585 = vmatprep.subr.mxu0 0.0
          %1586 = vmatpush1.msra.mxu0 %v469
          %1587 = vmatprep.subr.mxu0 0.0
          %1588 = vmatpush1.msra.mxu0 %v470
          %1589 = vmatprep.subr.mxu0 0.0
          %1590 = vmatpush1.msra.mxu0 %v471
          %1591 = vmatprep.subr.mxu0 0.0
          %1592 = vmatpush1.msra.mxu0 %v472
          %1593 = vmatprep.subr.mxu0 0.0
          %1594 = vmatpush1.msra.mxu0 %v473
          %1595 = vmatprep.subr.mxu0 0.0
          %1596 = vmatpush1.msra.mxu0 0.0
          %1597 = vmatprep.subr.mxu0 0.0
          %1598 = vmatpush1.msra.mxu0 0.0
          %1599 = vmatprep.subr.mxu0 0.0
          %1600 = vmatpush1.msra.mxu0 0.0
          %1601 = vmatprep.subr.mxu0 0.0
          %1602 = vmatpush1.msra.mxu0 0.0
          %1603 = vmatprep.subr.mxu0 0.0
          %1604 = vmatpush1.msra.mxu0 0.0
          %1605 = vmatprep.subr.mxu0 0.0
          %1606 = vmatpush1.msra.mxu0 0.0
          %1607 = vmatprep.subr.mxu0 0.0
          %1608 = vmatpush1.msra.mxu0 0.0
          %1609 = vmatprep.subr.mxu0 0.0
          %1610 = vmatpush1.msra.mxu0 0.0
          %1611 = vmatprep.subr.mxu0 0.0
          %1612 = vmatpush1.msra.mxu0 0.0
          %1613 = vmatprep.subr.mxu0 0.0
          %1614 = vmatpush1.msra.mxu0 0.0
          %1615 = vmatprep.subr.mxu0 0.0
          %1616 = vmatpush1.msra.mxu0 0.0
          %1617 = vmatprep.subr.mxu0 0.0
          %1618 = vmatpush1.msra.mxu0 0.0
          %1619 = vmatprep.subr.mxu0 0.0
          %1620 = vmatpush1.msra.mxu0 0.0
          %1621 = vmatprep.subr.mxu0 0.0
          %1622 = vmatpush1.msra.mxu0 0.0
          %1623 = vmatprep.subr.mxu0 0.0
          %1624 = vmatpush1.msra.mxu0 0.0
          %1625 = vmatprep.subr.mxu0 0.0
          %1626 = vmatpush1.msra.mxu0 0.0
          %1627 = vmatprep.mubr.f32.mxu0 0.0
          %1628 = vmatmul.mubr.f32.gmra.mrb[0].mxu0 %v1562
          %v1629 = vpop.f32.mrb[0].mxu0
          %v1630 = vadd.f32 0.0, %v1629
          %v1631 = vpop.f32.mrb[0].mxu0
          %1632 = vdwg.mxu0
          %v1633 = vmax.f32 %v1630, 1e-30
          %v1634 = vlog2.pop %v1633
          %v1635 = vmul.f32 %v1634, 0.6931472
          %v1636 = vadd.f32 %v1559, %v1635
          %v1637 = vadd.f32 %v1636, %v1547
          %v1638 = vsel %vm1554, %v1637, %v1347
          %s1639 = sadd.s32 %s405, 4
          %v1640 = vld [vmem:[%s349] sm:$0x4]
          %v1641 = vld [vmem:[%s349 + $0x4] sm:$0x4]
          %v1642 = vunpack.c.l.bf16 %v1640
          %v1643 = vunpack.c.l.bf16 %v1641
          %v1644 = vmax.f32 %v1642, -30.0
          %v1645 = vmax.f32 %v1643, -30.0
          %v1646 = vmin.f32 %v1644, 30.0
          %v1647 = vmin.f32 %v1645, 30.0
          %v1648 = vstv %s1639
          %vm1649 = vcmp.lt.s32.totalorder %v1648, %v425
          %v1650 = vsel %vm486, %v1555, -inf
          %1651 = vmax.xlane.f32.xlu0 %v1650
          %v1652 = vpop.xlane.xlu0 %1651
          %v1653 = vmax.f32 %v1652, -1e+30
          %v1654 = vsub.f32 %v1555, %v1653
          %v1655 = vmul.f32 %v1654, 1.442695
          %v1656 = vpow.pop %v1655
          %v1659 = vunpack.c.l.s4 1966171168
          %v1660 = vunpack.c.0.s8 %v1659
          %v1661 = vlaneseq
          %v1662 = vshrl.u32 %v1661, 7
          %v1663 = vsub.s32 %v1660, %v1662
          %v1664 = vrot.slane %v1656, %v1663
          %v1665 = vcombine.high %v1664, %v1664
          %v1667 = vunpack.c.l.s4 1966171168
          %v1668 = vunpack.c.0.s8 %v1667
          %v1669 = vlaneseq
          %v1670 = vshrl.u32 %v1669, 7
          %v1671 = vsub.s32 %v1668, %v1670
          %v1672 = vrot.slane %v1664, %v1671
          %v1674 = vunpack.c.l.s4 1966171168
          %v1675 = vunpack.c.0.s8 %v1674
          %v1676 = vlaneseq
          %v1677 = vshrl.u32 %v1676, 7
          %v1678 = vsub.s32 %v1675, %v1677
          %v1679 = vrot.slane %v1665, %v1678
          %1682 = vmatprep.subr.mxu0 0.0
          %1683 = vmatpush1.msra.mxu0 %v426
          %1684 = vmatprep.subr.mxu0 0.0
          %1685 = vmatpush1.msra.mxu0 %v427
          %1686 = vmatprep.subr.mxu0 0.0
          %1687 = vmatpush1.msra.mxu0 %v428
          %1688 = vmatprep.subr.mxu0 0.0
          %1689 = vmatpush1.msra.mxu0 %v429
          %1690 = vmatprep.subr.mxu0 0.0
          %1691 = vmatpush1.msra.mxu0 %v430
          %1692 = vmatprep.subr.mxu0 0.0
          %1693 = vmatpush1.msra.mxu0 %v431
          %1694 = vmatprep.subr.mxu0 0.0
          %1695 = vmatpush1.msra.mxu0 %v432
          %1696 = vmatprep.subr.mxu0 0.0
          %1697 = vmatpush1.msra.mxu0 %v433
          %1698 = vmatprep.subr.mxu0 0.0
          %1699 = vmatpush1.msra.mxu0 %v434
          %1700 = vmatprep.subr.mxu0 0.0
          %1701 = vmatpush1.msra.mxu0 %v435
          %1702 = vmatprep.subr.mxu0 0.0
          %1703 = vmatpush1.msra.mxu0 %v436
          %1704 = vmatprep.subr.mxu0 0.0
          %1705 = vmatpush1.msra.mxu0 %v437
          %1706 = vmatprep.subr.mxu0 0.0
          %1707 = vmatpush1.msra.mxu0 %v438
          %1708 = vmatprep.subr.mxu0 0.0
          %1709 = vmatpush1.msra.mxu0 %v439
          %1710 = vmatprep.subr.mxu0 0.0
          %1711 = vmatpush1.msra.mxu0 %v440
          %1712 = vmatprep.subr.mxu0 0.0
          %1713 = vmatpush1.msra.mxu0 %v441
          %1714 = vmatprep.subr.mxu0 0.0
          %1715 = vmatpush1.msra.mxu0 0.0
          %1716 = vmatprep.subr.mxu0 0.0
          %1717 = vmatpush1.msra.mxu0 0.0
          %1718 = vmatprep.subr.mxu0 0.0
          %1719 = vmatpush1.msra.mxu0 0.0
          %1720 = vmatprep.subr.mxu0 0.0
          %1721 = vmatpush1.msra.mxu0 0.0
          %1722 = vmatprep.subr.mxu0 0.0
          %1723 = vmatpush1.msra.mxu0 0.0
          %1724 = vmatprep.subr.mxu0 0.0
          %1725 = vmatpush1.msra.mxu0 0.0
          %1726 = vmatprep.subr.mxu0 0.0
          %1727 = vmatpush1.msra.mxu0 0.0
          %1728 = vmatprep.subr.mxu0 0.0
          %1729 = vmatpush1.msra.mxu0 0.0
          %1730 = vmatprep.subr.mxu0 0.0
          %1731 = vmatpush1.msra.mxu0 0.0
          %1732 = vmatprep.subr.mxu0 0.0
          %1733 = vmatpush1.msra.mxu0 0.0
          %1734 = vmatprep.subr.mxu0 0.0
          %1735 = vmatpush1.msra.mxu0 0.0
          %1736 = vmatprep.subr.mxu0 0.0
          %1737 = vmatpush1.msra.mxu0 0.0
          %1738 = vmatprep.subr.mxu0 0.0
          %1739 = vmatpush1.msra.mxu0 0.0
          %1740 = vmatprep.subr.mxu0 0.0
          %1741 = vmatpush1.msra.mxu0 0.0
          %1742 = vmatprep.subr.mxu0 0.0
          %1743 = vmatpush1.msra.mxu0 0.0
          %1744 = vmatprep.subr.mxu0 0.0
          %1745 = vmatpush1.msra.mxu0 0.0
          %1746 = vmatprep.mubr.f32.mxu0 0.0
          %1747 = vmatmul.mubr.f32.gmra.mrb[0].mxu0 %v1672
          %v1748 = vpop.f32.mrb[0].mxu0
          %v1749 = vadd.f32 0.0, %v1748
          %v1750 = vpop.f32.mrb[0].mxu0
          %1751 = vdwg.mxu0
          %1752 = vmatprep.subr.mxu0 0.0
          %1753 = vmatpush1.msra.mxu0 %v442
          %1754 = vmatprep.subr.mxu0 0.0
          %1755 = vmatpush1.msra.mxu0 %v443
          %1756 = vmatprep.subr.mxu0 0.0
          %1757 = vmatpush1.msra.mxu0 %v444
          %1758 = vmatprep.subr.mxu0 0.0
          %1759 = vmatpush1.msra.mxu0 %v445
          %1760 = vmatprep.subr.mxu0 0.0
          %1761 = vmatpush1.msra.mxu0 %v446
          %1762 = vmatprep.subr.mxu0 0.0
          %1763 = vmatpush1.msra.mxu0 %v447
          %1764 = vmatprep.subr.mxu0 0.0
          %1765 = vmatpush1.msra.mxu0 %v448
          %1766 = vmatprep.subr.mxu0 0.0
          %1767 = vmatpush1.msra.mxu0 %v449
          %1768 = vmatprep.subr.mxu0 0.0
          %1769 = vmatpush1.msra.mxu0 %v450
          %1770 = vmatprep.subr.mxu0 0.0
          %1771 = vmatpush1.msra.mxu0 %v451
          %1772 = vmatprep.subr.mxu0 0.0
          %1773 = vmatpush1.msra.mxu0 %v452
          %1774 = vmatprep.subr.mxu0 0.0
          %1775 = vmatpush1.msra.mxu0 %v453
          %1776 = vmatprep.subr.mxu0 0.0
          %1777 = vmatpush1.msra.mxu0 %v454
          %1778 = vmatprep.subr.mxu0 0.0
          %1779 = vmatpush1.msra.mxu0 %v455
          %1780 = vmatprep.subr.mxu0 0.0
          %1781 = vmatpush1.msra.mxu0 %v456
          %1782 = vmatprep.subr.mxu0 0.0
          %1783 = vmatpush1.msra.mxu0 %v457
          %1784 = vmatprep.subr.mxu0 0.0
          %1785 = vmatpush1.msra.mxu0 0.0
          %1786 = vmatprep.subr.mxu0 0.0
          %1787 = vmatpush1.msra.mxu0 0.0
          %1788 = vmatprep.subr.mxu0 0.0
          %1789 = vmatpush1.msra.mxu0 0.0
          %1790 = vmatprep.subr.mxu0 0.0
          %1791 = vmatpush1.msra.mxu0 0.0
          %1792 = vmatprep.subr.mxu0 0.0
          %1793 = vmatpush1.msra.mxu0 0.0
          %1794 = vmatprep.subr.mxu0 0.0
          %1795 = vmatpush1.msra.mxu0 0.0
          %1796 = vmatprep.subr.mxu0 0.0
          %1797 = vmatpush1.msra.mxu0 0.0
          %1798 = vmatprep.subr.mxu0 0.0
          %1799 = vmatpush1.msra.mxu0 0.0
          %1800 = vmatprep.subr.mxu0 0.0
          %1801 = vmatpush1.msra.mxu0 0.0
          %1802 = vmatprep.subr.mxu0 0.0
          %1803 = vmatpush1.msra.mxu0 0.0
          %1804 = vmatprep.subr.mxu0 0.0
          %1805 = vmatpush1.msra.mxu0 0.0
          %1806 = vmatprep.subr.mxu0 0.0
          %1807 = vmatpush1.msra.mxu0 0.0
          %1808 = vmatprep.subr.mxu0 0.0
          %1809 = vmatpush1.msra.mxu0 0.0
          %1810 = vmatprep.subr.mxu0 0.0
          %1811 = vmatpush1.msra.mxu0 0.0
          %1812 = vmatprep.subr.mxu0 0.0
          %1813 = vmatpush1.msra.mxu0 0.0
          %1814 = vmatprep.subr.mxu0 0.0
          %1815 = vmatpush1.msra.mxu0 0.0
          %1816 = vmatprep.mubr.f32.mxu0 0.0
          %1817 = vmatmul.mubr.f32.gmra.mrb[0].mxu0 %v1679
          %v1818 = vpop.f32.mrb[0].mxu0
          %v1819 = vadd.f32 0.0, %v1818
          %v1820 = vpop.f32.mrb[0].mxu0
          %1821 = vdwg.mxu0
          %v1822 = vmax.f32 %v1749, 1e-30
          %v1823 = vmax.f32 %v1819, 1e-30
          %v1824 = vlog2.pop %v1822
          %v1825 = vmul.f32 %v1824, 0.6931472
          %v1826 = vlog2.pop %v1823
          %v1827 = vmul.f32 %v1826, 0.6931472
          %v1830 = vrot.slane %v1827, 7
          %v1831 = vsel %vm668, %v1830, %v1825
          %v1833 = vadd.f32 %v1653, %v1831
          %v1836 = vrot.slane %v1646, 4
          %v1837 = vrot.slane %v1647, 3
          %v1838 = vsel %vm668, %v1837, %v1836
          %v1840 = vadd.f32 %v1833, %v1838
          %v1841 = vsel %vm1649, 1, 0
          %1842 = vset.pattern.permute.xlu0 0
          %1843 = vperm.xlu0 %1842, %v1841
          %v1844 = vpop.permute.xlu0 %1843
          %vm1845 = vcmp.eq.s32.totalorder %v1844, 1
          %v1846 = vsel %vm1845, %v1840, %v1555
          %v1847 = vsel %vm486, %v1638, -inf
          %1848 = vmax.xlane.f32.xlu0 %v1847
          %v1849 = vpop.xlane.xlu0 %1848
          %v1850 = vmax.f32 %v1849, -1e+30
          %v1851 = vsub.f32 %v1638, %v1850
          %v1852 = vmul.f32 %v1851, 1.442695
          %v1853 = vpow.pop %v1852
          %1854 = vmatprep.subr.mxu0 0.0
          %1855 = vmatpush1.msra.mxu0 %v458
          %1856 = vmatprep.subr.mxu0 0.0
          %1857 = vmatpush1.msra.mxu0 %v459
          %1858 = vmatprep.subr.mxu0 0.0
          %1859 = vmatpush1.msra.mxu0 %v460
          %1860 = vmatprep.subr.mxu0 0.0
          %1861 = vmatpush1.msra.mxu0 %v461
          %1862 = vmatprep.subr.mxu0 0.0
          %1863 = vmatpush1.msra.mxu0 %v462
          %1864 = vmatprep.subr.mxu0 0.0
          %1865 = vmatpush1.msra.mxu0 %v463
          %1866 = vmatprep.subr.mxu0 0.0
          %1867 = vmatpush1.msra.mxu0 %v464
          %1868 = vmatprep.subr.mxu0 0.0
          %1869 = vmatpush1.msra.mxu0 %v465
          %1870 = vmatprep.subr.mxu0 0.0
          %1871 = vmatpush1.msra.mxu0 %v466
          %1872 = vmatprep.subr.mxu0 0.0
          %1873 = vmatpush1.msra.mxu0 %v467
          %1874 = vmatprep.subr.mxu0 0.0
          %1875 = vmatpush1.msra.mxu0 %v468
          %1876 = vmatprep.subr.mxu0 0.0
          %1877 = vmatpush1.msra.mxu0 %v469
          %1878 = vmatprep.subr.mxu0 0.0
          %1879 = vmatpush1.msra.mxu0 %v470
          %1880 = vmatprep.subr.mxu0 0.0
          %1881 = vmatpush1.msra.mxu0 %v471
          %1882 = vmatprep.subr.mxu0 0.0
          %1883 = vmatpush1.msra.mxu0 %v472
          %1884 = vmatprep.subr.mxu0 0.0
          %1885 = vmatpush1.msra.mxu0 %v473
          %1886 = vmatprep.subr.mxu0 0.0
          %1887 = vmatpush1.msra.mxu0 0.0
          %1888 = vmatprep.subr.mxu0 0.0
          %1889 = vmatpush1.msra.mxu0 0.0
          %1890 = vmatprep.subr.mxu0 0.0
          %1891 = vmatpush1.msra.mxu0 0.0
          %1892 = vmatprep.subr.mxu0 0.0
          %1893 = vmatpush1.msra.mxu0 0.0
          %1894 = vmatprep.subr.mxu0 0.0
          %1895 = vmatpush1.msra.mxu0 0.0
          %1896 = vmatprep.subr.mxu0 0.0
          %1897 = vmatpush1.msra.mxu0 0.0
          %1898 = vmatprep.subr.mxu0 0.0
          %1899 = vmatpush1.msra.mxu0 0.0
          %1900 = vmatprep.subr.mxu0 0.0
          %1901 = vmatpush1.msra.mxu0 0.0
          %1902 = vmatprep.subr.mxu0 0.0
          %1903 = vmatpush1.msra.mxu0 0.0
          %1904 = vmatprep.subr.mxu0 0.0
          %1905 = vmatpush1.msra.mxu0 0.0
          %1906 = vmatprep.subr.mxu0 0.0
          %1907 = vmatpush1.msra.mxu0 0.0
          %1908 = vmatprep.subr.mxu0 0.0
          %1909 = vmatpush1.msra.mxu0 0.0
          %1910 = vmatprep.subr.mxu0 0.0
          %1911 = vmatpush1.msra.mxu0 0.0
          %1912 = vmatprep.subr.mxu0 0.0
          %1913 = vmatpush1.msra.mxu0 0.0
          %1914 = vmatprep.subr.mxu0 0.0
          %1915 = vmatpush1.msra.mxu0 0.0
          %1916 = vmatprep.subr.mxu0 0.0
          %1917 = vmatpush1.msra.mxu0 0.0
          %1918 = vmatprep.mubr.f32.mxu0 0.0
          %1919 = vmatmul.mubr.f32.gmra.mrb[0].mxu0 %v1853
          %v1920 = vpop.f32.mrb[0].mxu0
          %v1921 = vadd.f32 0.0, %v1920
          %v1922 = vpop.f32.mrb[0].mxu0
          %1923 = vdwg.mxu0
          %v1924 = vmax.f32 %v1921, 1e-30
          %v1925 = vlog2.pop %v1924
          %v1926 = vmul.f32 %v1925, 0.6931472
          %v1927 = vadd.f32 %v1850, %v1926
          %v1928 = vadd.f32 %v1927, %v1838
          %v1929 = vsel %vm1845, %v1928, %v1638
          %s1930 = sadd.s32 %s405, 5
          %v1931 = vld [vmem:[%s349] sm:$0x4]
          %v1932 = vld [vmem:[%s349 + $0x4] sm:$0x4]
          %v1933 = vunpack.c.l.bf16 %v1931
          %v1934 = vunpack.c.l.bf16 %v1932
          %v1935 = vmax.f32 %v1933, -30.0
          %v1936 = vmax.f32 %v1934, -30.0
          %v1937 = vmin.f32 %v1935, 30.0
          %v1938 = vmin.f32 %v1936, 30.0
          %v1939 = vstv %s1930
          %vm1940 = vcmp.lt.s32.totalorder %v1939, %v425
          %v1941 = vsel %vm486, %v1846, -inf
          %1942 = vmax.xlane.f32.xlu0 %v1941
          %v1943 = vpop.xlane.xlu0 %1942
          %v1944 = vmax.f32 %v1943, -1e+30
          %v1945 = vsub.f32 %v1846, %v1944
          %v1946 = vmul.f32 %v1945, 1.442695
          %v1947 = vpow.pop %v1946
          %v1950 = vunpack.c.l.s4 1966171168
          %v1951 = vunpack.c.0.s8 %v1950
          %v1952 = vlaneseq
          %v1953 = vshrl.u32 %v1952, 7
          %v1954 = vsub.s32 %v1951, %v1953
          %v1955 = vrot.slane %v1947, %v1954
          %v1956 = vcombine.high %v1955, %v1955
          %v1958 = vunpack.c.l.s4 1966171168
          %v1959 = vunpack.c.0.s8 %v1958
          %v1960 = vlaneseq
          %v1961 = vshrl.u32 %v1960, 7
          %v1962 = vsub.s32 %v1959, %v1961
          %v1963 = vrot.slane %v1955, %v1962
          %v1965 = vunpack.c.l.s4 1966171168
          %v1966 = vunpack.c.0.s8 %v1965
          %v1967 = vlaneseq
          %v1968 = vshrl.u32 %v1967, 7
          %v1969 = vsub.s32 %v1966, %v1968
          %v1970 = vrot.slane %v1956, %v1969
          %1973 = vmatprep.subr.mxu0 0.0
          %1974 = vmatpush1.msra.mxu0 %v426
          %1975 = vmatprep.subr.mxu0 0.0
          %1976 = vmatpush1.msra.mxu0 %v427
          %1977 = vmatprep.subr.mxu0 0.0
          %1978 = vmatpush1.msra.mxu0 %v428
          %1979 = vmatprep.subr.mxu0 0.0
          %1980 = vmatpush1.msra.mxu0 %v429
          %1981 = vmatprep.subr.mxu0 0.0
          %1982 = vmatpush1.msra.mxu0 %v430
          %1983 = vmatprep.subr.mxu0 0.0
          %1984 = vmatpush1.msra.mxu0 %v431
          %1985 = vmatprep.subr.mxu0 0.0
          %1986 = vmatpush1.msra.mxu0 %v432
          %1987 = vmatprep.subr.mxu0 0.0
          %1988 = vmatpush1.msra.mxu0 %v433
          %1989 = vmatprep.subr.mxu0 0.0
          %1990 = vmatpush1.msra.mxu0 %v434
          %1991 = vmatprep.subr.mxu0 0.0
          %1992 = vmatpush1.msra.mxu0 %v435
          %1993 = vmatprep.subr.mxu0 0.0
          %1994 = vmatpush1.msra.mxu0 %v436
          %1995 = vmatprep.subr.mxu0 0.0
          %1996 = vmatpush1.msra.mxu0 %v437
          %1997 = vmatprep.subr.mxu0 0.0
          %1998 = vmatpush1.msra.mxu0 %v438
          %1999 = vmatprep.subr.mxu0 0.0
          %2000 = vmatpush1.msra.mxu0 %v439
          %2001 = vmatprep.subr.mxu0 0.0
          %2002 = vmatpush1.msra.mxu0 %v440
          %2003 = vmatprep.subr.mxu0 0.0
          %2004 = vmatpush1.msra.mxu0 %v441
          %2005 = vmatprep.subr.mxu0 0.0
          %2006 = vmatpush1.msra.mxu0 0.0
          %2007 = vmatprep.subr.mxu0 0.0
          %2008 = vmatpush1.msra.mxu0 0.0
          %2009 = vmatprep.subr.mxu0 0.0
          %2010 = vmatpush1.msra.mxu0 0.0
          %2011 = vmatprep.subr.mxu0 0.0
          %2012 = vmatpush1.msra.mxu0 0.0
          %2013 = vmatprep.subr.mxu0 0.0
          %2014 = vmatpush1.msra.mxu0 0.0
          %2015 = vmatprep.subr.mxu0 0.0
          %2016 = vmatpush1.msra.mxu0 0.0
          %2017 = vmatprep.subr.mxu0 0.0
          %2018 = vmatpush1.msra.mxu0 0.0
          %2019 = vmatprep.subr.mxu0 0.0
          %2020 = vmatpush1.msra.mxu0 0.0
          %2021 = vmatprep.subr.mxu0 0.0
          %2022 = vmatpush1.msra.mxu0 0.0
          %2023 = vmatprep.subr.mxu0 0.0
          %2024 = vmatpush1.msra.mxu0 0.0
          %2025 = vmatprep.subr.mxu0 0.0
          %2026 = vmatpush1.msra.mxu0 0.0
          %2027 = vmatprep.subr.mxu0 0.0
          %2028 = vmatpush1.msra.mxu0 0.0
          %2029 = vmatprep.subr.mxu0 0.0
          %2030 = vmatpush1.msra.mxu0 0.0
          %2031 = vmatprep.subr.mxu0 0.0
          %2032 = vmatpush1.msra.mxu0 0.0
          %2033 = vmatprep.subr.mxu0 0.0
          %2034 = vmatpush1.msra.mxu0 0.0
          %2035 = vmatprep.subr.mxu0 0.0
          %2036 = vmatpush1.msra.mxu0 0.0
          %2037 = vmatprep.mubr.f32.mxu0 0.0
          %2038 = vmatmul.mubr.f32.gmra.mrb[0].mxu0 %v1963
          %v2039 = vpop.f32.mrb[0].mxu0
          %v2040 = vadd.f32 0.0, %v2039
          %v2041 = vpop.f32.mrb[0].mxu0
          %2042 = vdwg.mxu0
          %2043 = vmatprep.subr.mxu0 0.0
          %2044 = vmatpush1.msra.mxu0 %v442
          %2045 = vmatprep.subr.mxu0 0.0
          %2046 = vmatpush1.msra.mxu0 %v443
          %2047 = vmatprep.subr.mxu0 0.0
          %2048 = vmatpush1.msra.mxu0 %v444
          %2049 = vmatprep.subr.mxu0 0.0
          %2050 = vmatpush1.msra.mxu0 %v445
          %2051 = vmatprep.subr.mxu0 0.0
          %2052 = vmatpush1.msra.mxu0 %v446
          %2053 = vmatprep.subr.mxu0 0.0
          %2054 = vmatpush1.msra.mxu0 %v447
          %2055 = vmatprep.subr.mxu0 0.0
          %2056 = vmatpush1.msra.mxu0 %v448
          %2057 = vmatprep.subr.mxu0 0.0
          %2058 = vmatpush1.msra.mxu0 %v449
          %2059 = vmatprep.subr.mxu0 0.0
          %2060 = vmatpush1.msra.mxu0 %v450
          %2061 = vmatprep.subr.mxu0 0.0
          %2062 = vmatpush1.msra.mxu0 %v451
          %2063 = vmatprep.subr.mxu0 0.0
          %2064 = vmatpush1.msra.mxu0 %v452
          %2065 = vmatprep.subr.mxu0 0.0
          %2066 = vmatpush1.msra.mxu0 %v453
          %2067 = vmatprep.subr.mxu0 0.0
          %2068 = vmatpush1.msra.mxu0 %v454
          %2069 = vmatprep.subr.mxu0 0.0
          %2070 = vmatpush1.msra.mxu0 %v455
          %2071 = vmatprep.subr.mxu0 0.0
          %2072 = vmatpush1.msra.mxu0 %v456
          %2073 = vmatprep.subr.mxu0 0.0
          %2074 = vmatpush1.msra.mxu0 %v457
          %2075 = vmatprep.subr.mxu0 0.0
          %2076 = vmatpush1.msra.mxu0 0.0
          %2077 = vmatprep.subr.mxu0 0.0
          %2078 = vmatpush1.msra.mxu0 0.0
          %2079 = vmatprep.subr.mxu0 0.0
          %2080 = vmatpush1.msra.mxu0 0.0
          %2081 = vmatprep.subr.mxu0 0.0
          %2082 = vmatpush1.msra.mxu0 0.0
          %2083 = vmatprep.subr.mxu0 0.0
          %2084 = vmatpush1.msra.mxu0 0.0
          %2085 = vmatprep.subr.mxu0 0.0
          %2086 = vmatpush1.msra.mxu0 0.0
          %2087 = vmatprep.subr.mxu0 0.0
          %2088 = vmatpush1.msra.mxu0 0.0
          %2089 = vmatprep.subr.mxu0 0.0
          %2090 = vmatpush1.msra.mxu0 0.0
          %2091 = vmatprep.subr.mxu0 0.0
          %2092 = vmatpush1.msra.mxu0 0.0
          %2093 = vmatprep.subr.mxu0 0.0
          %2094 = vmatpush1.msra.mxu0 0.0
          %2095 = vmatprep.subr.mxu0 0.0
          %2096 = vmatpush1.msra.mxu0 0.0
          %2097 = vmatprep.subr.mxu0 0.0
          %2098 = vmatpush1.msra.mxu0 0.0
          %2099 = vmatprep.subr.mxu0 0.0
          %2100 = vmatpush1.msra.mxu0 0.0
          %2101 = vmatprep.subr.mxu0 0.0
          %2102 = vmatpush1.msra.mxu0 0.0
          %2103 = vmatprep.subr.mxu0 0.0
          %2104 = vmatpush1.msra.mxu0 0.0
          %2105 = vmatprep.subr.mxu0 0.0
          %2106 = vmatpush1.msra.mxu0 0.0
          %2107 = vmatprep.mubr.f32.mxu0 0.0
          %2108 = vmatmul.mubr.f32.gmra.mrb[0].mxu0 %v1970
          %v2109 = vpop.f32.mrb[0].mxu0
          %v2110 = vadd.f32 0.0, %v2109
          %v2111 = vpop.f32.mrb[0].mxu0
          %2112 = vdwg.mxu0
          %v2113 = vmax.f32 %v2040, 1e-30
          %v2114 = vmax.f32 %v2110, 1e-30
          %v2115 = vlog2.pop %v2113
          %v2116 = vmul.f32 %v2115, 0.6931472
          %v2117 = vlog2.pop %v2114
          %v2118 = vmul.f32 %v2117, 0.6931472
          %v2121 = vrot.slane %v2118, 7
          %v2122 = vsel %vm668, %v2121, %v2116
          %v2124 = vadd.f32 %v1944, %v2122
          %v2127 = vrot.slane %v1937, 5
          %v2128 = vrot.slane %v1938, 4
          %v2129 = vsel %vm668, %v2128, %v2127
          %v2131 = vadd.f32 %v2124, %v2129
          %v2132 = vsel %vm1940, 1, 0
          %2133 = vset.pattern.permute.xlu0 0
          %2134 = vperm.xlu0 %2133, %v2132
          %v2135 = vpop.permute.xlu0 %2134
          %vm2136 = vcmp.eq.s32.totalorder %v2135, 1
          %v2137 = vsel %vm2136, %v2131, %v1846
          %v2138 = vsel %vm486, %v1929, -inf
          %2139 = vmax.xlane.f32.xlu0 %v2138
          %v2140 = vpop.xlane.xlu0 %2139
          %v2141 = vmax.f32 %v2140, -1e+30
          %v2142 = vsub.f32 %v1929, %v2141
          %v2143 = vmul.f32 %v2142, 1.442695
          %v2144 = vpow.pop %v2143
          %2145 = vmatprep.subr.mxu0 0.0
          %2146 = vmatpush1.msra.mxu0 %v458
          %2147 = vmatprep.subr.mxu0 0.0
          %2148 = vmatpush1.msra.mxu0 %v459
          %2149 = vmatprep.subr.mxu0 0.0
          %2150 = vmatpush1.msra.mxu0 %v460
          %2151 = vmatprep.subr.mxu0 0.0
          %2152 = vmatpush1.msra.mxu0 %v461
          %2153 = vmatprep.subr.mxu0 0.0
          %2154 = vmatpush1.msra.mxu0 %v462
          %2155 = vmatprep.subr.mxu0 0.0
          %2156 = vmatpush1.msra.mxu0 %v463
          %2157 = vmatprep.subr.mxu0 0.0
          %2158 = vmatpush1.msra.mxu0 %v464
          %2159 = vmatprep.subr.mxu0 0.0
          %2160 = vmatpush1.msra.mxu0 %v465
          %2161 = vmatprep.subr.mxu0 0.0
          %2162 = vmatpush1.msra.mxu0 %v466
          %2163 = vmatprep.subr.mxu0 0.0
          %2164 = vmatpush1.msra.mxu0 %v467
          %2165 = vmatprep.subr.mxu0 0.0
          %2166 = vmatpush1.msra.mxu0 %v468
          %2167 = vmatprep.subr.mxu0 0.0
          %2168 = vmatpush1.msra.mxu0 %v469
          %2169 = vmatprep.subr.mxu0 0.0
          %2170 = vmatpush1.msra.mxu0 %v470
          %2171 = vmatprep.subr.mxu0 0.0
          %2172 = vmatpush1.msra.mxu0 %v471
          %2173 = vmatprep.subr.mxu0 0.0
          %2174 = vmatpush1.msra.mxu0 %v472
          %2175 = vmatprep.subr.mxu0 0.0
          %2176 = vmatpush1.msra.mxu0 %v473
          %2177 = vmatprep.subr.mxu0 0.0
          %2178 = vmatpush1.msra.mxu0 0.0
          %2179 = vmatprep.subr.mxu0 0.0
          %2180 = vmatpush1.msra.mxu0 0.0
          %2181 = vmatprep.subr.mxu0 0.0
          %2182 = vmatpush1.msra.mxu0 0.0
          %2183 = vmatprep.subr.mxu0 0.0
          %2184 = vmatpush1.msra.mxu0 0.0
          %2185 = vmatprep.subr.mxu0 0.0
          %2186 = vmatpush1.msra.mxu0 0.0
          %2187 = vmatprep.subr.mxu0 0.0
          %2188 = vmatpush1.msra.mxu0 0.0
          %2189 = vmatprep.subr.mxu0 0.0
          %2190 = vmatpush1.msra.mxu0 0.0
          %2191 = vmatprep.subr.mxu0 0.0
          %2192 = vmatpush1.msra.mxu0 0.0
          %2193 = vmatprep.subr.mxu0 0.0
          %2194 = vmatpush1.msra.mxu0 0.0
          %2195 = vmatprep.subr.mxu0 0.0
          %2196 = vmatpush1.msra.mxu0 0.0
          %2197 = vmatprep.subr.mxu0 0.0
          %2198 = vmatpush1.msra.mxu0 0.0
          %2199 = vmatprep.subr.mxu0 0.0
          %2200 = vmatpush1.msra.mxu0 0.0
          %2201 = vmatprep.subr.mxu0 0.0
          %2202 = vmatpush1.msra.mxu0 0.0
          %2203 = vmatprep.subr.mxu0 0.0
          %2204 = vmatpush1.msra.mxu0 0.0
          %2205 = vmatprep.subr.mxu0 0.0
          %2206 = vmatpush1.msra.mxu0 0.0
          %2207 = vmatprep.subr.mxu0 0.0
          %2208 = vmatpush1.msra.mxu0 0.0
          %2209 = vmatprep.mubr.f32.mxu0 0.0
          %2210 = vmatmul.mubr.f32.gmra.mrb[0].mxu0 %v2144
          %v2211 = vpop.f32.mrb[0].mxu0
          %v2212 = vadd.f32 0.0, %v2211
          %v2213 = vpop.f32.mrb[0].mxu0
          %2214 = vdwg.mxu0
          %v2215 = vmax.f32 %v2212, 1e-30
          %v2216 = vlog2.pop %v2215
          %v2217 = vmul.f32 %v2216, 0.6931472
          %v2218 = vadd.f32 %v2141, %v2217
          %v2219 = vadd.f32 %v2218, %v2129
          %v2220 = vsel %vm2136, %v2219, %v1929
          %s2221 = sadd.s32 %s405, 6
          %v2222 = vld [vmem:[%s349] sm:$0x8]
          %v2223 = vld [vmem:[%s349 + $0x4] sm:$0x8]
          %v2224 = vunpack.c.l.bf16 %v2222
          %v2225 = vunpack.c.l.bf16 %v2223
          %v2226 = vmax.f32 %v2224, -30.0
          %v2227 = vmax.f32 %v2225, -30.0
          %v2228 = vmin.f32 %v2226, 30.0
          %v2229 = vmin.f32 %v2227, 30.0
          %v2230 = vstv %s2221
          %vm2231 = vcmp.lt.s32.totalorder %v2230, %v425
          %v2232 = vsel %vm486, %v2137, -inf
          %2233 = vmax.xlane.f32.xlu0 %v2232
          %v2234 = vpop.xlane.xlu0 %2233
          %v2235 = vmax.f32 %v2234, -1e+30
          %v2236 = vsub.f32 %v2137, %v2235
          %v2237 = vmul.f32 %v2236, 1.442695
          %v2238 = vpow.pop %v2237
          %v2241 = vunpack.c.l.s4 1966171168
          %v2242 = vunpack.c.0.s8 %v2241
          %v2243 = vlaneseq
          %v2244 = vshrl.u32 %v2243, 7
          %v2245 = vsub.s32 %v2242, %v2244
          %v2246 = vrot.slane %v2238, %v2245
          %v2247 = vcombine.high %v2246, %v2246
          %v2249 = vunpack.c.l.s4 1966171168
          %v2250 = vunpack.c.0.s8 %v2249
          %v2251 = vlaneseq
          %v2252 = vshrl.u32 %v2251, 7
          %v2253 = vsub.s32 %v2250, %v2252
          %v2254 = vrot.slane %v2246, %v2253
          %v2256 = vunpack.c.l.s4 1966171168
          %v2257 = vunpack.c.0.s8 %v2256
          %v2258 = vlaneseq
          %v2259 = vshrl.u32 %v2258, 7
          %v2260 = vsub.s32 %v2257, %v2259
          %v2261 = vrot.slane %v2247, %v2260
          %2264 = vmatprep.subr.mxu0 0.0
          %2265 = vmatpush1.msra.mxu0 %v426
          %2266 = vmatprep.subr.mxu0 0.0
          %2267 = vmatpush1.msra.mxu0 %v427
          %2268 = vmatprep.subr.mxu0 0.0
          %2269 = vmatpush1.msra.mxu0 %v428
          %2270 = vmatprep.subr.mxu0 0.0
          %2271 = vmatpush1.msra.mxu0 %v429
          %2272 = vmatprep.subr.mxu0 0.0
          %2273 = vmatpush1.msra.mxu0 %v430
          %2274 = vmatprep.subr.mxu0 0.0
          %2275 = vmatpush1.msra.mxu0 %v431
          %2276 = vmatprep.subr.mxu0 0.0
          %2277 = vmatpush1.msra.mxu0 %v432
          %2278 = vmatprep.subr.mxu0 0.0
          %2279 = vmatpush1.msra.mxu0 %v433
          %2280 = vmatprep.subr.mxu0 0.0
          %2281 = vmatpush1.msra.mxu0 %v434
          %2282 = vmatprep.subr.mxu0 0.0
          %2283 = vmatpush1.msra.mxu0 %v435
          %2284 = vmatprep.subr.mxu0 0.0
          %2285 = vmatpush1.msra.mxu0 %v436
          %2286 = vmatprep.subr.mxu0 0.0
          %2287 = vmatpush1.msra.mxu0 %v437
          %2288 = vmatprep.subr.mxu0 0.0
          %2289 = vmatpush1.msra.mxu0 %v438
          %2290 = vmatprep.subr.mxu0 0.0
          %2291 = vmatpush1.msra.mxu0 %v439
          %2292 = vmatprep.subr.mxu0 0.0
          %2293 = vmatpush1.msra.mxu0 %v440
          %2294 = vmatprep.subr.mxu0 0.0
          %2295 = vmatpush1.msra.mxu0 %v441
          %2296 = vmatprep.subr.mxu0 0.0
          %2297 = vmatpush1.msra.mxu0 0.0
          %2298 = vmatprep.subr.mxu0 0.0
          %2299 = vmatpush1.msra.mxu0 0.0
          %2300 = vmatprep.subr.mxu0 0.0
          %2301 = vmatpush1.msra.mxu0 0.0
          %2302 = vmatprep.subr.mxu0 0.0
          %2303 = vmatpush1.msra.mxu0 0.0
          %2304 = vmatprep.subr.mxu0 0.0
          %2305 = vmatpush1.msra.mxu0 0.0
          %2306 = vmatprep.subr.mxu0 0.0
          %2307 = vmatpush1.msra.mxu0 0.0
          %2308 = vmatprep.subr.mxu0 0.0
          %2309 = vmatpush1.msra.mxu0 0.0
          %2310 = vmatprep.subr.mxu0 0.0
          %2311 = vmatpush1.msra.mxu0 0.0
          %2312 = vmatprep.subr.mxu0 0.0
          %2313 = vmatpush1.msra.mxu0 0.0
          %2314 = vmatprep.subr.mxu0 0.0
          %2315 = vmatpush1.msra.mxu0 0.0
          %2316 = vmatprep.subr.mxu0 0.0
          %2317 = vmatpush1.msra.mxu0 0.0
          %2318 = vmatprep.subr.mxu0 0.0
          %2319 = vmatpush1.msra.mxu0 0.0
          %2320 = vmatprep.subr.mxu0 0.0
          %2321 = vmatpush1.msra.mxu0 0.0
          %2322 = vmatprep.subr.mxu0 0.0
          %2323 = vmatpush1.msra.mxu0 0.0
          %2324 = vmatprep.subr.mxu0 0.0
          %2325 = vmatpush1.msra.mxu0 0.0
          %2326 = vmatprep.subr.mxu0 0.0
          %2327 = vmatpush1.msra.mxu0 0.0
          %2328 = vmatprep.mubr.f32.mxu0 0.0
          %2329 = vmatmul.mubr.f32.gmra.mrb[0].mxu0 %v2254
          %v2330 = vpop.f32.mrb[0].mxu0
          %v2331 = vadd.f32 0.0, %v2330
          %v2332 = vpop.f32.mrb[0].mxu0
          %2333 = vdwg.mxu0
          %2334 = vmatprep.subr.mxu0 0.0
          %2335 = vmatpush1.msra.mxu0 %v442
          %2336 = vmatprep.subr.mxu0 0.0
          %2337 = vmatpush1.msra.mxu0 %v443
          %2338 = vmatprep.subr.mxu0 0.0
          %2339 = vmatpush1.msra.mxu0 %v444
          %2340 = vmatprep.subr.mxu0 0.0
          %2341 = vmatpush1.msra.mxu0 %v445
          %2342 = vmatprep.subr.mxu0 0.0
          %2343 = vmatpush1.msra.mxu0 %v446
          %2344 = vmatprep.subr.mxu0 0.0
          %2345 = vmatpush1.msra.mxu0 %v447
          %2346 = vmatprep.subr.mxu0 0.0
          %2347 = vmatpush1.msra.mxu0 %v448
          %2348 = vmatprep.subr.mxu0 0.0
          %2349 = vmatpush1.msra.mxu0 %v449
          %2350 = vmatprep.subr.mxu0 0.0
          %2351 = vmatpush1.msra.mxu0 %v450
          %2352 = vmatprep.subr.mxu0 0.0
          %2353 = vmatpush1.msra.mxu0 %v451
          %2354 = vmatprep.subr.mxu0 0.0
          %2355 = vmatpush1.msra.mxu0 %v452
          %2356 = vmatprep.subr.mxu0 0.0
          %2357 = vmatpush1.msra.mxu0 %v453
          %2358 = vmatprep.subr.mxu0 0.0
          %2359 = vmatpush1.msra.mxu0 %v454
          %2360 = vmatprep.subr.mxu0 0.0
          %2361 = vmatpush1.msra.mxu0 %v455
          %2362 = vmatprep.subr.mxu0 0.0
          %2363 = vmatpush1.msra.mxu0 %v456
          %2364 = vmatprep.subr.mxu0 0.0
          %2365 = vmatpush1.msra.mxu0 %v457
          %2366 = vmatprep.subr.mxu0 0.0
          %2367 = vmatpush1.msra.mxu0 0.0
          %2368 = vmatprep.subr.mxu0 0.0
          %2369 = vmatpush1.msra.mxu0 0.0
          %2370 = vmatprep.subr.mxu0 0.0
          %2371 = vmatpush1.msra.mxu0 0.0
          %2372 = vmatprep.subr.mxu0 0.0
          %2373 = vmatpush1.msra.mxu0 0.0
          %2374 = vmatprep.subr.mxu0 0.0
          %2375 = vmatpush1.msra.mxu0 0.0
          %2376 = vmatprep.subr.mxu0 0.0
          %2377 = vmatpush1.msra.mxu0 0.0
          %2378 = vmatprep.subr.mxu0 0.0
          %2379 = vmatpush1.msra.mxu0 0.0
          %2380 = vmatprep.subr.mxu0 0.0
          %2381 = vmatpush1.msra.mxu0 0.0
          %2382 = vmatprep.subr.mxu0 0.0
          %2383 = vmatpush1.msra.mxu0 0.0
          %2384 = vmatprep.subr.mxu0 0.0
          %2385 = vmatpush1.msra.mxu0 0.0
          %2386 = vmatprep.subr.mxu0 0.0
          %2387 = vmatpush1.msra.mxu0 0.0
          %2388 = vmatprep.subr.mxu0 0.0
          %2389 = vmatpush1.msra.mxu0 0.0
          %2390 = vmatprep.subr.mxu0 0.0
          %2391 = vmatpush1.msra.mxu0 0.0
          %2392 = vmatprep.subr.mxu0 0.0
          %2393 = vmatpush1.msra.mxu0 0.0
          %2394 = vmatprep.subr.mxu0 0.0
          %2395 = vmatpush1.msra.mxu0 0.0
          %2396 = vmatprep.subr.mxu0 0.0
          %2397 = vmatpush1.msra.mxu0 0.0
          %2398 = vmatprep.mubr.f32.mxu0 0.0
          %2399 = vmatmul.mubr.f32.gmra.mrb[0].mxu0 %v2261
          %v2400 = vpop.f32.mrb[0].mxu0
          %v2401 = vadd.f32 0.0, %v2400
          %v2402 = vpop.f32.mrb[0].mxu0
          %2403 = vdwg.mxu0
          %v2404 = vmax.f32 %v2331, 1e-30
          %v2405 = vmax.f32 %v2401, 1e-30
          %v2406 = vlog2.pop %v2404
          %v2407 = vmul.f32 %v2406, 0.6931472
          %v2408 = vlog2.pop %v2405
          %v2409 = vmul.f32 %v2408, 0.6931472
          %v2412 = vrot.slane %v2409, 7
          %v2413 = vsel %vm668, %v2412, %v2407
          %v2415 = vadd.f32 %v2235, %v2413
          %v2418 = vrot.slane %v2228, 6
          %v2419 = vrot.slane %v2229, 5
          %v2420 = vsel %vm668, %v2419, %v2418
          %v2422 = vadd.f32 %v2415, %v2420
          %v2423 = vsel %vm2231, 1, 0
          %2424 = vset.pattern.permute.xlu0 0
          %2425 = vperm.xlu0 %2424, %v2423
          %v2426 = vpop.permute.xlu0 %2425
          %vm2427 = vcmp.eq.s32.totalorder %v2426, 1
          %v2428 = vsel %vm2427, %v2422, %v2137
          %v2429 = vsel %vm486, %v2220, -inf
          %2430 = vmax.xlane.f32.xlu0 %v2429
          %v2431 = vpop.xlane.xlu0 %2430
          %v2432 = vmax.f32 %v2431, -1e+30
          %v2433 = vsub.f32 %v2220, %v2432
          %v2434 = vmul.f32 %v2433, 1.442695
          %v2435 = vpow.pop %v2434
          %2436 = vmatprep.subr.mxu0 0.0
          %2437 = vmatpush1.msra.mxu0 %v458
          %2438 = vmatprep.subr.mxu0 0.0
          %2439 = vmatpush1.msra.mxu0 %v459
          %2440 = vmatprep.subr.mxu0 0.0
          %2441 = vmatpush1.msra.mxu0 %v460
          %2442 = vmatprep.subr.mxu0 0.0
          %2443 = vmatpush1.msra.mxu0 %v461
          %2444 = vmatprep.subr.mxu0 0.0
          %2445 = vmatpush1.msra.mxu0 %v462
          %2446 = vmatprep.subr.mxu0 0.0
          %2447 = vmatpush1.msra.mxu0 %v463
          %2448 = vmatprep.subr.mxu0 0.0
          %2449 = vmatpush1.msra.mxu0 %v464
          %2450 = vmatprep.subr.mxu0 0.0
          %2451 = vmatpush1.msra.mxu0 %v465
          %2452 = vmatprep.subr.mxu0 0.0
          %2453 = vmatpush1.msra.mxu0 %v466
          %2454 = vmatprep.subr.mxu0 0.0
          %2455 = vmatpush1.msra.mxu0 %v467
          %2456 = vmatprep.subr.mxu0 0.0
          %2457 = vmatpush1.msra.mxu0 %v468
          %2458 = vmatprep.subr.mxu0 0.0
          %2459 = vmatpush1.msra.mxu0 %v469
          %2460 = vmatprep.subr.mxu0 0.0
          %2461 = vmatpush1.msra.mxu0 %v470
          %2462 = vmatprep.subr.mxu0 0.0
          %2463 = vmatpush1.msra.mxu0 %v471
          %2464 = vmatprep.subr.mxu0 0.0
          %2465 = vmatpush1.msra.mxu0 %v472
          %2466 = vmatprep.subr.mxu0 0.0
          %2467 = vmatpush1.msra.mxu0 %v473
          %2468 = vmatprep.subr.mxu0 0.0
          %2469 = vmatpush1.msra.mxu0 0.0
          %2470 = vmatprep.subr.mxu0 0.0
          %2471 = vmatpush1.msra.mxu0 0.0
          %2472 = vmatprep.subr.mxu0 0.0
          %2473 = vmatpush1.msra.mxu0 0.0
          %2474 = vmatprep.subr.mxu0 0.0
          %2475 = vmatpush1.msra.mxu0 0.0
          %2476 = vmatprep.subr.mxu0 0.0
          %2477 = vmatpush1.msra.mxu0 0.0
          %2478 = vmatprep.subr.mxu0 0.0
          %2479 = vmatpush1.msra.mxu0 0.0
          %2480 = vmatprep.subr.mxu0 0.0
          %2481 = vmatpush1.msra.mxu0 0.0
          %2482 = vmatprep.subr.mxu0 0.0
          %2483 = vmatpush1.msra.mxu0 0.0
          %2484 = vmatprep.subr.mxu0 0.0
          %2485 = vmatpush1.msra.mxu0 0.0
          %2486 = vmatprep.subr.mxu0 0.0
          %2487 = vmatpush1.msra.mxu0 0.0
          %2488 = vmatprep.subr.mxu0 0.0
          %2489 = vmatpush1.msra.mxu0 0.0
          %2490 = vmatprep.subr.mxu0 0.0
          %2491 = vmatpush1.msra.mxu0 0.0
          %2492 = vmatprep.subr.mxu0 0.0
          %2493 = vmatpush1.msra.mxu0 0.0
          %2494 = vmatprep.subr.mxu0 0.0
          %2495 = vmatpush1.msra.mxu0 0.0
          %2496 = vmatprep.subr.mxu0 0.0
          %2497 = vmatpush1.msra.mxu0 0.0
          %2498 = vmatprep.subr.mxu0 0.0
          %2499 = vmatpush1.msra.mxu0 0.0
          %2500 = vmatprep.mubr.f32.mxu0 0.0
          %2501 = vmatmul.mubr.f32.gmra.mrb[0].mxu0 %v2435
          %v2502 = vpop.f32.mrb[0].mxu0
          %v2503 = vadd.f32 0.0, %v2502
          %v2504 = vpop.f32.mrb[0].mxu0
          %2505 = vdwg.mxu0
          %v2506 = vmax.f32 %v2503, 1e-30
          %v2507 = vlog2.pop %v2506
          %v2508 = vmul.f32 %v2507, 0.6931472
          %v2509 = vadd.f32 %v2432, %v2508
          %v2510 = vadd.f32 %v2509, %v2420
          %v2511 = vsel %vm2427, %v2510, %v2220
          %s2512 = sadd.s32 %s405, 7
          %v2513 = vld [vmem:[%s349] sm:$0x8]
          %v2514 = vld [vmem:[%s349 + $0x4] sm:$0x8]
          %v2515 = vunpack.c.l.bf16 %v2513
          %v2516 = vunpack.c.l.bf16 %v2514
          %v2517 = vmax.f32 %v2515, -30.0
          %v2518 = vmax.f32 %v2516, -30.0
          %v2519 = vmin.f32 %v2517, 30.0
          %v2520 = vmin.f32 %v2518, 30.0
          %v2521 = vstv %s2512
          %vm2522 = vcmp.lt.s32.totalorder %v2521, %v425
          %v2523 = vsel %vm486, %v2428, -inf
          %2524 = vmax.xlane.f32.xlu0 %v2523
          %v2525 = vpop.xlane.xlu0 %2524
          %v2526 = vmax.f32 %v2525, -1e+30
          %v2527 = vsub.f32 %v2428, %v2526
          %v2528 = vmul.f32 %v2527, 1.442695
          %v2529 = vpow.pop %v2528
          %v2532 = vunpack.c.l.s4 1966171168
          %v2533 = vunpack.c.0.s8 %v2532
          %v2534 = vlaneseq
          %v2535 = vshrl.u32 %v2534, 7
          %v2536 = vsub.s32 %v2533, %v2535
          %v2537 = vrot.slane %v2529, %v2536
          %v2538 = vcombine.high %v2537, %v2537
          %v2540 = vunpack.c.l.s4 1966171168
          %v2541 = vunpack.c.0.s8 %v2540
          %v2542 = vlaneseq
          %v2543 = vshrl.u32 %v2542, 7
          %v2544 = vsub.s32 %v2541, %v2543
          %v2545 = vrot.slane %v2537, %v2544
          %v2547 = vunpack.c.l.s4 1966171168
          %v2548 = vunpack.c.0.s8 %v2547
          %v2549 = vlaneseq
          %v2550 = vshrl.u32 %v2549, 7
          %v2551 = vsub.s32 %v2548, %v2550
          %v2552 = vrot.slane %v2538, %v2551
          %2555 = vmatprep.subr.mxu0 0.0
          %2556 = vmatpush1.msra.mxu0 %v426
          %2557 = vmatprep.subr.mxu0 0.0
          %2558 = vmatpush1.msra.mxu0 %v427
          %2559 = vmatprep.subr.mxu0 0.0
          %2560 = vmatpush1.msra.mxu0 %v428
          %2561 = vmatprep.subr.mxu0 0.0
          %2562 = vmatpush1.msra.mxu0 %v429
          %2563 = vmatprep.subr.mxu0 0.0
          %2564 = vmatpush1.msra.mxu0 %v430
          %2565 = vmatprep.subr.mxu0 0.0
          %2566 = vmatpush1.msra.mxu0 %v431
          %2567 = vmatprep.subr.mxu0 0.0
          %2568 = vmatpush1.msra.mxu0 %v432
          %2569 = vmatprep.subr.mxu0 0.0
          %2570 = vmatpush1.msra.mxu0 %v433
          %2571 = vmatprep.subr.mxu0 0.0
          %2572 = vmatpush1.msra.mxu0 %v434
          %2573 = vmatprep.subr.mxu0 0.0
          %2574 = vmatpush1.msra.mxu0 %v435
          %2575 = vmatprep.subr.mxu0 0.0
          %2576 = vmatpush1.msra.mxu0 %v436
          %2577 = vmatprep.subr.mxu0 0.0
          %2578 = vmatpush1.msra.mxu0 %v437
          %2579 = vmatprep.subr.mxu0 0.0
          %2580 = vmatpush1.msra.mxu0 %v438
          %2581 = vmatprep.subr.mxu0 0.0
          %2582 = vmatpush1.msra.mxu0 %v439
          %2583 = vmatprep.subr.mxu0 0.0
          %2584 = vmatpush1.msra.mxu0 %v440
          %2585 = vmatprep.subr.mxu0 0.0
          %2586 = vmatpush1.msra.mxu0 %v441
          %2587 = vmatprep.subr.mxu0 0.0
          %2588 = vmatpush1.msra.mxu0 0.0
          %2589 = vmatprep.subr.mxu0 0.0
          %2590 = vmatpush1.msra.mxu0 0.0
          %2591 = vmatprep.subr.mxu0 0.0
          %2592 = vmatpush1.msra.mxu0 0.0
          %2593 = vmatprep.subr.mxu0 0.0
          %2594 = vmatpush1.msra.mxu0 0.0
          %2595 = vmatprep.subr.mxu0 0.0
          %2596 = vmatpush1.msra.mxu0 0.0
          %2597 = vmatprep.subr.mxu0 0.0
          %2598 = vmatpush1.msra.mxu0 0.0
          %2599 = vmatprep.subr.mxu0 0.0
          %2600 = vmatpush1.msra.mxu0 0.0
          %2601 = vmatprep.subr.mxu0 0.0
          %2602 = vmatpush1.msra.mxu0 0.0
          %2603 = vmatprep.subr.mxu0 0.0
          %2604 = vmatpush1.msra.mxu0 0.0
          %2605 = vmatprep.subr.mxu0 0.0
          %2606 = vmatpush1.msra.mxu0 0.0
          %2607 = vmatprep.subr.mxu0 0.0
          %2608 = vmatpush1.msra.mxu0 0.0
          %2609 = vmatprep.subr.mxu0 0.0
          %2610 = vmatpush1.msra.mxu0 0.0
          %2611 = vmatprep.subr.mxu0 0.0
          %2612 = vmatpush1.msra.mxu0 0.0
          %2613 = vmatprep.subr.mxu0 0.0
          %2614 = vmatpush1.msra.mxu0 0.0
          %2615 = vmatprep.subr.mxu0 0.0
          %2616 = vmatpush1.msra.mxu0 0.0
          %2617 = vmatprep.subr.mxu0 0.0
          %2618 = vmatpush1.msra.mxu0 0.0
          %2619 = vmatprep.mubr.f32.mxu0 0.0
          %2620 = vmatmul.mubr.f32.gmra.mrb[0].mxu0 %v2545
          %v2621 = vpop.f32.mrb[0].mxu0
          %v2622 = vadd.f32 0.0, %v2621
          %v2623 = vpop.f32.mrb[0].mxu0
          %2624 = vdwg.mxu0
          %2625 = vmatprep.subr.mxu0 0.0
          %2626 = vmatpush1.msra.mxu0 %v442
          %2627 = vmatprep.subr.mxu0 0.0
          %2628 = vmatpush1.msra.mxu0 %v443
          %2629 = vmatprep.subr.mxu0 0.0
          %2630 = vmatpush1.msra.mxu0 %v444
          %2631 = vmatprep.subr.mxu0 0.0
          %2632 = vmatpush1.msra.mxu0 %v445
          %2633 = vmatprep.subr.mxu0 0.0
          %2634 = vmatpush1.msra.mxu0 %v446
          %2635 = vmatprep.subr.mxu0 0.0
          %2636 = vmatpush1.msra.mxu0 %v447
          %2637 = vmatprep.subr.mxu0 0.0
          %2638 = vmatpush1.msra.mxu0 %v448
          %2639 = vmatprep.subr.mxu0 0.0
          %2640 = vmatpush1.msra.mxu0 %v449
          %2641 = vmatprep.subr.mxu0 0.0
          %2642 = vmatpush1.msra.mxu0 %v450
          %2643 = vmatprep.subr.mxu0 0.0
          %2644 = vmatpush1.msra.mxu0 %v451
          %2645 = vmatprep.subr.mxu0 0.0
          %2646 = vmatpush1.msra.mxu0 %v452
          %2647 = vmatprep.subr.mxu0 0.0
          %2648 = vmatpush1.msra.mxu0 %v453
          %2649 = vmatprep.subr.mxu0 0.0
          %2650 = vmatpush1.msra.mxu0 %v454
          %2651 = vmatprep.subr.mxu0 0.0
          %2652 = vmatpush1.msra.mxu0 %v455
          %2653 = vmatprep.subr.mxu0 0.0
          %2654 = vmatpush1.msra.mxu0 %v456
          %2655 = vmatprep.subr.mxu0 0.0
          %2656 = vmatpush1.msra.mxu0 %v457
          %2657 = vmatprep.subr.mxu0 0.0
          %2658 = vmatpush1.msra.mxu0 0.0
          %2659 = vmatprep.subr.mxu0 0.0
          %2660 = vmatpush1.msra.mxu0 0.0
          %2661 = vmatprep.subr.mxu0 0.0
          %2662 = vmatpush1.msra.mxu0 0.0
          %2663 = vmatprep.subr.mxu0 0.0
          %2664 = vmatpush1.msra.mxu0 0.0
          %2665 = vmatprep.subr.mxu0 0.0
          %2666 = vmatpush1.msra.mxu0 0.0
          %2667 = vmatprep.subr.mxu0 0.0
          %2668 = vmatpush1.msra.mxu0 0.0
          %2669 = vmatprep.subr.mxu0 0.0
          %2670 = vmatpush1.msra.mxu0 0.0
          %2671 = vmatprep.subr.mxu0 0.0
          %2672 = vmatpush1.msra.mxu0 0.0
          %2673 = vmatprep.subr.mxu0 0.0
          %2674 = vmatpush1.msra.mxu0 0.0
          %2675 = vmatprep.subr.mxu0 0.0
          %2676 = vmatpush1.msra.mxu0 0.0
          %2677 = vmatprep.subr.mxu0 0.0
          %2678 = vmatpush1.msra.mxu0 0.0
          %2679 = vmatprep.subr.mxu0 0.0
          %2680 = vmatpush1.msra.mxu0 0.0
          %2681 = vmatprep.subr.mxu0 0.0
          %2682 = vmatpush1.msra.mxu0 0.0
          %2683 = vmatprep.subr.mxu0 0.0
          %2684 = vmatpush1.msra.mxu0 0.0
          %2685 = vmatprep.subr.mxu0 0.0
          %2686 = vmatpush1.msra.mxu0 0.0
          %2687 = vmatprep.subr.mxu0 0.0
          %2688 = vmatpush1.msra.mxu0 0.0
          %2689 = vmatprep.mubr.f32.mxu0 0.0
          %2690 = vmatmul.mubr.f32.gmra.mrb[0].mxu0 %v2552
          %v2691 = vpop.f32.mrb[0].mxu0
          %v2692 = vadd.f32 0.0, %v2691
          %v2693 = vpop.f32.mrb[0].mxu0
          %2694 = vdwg.mxu0
          %v2695 = vmax.f32 %v2622, 1e-30
          %v2696 = vmax.f32 %v2692, 1e-30
          %v2697 = vlog2.pop %v2695
          %v2698 = vmul.f32 %v2697, 0.6931472
          %v2699 = vlog2.pop %v2696
          %v2700 = vmul.f32 %v2699, 0.6931472
          %v2703 = vrot.slane %v2700, 7
          %v2704 = vsel %vm668, %v2703, %v2698
          %v2706 = vadd.f32 %v2526, %v2704
          %v2709 = vrot.slane %v2519, 7
          %v2710 = vrot.slane %v2520, 6
          %v2711 = vsel %vm668, %v2710, %v2709
          %v2713 = vadd.f32 %v2706, %v2711
          %v2714 = vsel %vm2522, 1, 0
          %2715 = vset.pattern.permute.xlu0 0
          %2716 = vperm.xlu0 %2715, %v2714
          %v2717 = vpop.permute.xlu0 %2716
          %vm2718 = vcmp.eq.s32.totalorder %v2717, 1
          %v2719 = vsel %vm2718, %v2713, %v2428
          %v2720 = vsel %vm486, %v2511, -inf
          %2721 = vmax.xlane.f32.xlu0 %v2720
          %v2722 = vpop.xlane.xlu0 %2721
          %v2723 = vmax.f32 %v2722, -1e+30
          %v2724 = vsub.f32 %v2511, %v2723
          %v2725 = vmul.f32 %v2724, 1.442695
          %v2726 = vpow.pop %v2725
          %2727 = vmatprep.subr.mxu0 0.0
          %2728 = vmatpush1.msra.mxu0 %v458
          %2729 = vmatprep.subr.mxu0 0.0
          %2730 = vmatpush1.msra.mxu0 %v459
          %2731 = vmatprep.subr.mxu0 0.0
          %2732 = vmatpush1.msra.mxu0 %v460
          %2733 = vmatprep.subr.mxu0 0.0
          %2734 = vmatpush1.msra.mxu0 %v461
          %2735 = vmatprep.subr.mxu0 0.0
          %2736 = vmatpush1.msra.mxu0 %v462
          %2737 = vmatprep.subr.mxu0 0.0
          %2738 = vmatpush1.msra.mxu0 %v463
          %2739 = vmatprep.subr.mxu0 0.0
          %2740 = vmatpush1.msra.mxu0 %v464
          %2741 = vmatprep.subr.mxu0 0.0
          %2742 = vmatpush1.msra.mxu0 %v465
          %2743 = vmatprep.subr.mxu0 0.0
          %2744 = vmatpush1.msra.mxu0 %v466
          %2745 = vmatprep.subr.mxu0 0.0
          %2746 = vmatpush1.msra.mxu0 %v467
          %2747 = vmatprep.subr.mxu0 0.0
          %2748 = vmatpush1.msra.mxu0 %v468
          %2749 = vmatprep.subr.mxu0 0.0
          %2750 = vmatpush1.msra.mxu0 %v469
          %2751 = vmatprep.subr.mxu0 0.0
          %2752 = vmatpush1.msra.mxu0 %v470
          %2753 = vmatprep.subr.mxu0 0.0
          %2754 = vmatpush1.msra.mxu0 %v471
          %2755 = vmatprep.subr.mxu0 0.0
          %2756 = vmatpush1.msra.mxu0 %v472
          %2757 = vmatprep.subr.mxu0 0.0
          %2758 = vmatpush1.msra.mxu0 %v473
          %2759 = vmatprep.subr.mxu0 0.0
          %2760 = vmatpush1.msra.mxu0 0.0
          %2761 = vmatprep.subr.mxu0 0.0
          %2762 = vmatpush1.msra.mxu0 0.0
          %2763 = vmatprep.subr.mxu0 0.0
          %2764 = vmatpush1.msra.mxu0 0.0
          %2765 = vmatprep.subr.mxu0 0.0
          %2766 = vmatpush1.msra.mxu0 0.0
          %2767 = vmatprep.subr.mxu0 0.0
          %2768 = vmatpush1.msra.mxu0 0.0
          %2769 = vmatprep.subr.mxu0 0.0
          %2770 = vmatpush1.msra.mxu0 0.0
          %2771 = vmatprep.subr.mxu0 0.0
          %2772 = vmatpush1.msra.mxu0 0.0
          %2773 = vmatprep.subr.mxu0 0.0
          %2774 = vmatpush1.msra.mxu0 0.0
          %2775 = vmatprep.subr.mxu0 0.0
          %2776 = vmatpush1.msra.mxu0 0.0
          %2777 = vmatprep.subr.mxu0 0.0
          %2778 = vmatpush1.msra.mxu0 0.0
          %2779 = vmatprep.subr.mxu0 0.0
          %2780 = vmatpush1.msra.mxu0 0.0
          %2781 = vmatprep.subr.mxu0 0.0
          %2782 = vmatpush1.msra.mxu0 0.0
          %2783 = vmatprep.subr.mxu0 0.0
          %2784 = vmatpush1.msra.mxu0 0.0
          %2785 = vmatprep.subr.mxu0 0.0
          %2786 = vmatpush1.msra.mxu0 0.0
          %2787 = vmatprep.subr.mxu0 0.0
          %2788 = vmatpush1.msra.mxu0 0.0
          %2789 = vmatprep.subr.mxu0 0.0
          %2790 = vmatpush1.msra.mxu0 0.0
          %2791 = vmatprep.mubr.f32.mxu0 0.0
          %2792 = vmatmul.mubr.f32.gmra.mrb[0].mxu0 %v2726
          %v2793 = vpop.f32.mrb[0].mxu0
          %v2794 = vadd.f32 0.0, %v2793
          %v2795 = vpop.f32.mrb[0].mxu0
          %2796 = vdwg.mxu0
          %v2797 = vmax.f32 %v2794, 1e-30
          %v2798 = vlog2.pop %v2797
          %v2799 = vmul.f32 %v2798, 0.6931472
          %v2800 = vadd.f32 %v2723, %v2799
          %v2801 = vadd.f32 %v2800, %v2711
          %v2802 = vsel %vm2718, %v2801, %v2511
          %2803 = vst [vmem:[#allocation2] sm:$0x3] %v2719
          %2804 = vst [vmem:[#allocation3] sm:$0x3] %v2802
        $region92: #{chain_loss.1} parent=51 // pred_fallthru
          _
        %p2805 = scmp.eq.s32.totalorder %s29, 1
        // Predicated region
        $region93: #{chain_loss.1} parent=51 // pred_check
          %p2806 = pneg %p2805
        $region94: #{chain_loss.1} parent=51 // pred_check_branch
          %2808 = sbr.rel (%p2806) target = $region96
        $region95: #{chain_loss.1} parent=51 // pred_region
          %v2809 = vld [vmem:[#allocation2] sm:$0x3]
          %v2810 = vld [vmem:[#allocation14] sm:$0x3]
          %v2811 = vadd.f32 %v2809, %v2810
          %vm2812 = vcmask 1041408
          %v2813 = vsel %vm2812, %v2811, -inf
          %2814 = vmax.xlane.f32.xlu0 %v2813
          %v2815 = vpop.xlane.xlu0 %2814
          %v2816 = vmax.f32 %v2815, -1e+30
          %v2817 = vsub.f32 %v2811, %v2816
          %v2818 = vmul.f32 %v2817, 1.442695
          %v2819 = vpow.pop %v2818
          %v2820 = vsel %vm2812, %v2819, 0.0
          %2821 = vadd.xlane.f32.xlu0 %v2820
          %v2822 = vpop.xlane.xlu0 %2821
          %v2823 = vmax.f32 %v2822, 1e-30
          %v2824 = vlog2.pop %v2823
          %v2825 = vmul.f32 %v2824, 0.6931472
          %v2826 = vadd.f32 %v2816, %v2825
          %v2827 = vld [vmem:[#allocation3] sm:$0x3]
          %v2828 = vld [vmem:[#allocation18] sm:$0x1]
          %v2830 = vlaneseq
          %v2831 = vshrl.u32 %v2830, 7
          %v2832 = vsub.s32 0, %v2831
          %v2833 = vrot.slane %v2828, %v2832
          %v2835 = vadd.f32 %v2827, %v2833
          %v2836 = vsel %vm2812, %v2835, -inf
          %2837 = vmax.xlane.f32.xlu0 %v2836
          %v2838 = vpop.xlane.xlu0 %2837
          %v2839 = vmax.f32 %v2838, -1e+30
          %v2840 = vsub.f32 %v2835, %v2839
          %v2841 = vmul.f32 %v2840, 1.442695
          %v2842 = vpow.pop %v2841
          %v2843 = vsel %vm2812, %v2842, 0.0
          %2844 = vadd.xlane.f32.xlu0 %v2843
          %v2845 = vpop.xlane.xlu0 %2844
          %v2846 = vmax.f32 %v2845, 1e-30
          %v2847 = vlog2.pop %v2846
          %v2848 = vmul.f32 %v2847, 0.6931472
          %v2849 = vadd.f32 %v2839, %v2848
          %vm2850 = vcmask 7168
          %v2851 = vsel %vm2850, %v2826, %v2849
          %vm2852 = vcmask 9216
          %2853 = vst.msk [vmem:[#allocation20] sm:$0x3] %vm2852, %v2851
        $region96: #{chain_loss.1} parent=51 // pred_fallthru
          _
        // Predicated region
        $region97: #{chain_loss.1} parent=51 // pred_check
          %p2854 = pneg %p215
        $region98: #{chain_loss.1} parent=51 // pred_check_branch
          %2856 = sbr.rel (%p2854) target = $region100
        $region99: #{chain_loss.1} parent=51 // pred_region
          %s2858 = ssub.s32 32, 32
          %2859 = vsyncadd [#allocation8], %s2858
          %s2861 = sshll.u32 [#allocation20], 4
          %s2862 = int_to_ptr.vmem [resolvable:$true] %s2861
          %2864 = dma.vmem_to_hbm [thread:$0]  %s2862, 32, %s9, [#allocation8]
        $region100: #{chain_loss.1} parent=51 // pred_fallthru
          _
        // Predicated region
        $region101: #{chain_loss.1} parent=51 // pred_check
          %p2865 = pneg %p215
        $region102: #{chain_loss.1} parent=51 // pred_check_branch
          %2867 = sbr.rel (%p2865) target = $region104
        $region103: #{chain_loss.1} parent=51 // pred_region
          %2868 = dma.done [#allocation8], 32
        $region104: #{chain_loss.1} parent=51 // pred_fallthru
          _
      $region52: #{chain_loss.1} parent=5 // pred_fallthru
        _
      %p2869 = scmp.le.s32.totalorder 2, %s24
      // Predicated region
      $region105: #{chain_loss.1} parent=5 // pred_check
        %p2870 = pneg %p2869
      $region106: #{chain_loss.1} parent=5 // pred_check_branch
        %2872 = sbr.rel (%p2870) target = $region108
      $region107: #{chain_loss.1} parent=5 // pred_region
        %s2873 = ssub.s32 %s24, 2
      $region108: #{chain_loss.1} parent=5 // pred_fallthru
        _
    $region6: #{chain_loss.1} parent=1 // loop_footer
      %s28 = sadd.s32 1, %s24
    $region7: #{chain_loss.1} parent=1 // loop_footer_branch
      %23 = sbr.rel target = $region3
    $region8: #{chain_loss.1} parent=1 // loop_exit
      _
    %2874 = vsyncpa [#allocation7], 1
    %s2875 = scalar_lea.sflag [#allocation7], 1
    %2876 = vsyncpa %s2875, 1
    %2877 = vsyncpa [#allocation10], 1
    %2878 = vsyncpa [#allocation13], 1
    %2879 = vsyncpa [#allocation16], 1
    %2880 = vsyncpa [#allocation19], 1
    %2881 = vsyncpa [#allocation8], 1
    %s2882 = scalar_lea.sflag [#allocation8], 1
    %2883 = vsyncpa %s2882, 1

</llo_original>
